<compile_context>
chip_gen: v6e
topology: v6e:2x2x1
jax: 0.10.0
libtpu: 0.0.40
codegen_flags: <defaults>
</compile_context>

<pallas_src>
import functools

import jax
import jax.numpy as jnp
from jax import lax
from jax.experimental import pallas as pl
from jax.experimental.pallas import tpu as pltpu

# ----------------------------- model config ---------------------------------
PATCH = 16        # patch_size (module-level constant in the PyTorch spec)
B = 8             # batch            -> M = B * N = 512 patch rows (fills MXU rows)
C = 3             # in_channels
IMG = 128         # image height / width (must be divisible by PATCH)
E = 128           # embedding_dim; kept a multiple of 128 for lane-dense stores
                  # (spec default 768 also works — any multiple of 128 does)


def patch_embed_kernel(p_ref, wh_ref, wl_ref, b_ref, o_ref):
    """(TM, K) @ (K, E) + (1, E) -> (TM, E), 3-pass bf16 split precision."""
    p = p_ref[...]                                             # f32 (TM, K)
    p_hi = p.astype(jnp.bfloat16)
    p_lo = (p - p_hi.astype(jnp.float32)).astype(jnp.bfloat16)  # exact residual
    acc = jnp.dot(p_hi, wh_ref[...], preferred_element_type=jnp.float32)
    acc = acc + jnp.dot(p_lo, wh_ref[...], preferred_element_type=jnp.float32)
    acc = acc + jnp.dot(p_hi, wl_ref[...], preferred_element_type=jnp.float32)
    o_ref[...] = acc + b_ref[...]


def prepare_params(weight, bias):
    """One-time parameter prep (hoisted out of the per-call forward path).

    weight: (E, C, P, P) Conv2d weight -> bf16 hi/lo halves of W^T, shape (K, E)
    bias:   (E,)                       -> (1, E) f32
    """
    e = weight.shape[0]
    k = weight.shape[1] * weight.shape[2] * weight.shape[3]
    w_t = weight.reshape(e, k).T.astype(jnp.float32)           # (K, E)
    w_hi = w_t.astype(jnp.bfloat16)
    w_lo = (w_t - w_hi.astype(jnp.float32)).astype(jnp.bfloat16)
    return w_hi, w_lo, bias.reshape(1, e).astype(jnp.float32)


def _pick_tm(m: int) -> int:
    """Largest row tile <= 512 that divides M (512 already ~85%+ pipeline eff.)."""
    for tm in (512, 256, 128, 64, 32, 16, 8):
        if m % tm == 0:
            return tm
    return m


@functools.partial(jax.jit, static_argnames=("tm",))
def patch_embedding(x, w_hi, w_lo, bias2, *, tm=None):
    """x: (B, C, H, W); w_hi/w_lo: (K, E) bf16; bias2: (1, E) f32. Returns (B, N, E)."""
    b, c, h, w = x.shape
    assert h % PATCH == 0 and w % PATCH == 0, (
        f"Input image size must be divisible by patch size, got {h}x{w}, patch {PATCH}")
    hp, wp = h // PATCH, w // PATCH
    n = hp * wp
    k = c * PATCH * PATCH
    e = w_hi.shape[1]
    m = b * n
    assert e % 128 == 0, f"embedding_dim must be a multiple of 128, got {e}"

    if tm is None:
        tm = _pick_tm(m)
    assert m % tm == 0 and tm % 8 == 0, (m, tm)

    # im2col (pure layout, wrapper-side): (B, C, H, W) -> (B*N, C*P*P)
    # TODO(synk): at real ViT sizes (224x224, large B) replace this XLA transpose
    # with in-kernel DMA of contiguous (C, P, W) row slabs + repack, to avoid the
    # extra strided HBM pass; it is negligible at this toy size.
    patches = (
        x.reshape(b, c, hp, PATCH, wp, PATCH)
         .transpose(0, 2, 4, 1, 3, 5)                 # (B, hp, wp, C, P, P)
         .reshape(m, k)
    )

    out_flat = pl.pallas_call(
        patch_embed_kernel,
        out_shape=jax.ShapeDtypeStruct((m, e), jnp.float32),
        grid=(m // tm,),
        in_specs=[
            pl.BlockSpec((tm, k), lambda i: (i, 0)),   # patch rows (TM, K) f32
            pl.BlockSpec((k, e), lambda i: (0, 0)),    # W^T hi     (K, E)  bf16
            pl.BlockSpec((k, e), lambda i: (0, 0)),    # W^T lo     (K, E)  bf16
            pl.BlockSpec((1, e), lambda i: (0, 0)),    # bias       (1, E)  f32
        ],
        out_specs=pl.BlockSpec((tm, e), lambda i: (i, 0)),  # lane-dense output
        compiler_params=pltpu.CompilerParams(
            dimension_semantics=("parallel",),   # rows shard across TCs on v7x
        ),
    )(patches, w_hi, w_lo, bias2)

    return out_flat.reshape(b, n, e)                  # (B, num_patches, embedding_dim)


def reference(x, weight, bias):
    """Pure-JAX reference reproducing the PyTorch forward (Conv2d -> flatten -> permute)."""
    y = lax.conv_general_dilated(
        x, weight, window_strides=(PATCH, PATCH), padding="VALID",
        dimension_numbers=("NCHW", "OIHW", "NCHW"),
        precision=lax.Precision.HIGHEST)
    y = y + bias.reshape(1, -1, 1, 1)                 # (B, E, HP, WP)
    bb, ee, hp, wp = y.shape
    y = y.reshape(bb, ee, hp * wp)                    # flatten(start_dim=2, end_dim=3)
    return jnp.transpose(y, (0, 2, 1))                # permute(0, 2, 1) -> (B, N, E)


if __name__ == "__main__":
    key = jax.random.PRNGKey(0)
    kx, kw, kb = jax.random.split(key, 3)
    x = jax.random.normal(kx, (B, C, IMG, IMG), dtype=jnp.float32)
    weight = (0.02 * jax.random.normal(kw, (E, C, PATCH, PATCH))).astype(jnp.float32)
    bias = (0.02 * jax.random.normal(kb, (E,))).astype(jnp.float32)

    # One-time hoisted parameter prep (transpose + bf16 split + bias reshape).
    w_hi, w_lo, b2 = prepare_params(weight, bias)

    # M = B * N = 512 rows; TM = 256 -> grid=(2,) parallel over patch rows.
    out = patch_embedding(x, w_hi, w_lo, b2, tm=256)
    out = jax.block_until_ready(out)

    n = (IMG // PATCH) * (IMG // PATCH)
    ref = reference(x, weight, bias)
    assert out.shape == (B, n, E), out.shape
    err = float(jnp.max(jnp.abs(out - ref)))
    assert jnp.allclose(out, ref, atol=1e-3, rtol=1e-3), err
    print("KERNEL_OK")
</pallas_src>

<mosaic_0001>
module attributes {stable_mosaic.version = 11 : i64} {
  func.func @patch_embed_kernel(%arg0: i32, %arg1: memref<256x768xf32, #tpu.memory_space<vmem>>, %arg2: memref<768x128xbf16, #tpu.memory_space<vmem>>, %arg3: memref<768x128xbf16, #tpu.memory_space<vmem>>, %arg4: memref<1x128xf32, #tpu.memory_space<vmem>>, %arg5: memref<256x128xf32, #tpu.memory_space<vmem>>) attributes {dimension_semantics = [#tpu.dimension_semantics<parallel>], iteration_bounds = array<i64: 2>, scalar_prefetch = 0 : i64, scratch_operands = 0 : i64, tpu.core_type = #tpu.core_type<tc>, window_params = [{transform_indices = @transform_0, window_bounds = array<i64: 256, 768>}, {pipeline_mode = #tpu.pipeline_mode<synchronous>, transform_indices = @transform_1, window_bounds = array<i64: 768, 128>}, {pipeline_mode = #tpu.pipeline_mode<synchronous>, transform_indices = @transform_2, window_bounds = array<i64: 768, 128>}, {pipeline_mode = #tpu.pipeline_mode<synchronous>, transform_indices = @transform_3, window_bounds = array<i64: 1, 128>}, {transform_indices = @transform_4, window_bounds = array<i64: 256, 128>}]} {
    %c0 = arith.constant 0 : index
    %c0_0 = arith.constant 0 : index
    %0 = vector.load %arg1[%c0, %c0_0] : memref<256x768xf32, #tpu.memory_space<vmem>>, vector<256x768xf32>
    %1 = arith.truncf %0 : vector<256x768xf32> to vector<256x768xbf16>
    %2 = arith.extf %1 : vector<256x768xbf16> to vector<256x768xf32>
    %3 = arith.subf %0, %2 : vector<256x768xf32>
    %4 = arith.truncf %3 : vector<256x768xf32> to vector<256x768xbf16>
    %c0_1 = arith.constant 0 : index
    %c0_2 = arith.constant 0 : index
    %5 = vector.load %arg2[%c0_1, %c0_2] : memref<768x128xbf16, #tpu.memory_space<vmem>>, vector<768x128xbf16>
    %cst = arith.constant dense<0.000000e+00> : vector<256x128xf32>
    %6 = tpu.matmul %1, %5, %cst {dimension_numbers = #tpu.dot_dimension_numbers<[1], [0], [0], [1], [0, 0, 1, 1], [], []>} : vector<256x768xbf16>, vector<768x128xbf16>, vector<256x128xf32> -> vector<256x128xf32>
    %c0_3 = arith.constant 0 : index
    %c0_4 = arith.constant 0 : index
    %7 = vector.load %arg2[%c0_3, %c0_4] : memref<768x128xbf16, #tpu.memory_space<vmem>>, vector<768x128xbf16>
    %cst_5 = arith.constant dense<0.000000e+00> : vector<256x128xf32>
    %8 = tpu.matmul %4, %7, %cst_5 {dimension_numbers = #tpu.dot_dimension_numbers<[1], [0], [0], [1], [0, 0, 1, 1], [], []>} : vector<256x768xbf16>, vector<768x128xbf16>, vector<256x128xf32> -> vector<256x128xf32>
    %9 = arith.addf %6, %8 : vector<256x128xf32>
    %c0_6 = arith.constant 0 : index
    %c0_7 = arith.constant 0 : index
    %10 = vector.load %arg3[%c0_6, %c0_7] : memref<768x128xbf16, #tpu.memory_space<vmem>>, vector<768x128xbf16>
    %cst_8 = arith.constant dense<0.000000e+00> : vector<256x128xf32>
    %11 = tpu.matmul %1, %10, %cst_8 {dimension_numbers = #tpu.dot_dimension_numbers<[1], [0], [0], [1], [0, 0, 1, 1], [], []>} : vector<256x768xbf16>, vector<768x128xbf16>, vector<256x128xf32> -> vector<256x128xf32>
    %12 = arith.addf %9, %11 : vector<256x128xf32>
    %c0_9 = arith.constant 0 : index
    %c0_10 = arith.constant 0 : index
    %13 = vector.load %arg4[%c0_9, %c0_10] : memref<1x128xf32, #tpu.memory_space<vmem>>, vector<1x128xf32>
    %14 = vector.broadcast %13 : vector<1x128xf32> to vector<256x128xf32>
    %15 = arith.addf %12, %14 : vector<256x128xf32>
    %c0_11 = arith.constant 0 : index
    %c0_12 = arith.constant 0 : index
    %16 = vector.load %arg5[%c0_11, %c0_12] : memref<256x128xf32, #tpu.memory_space<vmem>>, vector<256x128xf32>
    tpu.vector_store %arg5[%c0_11, %c0_12], %15 {strides = array<i32>} : memref<256x128xf32, #tpu.memory_space<vmem>>, vector<256x128xf32>,
    return
  }
  func.func @transform_0(%arg0: i32) -> (i32, i32) {
    %c0_i32 = arith.constant 0 : i32
    %c0_i32_0 = arith.constant 0 : i32
    return %arg0, %c0_i32 : i32, i32
  }
  func.func @transform_1(%arg0: i32) -> (i32, i32) {
    %c0_i32 = arith.constant 0 : i32
    %c0_i32_0 = arith.constant 0 : i32
    %c0_i32_1 = arith.constant 0 : i32
    return %c0_i32, %c0_i32_0 : i32, i32
  }
  func.func @transform_2(%arg0: i32) -> (i32, i32) {
    %c0_i32 = arith.constant 0 : i32
    %c0_i32_0 = arith.constant 0 : i32
    %c0_i32_1 = arith.constant 0 : i32
    return %c0_i32, %c0_i32_0 : i32, i32
  }
  func.func @transform_3(%arg0: i32) -> (i32, i32) {
    %c0_i32 = arith.constant 0 : i32
    %c0_i32_0 = arith.constant 0 : i32
    %c0_i32_1 = arith.constant 0 : i32
    return %c0_i32, %c0_i32_0 : i32, i32
  }
  func.func @transform_4(%arg0: i32) -> (i32, i32) {
    %c0_i32 = arith.constant 0 : i32
    %c0_i32_0 = arith.constant 0 : i32
    return %arg0, %c0_i32 : i32, i32
  }
}

</mosaic_0001>

<llo_original>
// kernel: patch_embedding.1
$region0: #{patch_embedding.1}
  #allocation0 [shape = 'u32[]', space=smem, size = 0x4, offset = 0x4, fixed_abs, tag = 'smem constant byte address 0x4 - core index']
  #allocation1 [shape = 'u32[144,128]{1,0:T(1,128)}', space=vmem, size = 0x12000, scoped, tag = 'internal scratch']
  %s0 = inlined_call_operand.vmem [shape: f32[512,768], index: 0, kind: input, shape index: {}]
  %s1 = inlined_call_operand.vmem [shape: bf16[768,128], index: 1, kind: input, shape index: {}]
  %s2 = inlined_call_operand.vmem [shape: bf16[768,128], index: 2, kind: input, shape index: {}]
  %s3 = inlined_call_operand.vmem [shape: f32[1,128], index: 3, kind: input, shape index: {}]
  %s4 = inlined_call_operand.hbm [shape: f32[512,128], index: 4, kind: output, shape index: {}]
  %s5 = sld [smem:[#allocation0]]
  $region49: #{patch_embedding.1} parent=0
    _
  %s7 = ssub.s32 1, %s5
  %s8 = scalar_select 0, %s7, %s5
  $region1: #{patch_embedding.1} parent=0
    #allocation2 [shape = 'u8[262144]{0}', space=vmem, size = 0x40000, scoped, tag = 'output window, operand 0']
    #allocation3 [shape = 's32[2]{0}', space=sflag, size = 0x8, scoped, tag = 'scoped memory for patch_embedding.1']
    %9 = vsyncpa [#allocation3], 0
    %s10 = scalar_lea.sflag [#allocation3], 1
    %11 = vsyncpa %s10, 0
    loop: start=0, step=1, limit=4
    $region2: #{patch_embedding.1} parent=1 // loop_pre_header
      _
    $region3: #{patch_embedding.1} parent=1 // loop_header
      %s13 = sphi 0, %s17
      %p14 = scmp.ge.s32.totalorder %s13, 4
      %s23 = sphi 0, %s25
      %s26 = sphi 0, %s23
      %s27 = sphi 0, %s26
      %s43 = sphi 0, %s27
      %s47 = sphi 0, %s47
      %s49 = sphi 0, %s47
      %s50 = sphi 0, %s49
      %s64 = sphi 0, %s50
      %s68 = sphi 0, %s68
      %s70 = sphi 0, %s68
      %s71 = sphi 0, %s70
      %s85 = sphi 0, %s71
      %s89 = sphi 0, %s89
      %s91 = sphi 0, %s89
      %s92 = sphi 0, %s91
      %s106 = sphi 0, %s92
      %s112 = sphi 0, %s114
      %s115 = sphi 0, %s112
      %s116 = sphi 0, %s115
      %s132 = sphi 0, %s116
    $region4: #{patch_embedding.1} parent=1 // loop_header_branch
      %16 = sbr.rel (%p14) target = $region8
    $region5: #{patch_embedding.1} parent=1 // loop_body
      %s18 = ssub.s32 %s13, 1
      %s19 = ssub.s32 %s13, 2
      %s20 = sadd.s32 %s13, 1
      %s21 = ssub.s32 %s13, %s20
      %p22 = scmp.eq.s32.totalorder %s21, 0
      %s24 = sadd.s32 %s23, 1
      %s25 = scalar_select %p22, %s23, %s24
      %p28 = pneg %p22
      %p29 = scmp.eq.s32.totalorder %s13, 1
      %p30 = por %p28, %p29
      %p31 = scmp.ne.s32.totalorder %s23, %s26
      %p32 = scmp.eq.s32.totalorder %s13, 0
      %p33 = por %p31, %p32
      %p34 = scmp.ne.s32.totalorder %s23, %s26
      %p35 = scmp.eq.s32.totalorder %s18, 1
      %p36 = por %p34, %p35
      %p37 = scmp.ne.s32.totalorder %s26, %s27
      %p38 = scmp.eq.s32.totalorder %s18, 0
      %p39 = por %p37, %p38
      %p40 = scmp.ne.s32.totalorder %s26, %s27
      %p41 = scmp.eq.s32.totalorder %s19, 1
      %p42 = por %p40, %p41
      %p44 = scmp.ne.s32.totalorder %s27, %s43
      %p45 = scmp.eq.s32.totalorder %s19, 0
      %p46 = por %p44, %p45
      %s48 = sadd.s32 %s47, 1
      %p51 = scmp.eq.s32.totalorder %s13, 1
      %p52 = scmp.ne.s32.totalorder %s47, %s49
      %p53 = scmp.eq.s32.totalorder %s13, 0
      %p54 = por %p52, %p53
      %p55 = scmp.ne.s32.totalorder %s47, %s49
      %p56 = scmp.eq.s32.totalorder %s18, 1
      %p57 = por %p55, %p56
      %p58 = scmp.ne.s32.totalorder %s49, %s50
      %p59 = scmp.eq.s32.totalorder %s18, 0
      %p60 = por %p58, %p59
      %p61 = scmp.ne.s32.totalorder %s49, %s50
      %p62 = scmp.eq.s32.totalorder %s19, 1
      %p63 = por %p61, %p62
      %p65 = scmp.ne.s32.totalorder %s50, %s64
      %p66 = scmp.eq.s32.totalorder %s19, 0
      %p67 = por %p65, %p66
      %s69 = sadd.s32 %s68, 1
      %p72 = scmp.eq.s32.totalorder %s13, 1
      %p73 = scmp.ne.s32.totalorder %s68, %s70
      %p74 = scmp.eq.s32.totalorder %s13, 0
      %p75 = por %p73, %p74
      %p76 = scmp.ne.s32.totalorder %s68, %s70
      %p77 = scmp.eq.s32.totalorder %s18, 1
      %p78 = por %p76, %p77
      %p79 = scmp.ne.s32.totalorder %s70, %s71
      %p80 = scmp.eq.s32.totalorder %s18, 0
      %p81 = por %p79, %p80
      %p82 = scmp.ne.s32.totalorder %s70, %s71
      %p83 = scmp.eq.s32.totalorder %s19, 1
      %p84 = por %p82, %p83
      %p86 = scmp.ne.s32.totalorder %s71, %s85
      %p87 = scmp.eq.s32.totalorder %s19, 0
      %p88 = por %p86, %p87
      %s90 = sadd.s32 %s89, 1
      %p93 = scmp.eq.s32.totalorder %s13, 1
      %p94 = scmp.ne.s32.totalorder %s89, %s91
      %p95 = scmp.eq.s32.totalorder %s13, 0
      %p96 = por %p94, %p95
      %p97 = scmp.ne.s32.totalorder %s89, %s91
      %p98 = scmp.eq.s32.totalorder %s18, 1
      %p99 = por %p97, %p98
      %p100 = scmp.ne.s32.totalorder %s91, %s92
      %p101 = scmp.eq.s32.totalorder %s18, 0
      %p102 = por %p100, %p101
      %p103 = scmp.ne.s32.totalorder %s91, %s92
      %p104 = scmp.eq.s32.totalorder %s19, 1
      %p105 = por %p103, %p104
      %p107 = scmp.ne.s32.totalorder %s92, %s106
      %p108 = scmp.eq.s32.totalorder %s19, 0
      %p109 = por %p107, %p108
      %s110 = ssub.s32 %s13, %s20
      %p111 = scmp.eq.s32.totalorder %s110, 0
      %s113 = sadd.s32 %s112, 1
      %s114 = scalar_select %p111, %s112, %s113
      %p117 = pneg %p111
      %p118 = scmp.eq.s32.totalorder %s13, 1
      %p119 = por %p117, %p118
      %p120 = scmp.ne.s32.totalorder %s112, %s115
      %p121 = scmp.eq.s32.totalorder %s13, 0
      %p122 = por %p120, %p121
      %p123 = scmp.ne.s32.totalorder %s112, %s115
      %p124 = scmp.eq.s32.totalorder %s18, 1
      %p125 = por %p123, %p124
      %p126 = scmp.ne.s32.totalorder %s115, %s116
      %p127 = scmp.eq.s32.totalorder %s18, 0
      %p128 = por %p126, %p127
      %p129 = scmp.ne.s32.totalorder %s115, %s116
      %p130 = scmp.eq.s32.totalorder %s19, 1
      %p131 = por %p129, %p130
      %p133 = scmp.ne.s32.totalorder %s116, %s132
      %p134 = scmp.eq.s32.totalorder %s19, 0
      %p135 = por %p133, %p134
      %p136 = scmp.le.s32.totalorder 1, %s13
      %p137 = scmp.lt.s32.totalorder %s13, 3
      %p138 = pnand %p136, %p137
      %p139 = pneg %p138
      // Predicated region
      $region9: #{patch_embedding.1} parent=5 // pred_check
        _
      $region10: #{patch_embedding.1} parent=5 // pred_check_branch
        %141 = sbr.rel (%p138) target = $region12
      $region11: #{patch_embedding.1} parent=5 // pred_region
        %s142 = ssub.s32 %s13, 1
        // Predicated region
        $region13: #{patch_embedding.1} parent=11 // pred_check
          %p143 = pneg %p60
        $region14: #{patch_embedding.1} parent=11 // pred_check_branch
          %145 = sbr.rel (%p143) target = $region16
        $region15: #{patch_embedding.1} parent=11 // pred_region
          _
        $region16: #{patch_embedding.1} parent=11 // pred_fallthru
          _
        // Predicated region
        $region17: #{patch_embedding.1} parent=11 // pred_check
          %p146 = pneg %p81
        $region18: #{patch_embedding.1} parent=11 // pred_check_branch
          %148 = sbr.rel (%p146) target = $region20
        $region19: #{patch_embedding.1} parent=11 // pred_region
          _
        $region20: #{patch_embedding.1} parent=11 // pred_fallthru
          _
        // Predicated region
        $region21: #{patch_embedding.1} parent=11 // pred_check
          %p149 = pneg %p102
        $region22: #{patch_embedding.1} parent=11 // pred_check_branch
          %151 = sbr.rel (%p149) target = $region24
        $region23: #{patch_embedding.1} parent=11 // pred_region
          _
        $region24: #{patch_embedding.1} parent=11 // pred_fallthru
          _
      $region12: #{patch_embedding.1} parent=5 // pred_fallthru
        _
      %p152 = scmp.lt.s32.totalorder %s13, 2
      // Predicated region
      $region25: #{patch_embedding.1} parent=5 // pred_check
        %p153 = pneg %p152
      $region26: #{patch_embedding.1} parent=5 // pred_check_branch
        %155 = sbr.rel (%p153) target = $region28
      $region27: #{patch_embedding.1} parent=5 // pred_region
        // Predicated region
        $region29: #{patch_embedding.1} parent=27 // pred_check
          %p156 = pneg %p33
        $region30: #{patch_embedding.1} parent=27 // pred_check_branch
          %158 = sbr.rel (%p156) target = $region32
        $region31: #{patch_embedding.1} parent=27 // pred_region
          %s159 = smul.u32 32, %s13
          %p160 = scmp.lt.s32.totalorder %s159, 63
          %s161 = scalar_select %p160, %s159, 63
          %s162 = smul.addr %s161, 6
          %s163 = smul.addr %s162, 8
          %s164 = scalar_lea.vmem %s0, %s163
          %s165 = smul.u32 32, %s13
        $region32: #{patch_embedding.1} parent=27 // pred_fallthru
          _
      $region28: #{patch_embedding.1} parent=5 // pred_fallthru
        _
      %p166 = scmp.le.s32.totalorder 1, %s13
      %p167 = scmp.lt.s32.totalorder %s13, 3
      %p168 = pnand %p166, %p167
      %p169 = pneg %p168
      // Predicated region
      $region33: #{patch_embedding.1} parent=5 // pred_check
        _
      $region34: #{patch_embedding.1} parent=5 // pred_check_branch
        %171 = sbr.rel (%p168) target = $region36
      $region35: #{patch_embedding.1} parent=5 // pred_region
        %s172 = ssub.s32 %s13, 1
        %s173 = smul.u32 32, %s18
        %p174 = scmp.lt.s32.totalorder %s173, 63
        %s175 = scalar_select %p174, %s173, 63
        %s176 = smul.addr %s175, 6
        %s177 = smul.addr %s176, 8
        %s178 = scalar_lea.vmem %s0, %s177
        %p179 = pneg %p39
        %p180 = pneg %p36
        %p181 = pneg %p60
        %p182 = pneg %p57
        %p183 = pneg %p81
        %p184 = pneg %p78
        %p185 = pneg %p102
        %p186 = pneg %p99
        %p187 = pneg %p128
        %p188 = pneg %p125
        %s189 = sand.u32 %s115, 1
        %s190 = scalar_lea.sflag [#allocation3], %s189
        %s191 = sand.u32 %s115, 1
        %s192 = smul.addr %s191, 256
        %s193 = scalar_lea.vmem [#allocation2], %s192
        %s194 = smul.u32 32, %s18
        %p195 = scmp.lt.s32.totalorder %s194, 63
        %s196 = scalar_select %p195, %s194, 63
        %s197 = smul.addr %s196, 6
        %s198 = smul.addr %s197, 8
        %s199 = scalar_lea.vmem %s0, %s198
        %s200 = smul.u32 32, %s18
        %s201 = smul.u32 32, %s18
        %v203 = vld [vmem:[%s199] sm:$0xff]
        %v204 = vld [vmem:[%s199 + $0x8] sm:$0xff]
        %v205 = vld [vmem:[%s199 + $0x10] sm:$0xff]
        %v206 = vld [vmem:[%s199 + $0x18] sm:$0xff]
        %v207 = vld [vmem:[%s199 + $0x20] sm:$0xff]
        %v208 = vld [vmem:[%s199 + $0x28] sm:$0xff]
        %v209 = vld [vmem:[%s199 + $0x30] sm:$0xff]
        %v210 = vld [vmem:[%s199 + $0x38] sm:$0xff]
        %v211 = vld [vmem:[%s199 + $0x40] sm:$0xff]
        %v212 = vld [vmem:[%s199 + $0x48] sm:$0xff]
        %v213 = vld [vmem:[%s199 + $0x50] sm:$0xff]
        %v214 = vld [vmem:[%s199 + $0x58] sm:$0xff]
        %v215 = vld [vmem:[%s199 + $0x60] sm:$0xff]
        %v216 = vld [vmem:[%s199 + $0x68] sm:$0xff]
        %v217 = vld [vmem:[%s199 + $0x70] sm:$0xff]
        %v218 = vld [vmem:[%s199 + $0x78] sm:$0xff]
        %v219 = vld [vmem:[%s199 + $0x80] sm:$0xff]
        %v220 = vld [vmem:[%s199 + $0x88] sm:$0xff]
        %v221 = vld [vmem:[%s199 + $0x90] sm:$0xff]
        %v222 = vld [vmem:[%s199 + $0x98] sm:$0xff]
        %v223 = vld [vmem:[%s199 + $0xa0] sm:$0xff]
        %v224 = vld [vmem:[%s199 + $0xa8] sm:$0xff]
        %v225 = vld [vmem:[%s199 + $0xb0] sm:$0xff]
        %v226 = vld [vmem:[%s199 + $0xb8] sm:$0xff]
        %v227 = vld [vmem:[%s199 + $0xc0] sm:$0xff]
        %v228 = vld [vmem:[%s199 + $0xc8] sm:$0xff]
        %v229 = vld [vmem:[%s199 + $0xd0] sm:$0xff]
        %v230 = vld [vmem:[%s199 + $0xd8] sm:$0xff]
        %v231 = vld [vmem:[%s199 + $0xe0] sm:$0xff]
        %v232 = vld [vmem:[%s199 + $0xe8] sm:$0xff]
        %v233 = vld [vmem:[%s199 + $0xf0] sm:$0xff]
        %v234 = vld [vmem:[%s199 + $0xf8] sm:$0xff]
        %v235 = vld [vmem:[%s199 + $0x100] sm:$0xff]
        %v236 = vld [vmem:[%s199 + $0x108] sm:$0xff]
        %v237 = vld [vmem:[%s199 + $0x110] sm:$0xff]
        %v238 = vld [vmem:[%s199 + $0x118] sm:$0xff]
        %v239 = vld [vmem:[%s199 + $0x120] sm:$0xff]
        %v240 = vld [vmem:[%s199 + $0x128] sm:$0xff]
        %v241 = vld [vmem:[%s199 + $0x130] sm:$0xff]
        %v242 = vld [vmem:[%s199 + $0x138] sm:$0xff]
        %v243 = vld [vmem:[%s199 + $0x140] sm:$0xff]
        %v244 = vld [vmem:[%s199 + $0x148] sm:$0xff]
        %v245 = vld [vmem:[%s199 + $0x150] sm:$0xff]
        %v246 = vld [vmem:[%s199 + $0x158] sm:$0xff]
        %v247 = vld [vmem:[%s199 + $0x160] sm:$0xff]
        %v248 = vld [vmem:[%s199 + $0x168] sm:$0xff]
        %v249 = vld [vmem:[%s199 + $0x170] sm:$0xff]
        %v250 = vld [vmem:[%s199 + $0x178] sm:$0xff]
        %v251 = vld [vmem:[%s199 + $0x180] sm:$0xff]
        %v252 = vld [vmem:[%s199 + $0x188] sm:$0xff]
        %v253 = vld [vmem:[%s199 + $0x190] sm:$0xff]
        %v254 = vld [vmem:[%s199 + $0x198] sm:$0xff]
        %v255 = vld [vmem:[%s199 + $0x1a0] sm:$0xff]
        %v256 = vld [vmem:[%s199 + $0x1a8] sm:$0xff]
        %v257 = vld [vmem:[%s199 + $0x1b0] sm:$0xff]
        %v258 = vld [vmem:[%s199 + $0x1b8] sm:$0xff]
        %v259 = vld [vmem:[%s199 + $0x1c0] sm:$0xff]
        %v260 = vld [vmem:[%s199 + $0x1c8] sm:$0xff]
        %v261 = vld [vmem:[%s199 + $0x1d0] sm:$0xff]
        %v262 = vld [vmem:[%s199 + $0x1d8] sm:$0xff]
        %v263 = vld [vmem:[%s199 + $0x1e0] sm:$0xff]
        %v264 = vld [vmem:[%s199 + $0x1e8] sm:$0xff]
        %v265 = vld [vmem:[%s199 + $0x1f0] sm:$0xff]
        %v266 = vld [vmem:[%s199 + $0x1f8] sm:$0xff]
        %v267 = vld [vmem:[%s199 + $0x200] sm:$0xff]
        %v268 = vld [vmem:[%s199 + $0x208] sm:$0xff]
        %v269 = vld [vmem:[%s199 + $0x210] sm:$0xff]
        %v270 = vld [vmem:[%s199 + $0x218] sm:$0xff]
        %v271 = vld [vmem:[%s199 + $0x220] sm:$0xff]
        %v272 = vld [vmem:[%s199 + $0x228] sm:$0xff]
        %v273 = vld [vmem:[%s199 + $0x230] sm:$0xff]
        %v274 = vld [vmem:[%s199 + $0x238] sm:$0xff]
        %v275 = vld [vmem:[%s199 + $0x240] sm:$0xff]
        %v276 = vld [vmem:[%s199 + $0x248] sm:$0xff]
        %v277 = vld [vmem:[%s199 + $0x250] sm:$0xff]
        %v278 = vld [vmem:[%s199 + $0x258] sm:$0xff]
        %v279 = vld [vmem:[%s199 + $0x260] sm:$0xff]
        %v280 = vld [vmem:[%s199 + $0x268] sm:$0xff]
        %v281 = vld [vmem:[%s199 + $0x270] sm:$0xff]
        %v282 = vld [vmem:[%s199 + $0x278] sm:$0xff]
        %v283 = vld [vmem:[%s199 + $0x280] sm:$0xff]
        %v284 = vld [vmem:[%s199 + $0x288] sm:$0xff]
        %v285 = vld [vmem:[%s199 + $0x290] sm:$0xff]
        %v286 = vld [vmem:[%s199 + $0x298] sm:$0xff]
        %v287 = vld [vmem:[%s199 + $0x2a0] sm:$0xff]
        %v288 = vld [vmem:[%s199 + $0x2a8] sm:$0xff]
        %v289 = vld [vmem:[%s199 + $0x2b0] sm:$0xff]
        %v290 = vld [vmem:[%s199 + $0x2b8] sm:$0xff]
        %v291 = vld [vmem:[%s199 + $0x2c0] sm:$0xff]
        %v292 = vld [vmem:[%s199 + $0x2c8] sm:$0xff]
        %v293 = vld [vmem:[%s199 + $0x2d0] sm:$0xff]
        %v294 = vld [vmem:[%s199 + $0x2d8] sm:$0xff]
        %v295 = vld [vmem:[%s199 + $0x2e0] sm:$0xff]
        %v296 = vld [vmem:[%s199 + $0x2e8] sm:$0xff]
        %v297 = vld [vmem:[%s199 + $0x2f0] sm:$0xff]
        %v298 = vld [vmem:[%s199 + $0x2f8] sm:$0xff]
        %v299 = vld [vmem:[%s199 + $0x300] sm:$0xff]
        %v300 = vld [vmem:[%s199 + $0x308] sm:$0xff]
        %v301 = vld [vmem:[%s199 + $0x310] sm:$0xff]
        %v302 = vld [vmem:[%s199 + $0x318] sm:$0xff]
        %v303 = vld [vmem:[%s199 + $0x320] sm:$0xff]
        %v304 = vld [vmem:[%s199 + $0x328] sm:$0xff]
        %v305 = vld [vmem:[%s199 + $0x330] sm:$0xff]
        %v306 = vld [vmem:[%s199 + $0x338] sm:$0xff]
        %v307 = vld [vmem:[%s199 + $0x340] sm:$0xff]
        %v308 = vld [vmem:[%s199 + $0x348] sm:$0xff]
        %v309 = vld [vmem:[%s199 + $0x350] sm:$0xff]
        %v310 = vld [vmem:[%s199 + $0x358] sm:$0xff]
        %v311 = vld [vmem:[%s199 + $0x360] sm:$0xff]
        %v312 = vld [vmem:[%s199 + $0x368] sm:$0xff]
        %v313 = vld [vmem:[%s199 + $0x370] sm:$0xff]
        %v314 = vld [vmem:[%s199 + $0x378] sm:$0xff]
        %v315 = vld [vmem:[%s199 + $0x380] sm:$0xff]
        %v316 = vld [vmem:[%s199 + $0x388] sm:$0xff]
        %v317 = vld [vmem:[%s199 + $0x390] sm:$0xff]
        %v318 = vld [vmem:[%s199 + $0x398] sm:$0xff]
        %v319 = vld [vmem:[%s199 + $0x3a0] sm:$0xff]
        %v320 = vld [vmem:[%s199 + $0x3a8] sm:$0xff]
        %v321 = vld [vmem:[%s199 + $0x3b0] sm:$0xff]
        %v322 = vld [vmem:[%s199 + $0x3b8] sm:$0xff]
        %v323 = vld [vmem:[%s199 + $0x3c0] sm:$0xff]
        %v324 = vld [vmem:[%s199 + $0x3c8] sm:$0xff]
        %v325 = vld [vmem:[%s199 + $0x3d0] sm:$0xff]
        %v326 = vld [vmem:[%s199 + $0x3d8] sm:$0xff]
        %v327 = vld [vmem:[%s199 + $0x3e0] sm:$0xff]
        %v328 = vld [vmem:[%s199 + $0x3e8] sm:$0xff]
        %v329 = vld [vmem:[%s199 + $0x3f0] sm:$0xff]
        %v330 = vld [vmem:[%s199 + $0x3f8] sm:$0xff]
        %v331 = vld [vmem:[%s199 + $0x400] sm:$0xff]
        %v332 = vld [vmem:[%s199 + $0x408] sm:$0xff]
        %v333 = vld [vmem:[%s199 + $0x410] sm:$0xff]
        %v334 = vld [vmem:[%s199 + $0x418] sm:$0xff]
        %v335 = vld [vmem:[%s199 + $0x420] sm:$0xff]
        %v336 = vld [vmem:[%s199 + $0x428] sm:$0xff]
        %v337 = vld [vmem:[%s199 + $0x430] sm:$0xff]
        %v338 = vld [vmem:[%s199 + $0x438] sm:$0xff]
        %v339 = vld [vmem:[%s199 + $0x440] sm:$0xff]
        %v340 = vld [vmem:[%s199 + $0x448] sm:$0xff]
        %v341 = vld [vmem:[%s199 + $0x450] sm:$0xff]
        %v342 = vld [vmem:[%s199 + $0x458] sm:$0xff]
        %v343 = vld [vmem:[%s199 + $0x460] sm:$0xff]
        %v344 = vld [vmem:[%s199 + $0x468] sm:$0xff]
        %v345 = vld [vmem:[%s199 + $0x470] sm:$0xff]
        %v346 = vld [vmem:[%s199 + $0x478] sm:$0xff]
        %v347 = vld [vmem:[%s199 + $0x480] sm:$0xff]
        %v348 = vld [vmem:[%s199 + $0x488] sm:$0xff]
        %v349 = vld [vmem:[%s199 + $0x490] sm:$0xff]
        %v350 = vld [vmem:[%s199 + $0x498] sm:$0xff]
        %v351 = vld [vmem:[%s199 + $0x4a0] sm:$0xff]
        %v352 = vld [vmem:[%s199 + $0x4a8] sm:$0xff]
        %v353 = vld [vmem:[%s199 + $0x4b0] sm:$0xff]
        %v354 = vld [vmem:[%s199 + $0x4b8] sm:$0xff]
        %v355 = vld [vmem:[%s199 + $0x4c0] sm:$0xff]
        %v356 = vld [vmem:[%s199 + $0x4c8] sm:$0xff]
        %v357 = vld [vmem:[%s199 + $0x4d0] sm:$0xff]
        %v358 = vld [vmem:[%s199 + $0x4d8] sm:$0xff]
        %v359 = vld [vmem:[%s199 + $0x4e0] sm:$0xff]
        %v360 = vld [vmem:[%s199 + $0x4e8] sm:$0xff]
        %v361 = vld [vmem:[%s199 + $0x4f0] sm:$0xff]
        %v362 = vld [vmem:[%s199 + $0x4f8] sm:$0xff]
        %v363 = vld [vmem:[%s199 + $0x500] sm:$0xff]
        %v364 = vld [vmem:[%s199 + $0x508] sm:$0xff]
        %v365 = vld [vmem:[%s199 + $0x510] sm:$0xff]
        %v366 = vld [vmem:[%s199 + $0x518] sm:$0xff]
        %v367 = vld [vmem:[%s199 + $0x520] sm:$0xff]
        %v368 = vld [vmem:[%s199 + $0x528] sm:$0xff]
        %v369 = vld [vmem:[%s199 + $0x530] sm:$0xff]
        %v370 = vld [vmem:[%s199 + $0x538] sm:$0xff]
        %v371 = vld [vmem:[%s199 + $0x540] sm:$0xff]
        %v372 = vld [vmem:[%s199 + $0x548] sm:$0xff]
        %v373 = vld [vmem:[%s199 + $0x550] sm:$0xff]
        %v374 = vld [vmem:[%s199 + $0x558] sm:$0xff]
        %v375 = vld [vmem:[%s199 + $0x560] sm:$0xff]
        %v376 = vld [vmem:[%s199 + $0x568] sm:$0xff]
        %v377 = vld [vmem:[%s199 + $0x570] sm:$0xff]
        %v378 = vld [vmem:[%s199 + $0x578] sm:$0xff]
        %v379 = vld [vmem:[%s199 + $0x580] sm:$0xff]
        %v380 = vld [vmem:[%s199 + $0x588] sm:$0xff]
        %v381 = vld [vmem:[%s199 + $0x590] sm:$0xff]
        %v382 = vld [vmem:[%s199 + $0x598] sm:$0xff]
        %v383 = vld [vmem:[%s199 + $0x5a0] sm:$0xff]
        %v384 = vld [vmem:[%s199 + $0x5a8] sm:$0xff]
        %v385 = vld [vmem:[%s199 + $0x5b0] sm:$0xff]
        %v386 = vld [vmem:[%s199 + $0x5b8] sm:$0xff]
        %v387 = vld [vmem:[%s199 + $0x5c0] sm:$0xff]
        %v388 = vld [vmem:[%s199 + $0x5c8] sm:$0xff]
        %v389 = vld [vmem:[%s199 + $0x5d0] sm:$0xff]
        %v390 = vld [vmem:[%s199 + $0x5d8] sm:$0xff]
        %v391 = vld [vmem:[%s199 + $0x5e0] sm:$0xff]
        %v392 = vld [vmem:[%s199 + $0x5e8] sm:$0xff]
        %v393 = vld [vmem:[%s199 + $0x5f0] sm:$0xff]
        %v394 = vld [vmem:[%s199 + $0x5f8] sm:$0xff]
        %v395 = vpack.c.bf16 %v209, %v203
        %v396 = vpack.c.bf16 %v210, %v204
        %v397 = vpack.c.bf16 %v211, %v205
        %v398 = vpack.c.bf16 %v212, %v206
        %v399 = vpack.c.bf16 %v213, %v207
        %v400 = vpack.c.bf16 %v214, %v208
        %v401 = vpack.c.bf16 %v221, %v215
        %v402 = vpack.c.bf16 %v222, %v216
        %v403 = vpack.c.bf16 %v223, %v217
        %v404 = vpack.c.bf16 %v224, %v218
        %v405 = vpack.c.bf16 %v225, %v219
        %v406 = vpack.c.bf16 %v226, %v220
        %v407 = vpack.c.bf16 %v233, %v227
        %v408 = vpack.c.bf16 %v234, %v228
        %v409 = vpack.c.bf16 %v235, %v229
        %v410 = vpack.c.bf16 %v236, %v230
        %v411 = vpack.c.bf16 %v237, %v231
        %v412 = vpack.c.bf16 %v238, %v232
        %v413 = vpack.c.bf16 %v245, %v239
        %v414 = vpack.c.bf16 %v246, %v240
        %v415 = vpack.c.bf16 %v247, %v241
        %v416 = vpack.c.bf16 %v248, %v242
        %v417 = vpack.c.bf16 %v249, %v243
        %v418 = vpack.c.bf16 %v250, %v244
        %v419 = vpack.c.bf16 %v257, %v251
        %v420 = vpack.c.bf16 %v258, %v252
        %v421 = vpack.c.bf16 %v259, %v253
        %v422 = vpack.c.bf16 %v260, %v254
        %v423 = vpack.c.bf16 %v261, %v255
        %v424 = vpack.c.bf16 %v262, %v256
        %v425 = vpack.c.bf16 %v269, %v263
        %v426 = vpack.c.bf16 %v270, %v264
        %v427 = vpack.c.bf16 %v271, %v265
        %v428 = vpack.c.bf16 %v272, %v266
        %v429 = vpack.c.bf16 %v273, %v267
        %v430 = vpack.c.bf16 %v274, %v268
        %v431 = vpack.c.bf16 %v281, %v275
        %v432 = vpack.c.bf16 %v282, %v276
        %v433 = vpack.c.bf16 %v283, %v277
        %v434 = vpack.c.bf16 %v284, %v278
        %v435 = vpack.c.bf16 %v285, %v279
        %v436 = vpack.c.bf16 %v286, %v280
        %v437 = vpack.c.bf16 %v293, %v287
        %v438 = vpack.c.bf16 %v294, %v288
        %v439 = vpack.c.bf16 %v295, %v289
        %v440 = vpack.c.bf16 %v296, %v290
        %v441 = vpack.c.bf16 %v297, %v291
        %v442 = vpack.c.bf16 %v298, %v292
        %v443 = vpack.c.bf16 %v305, %v299
        %v444 = vpack.c.bf16 %v306, %v300
        %v445 = vpack.c.bf16 %v307, %v301
        %v446 = vpack.c.bf16 %v308, %v302
        %v447 = vpack.c.bf16 %v309, %v303
        %v448 = vpack.c.bf16 %v310, %v304
        %v449 = vpack.c.bf16 %v317, %v311
        %v450 = vpack.c.bf16 %v318, %v312
        %v451 = vpack.c.bf16 %v319, %v313
        %v452 = vpack.c.bf16 %v320, %v314
        %v453 = vpack.c.bf16 %v321, %v315
        %v454 = vpack.c.bf16 %v322, %v316
        %v455 = vpack.c.bf16 %v329, %v323
        %v456 = vpack.c.bf16 %v330, %v324
        %v457 = vpack.c.bf16 %v331, %v325
        %v458 = vpack.c.bf16 %v332, %v326
        %v459 = vpack.c.bf16 %v333, %v327
        %v460 = vpack.c.bf16 %v334, %v328
        %v461 = vpack.c.bf16 %v341, %v335
        %v462 = vpack.c.bf16 %v342, %v336
        %v463 = vpack.c.bf16 %v343, %v337
        %v464 = vpack.c.bf16 %v344, %v338
        %v465 = vpack.c.bf16 %v345, %v339
        %v466 = vpack.c.bf16 %v346, %v340
        %v467 = vpack.c.bf16 %v353, %v347
        %v468 = vpack.c.bf16 %v354, %v348
        %v469 = vpack.c.bf16 %v355, %v349
        %v470 = vpack.c.bf16 %v356, %v350
        %v471 = vpack.c.bf16 %v357, %v351
        %v472 = vpack.c.bf16 %v358, %v352
        %v473 = vpack.c.bf16 %v365, %v359
        %v474 = vpack.c.bf16 %v366, %v360
        %v475 = vpack.c.bf16 %v367, %v361
        %v476 = vpack.c.bf16 %v368, %v362
        %v477 = vpack.c.bf16 %v369, %v363
        %v478 = vpack.c.bf16 %v370, %v364
        %v479 = vpack.c.bf16 %v377, %v371
        %v480 = vpack.c.bf16 %v378, %v372
        %v481 = vpack.c.bf16 %v379, %v373
        %v482 = vpack.c.bf16 %v380, %v374
        %v483 = vpack.c.bf16 %v381, %v375
        %v484 = vpack.c.bf16 %v382, %v376
        %v485 = vpack.c.bf16 %v389, %v383
        %v486 = vpack.c.bf16 %v390, %v384
        %v487 = vpack.c.bf16 %v391, %v385
        %v488 = vpack.c.bf16 %v392, %v386
        %v489 = vpack.c.bf16 %v393, %v387
        %v490 = vpack.c.bf16 %v394, %v388
        %v491 = vunpack.c.l.bf16 %v395
        %v492 = vunpack.c.l.bf16 %v396
        %v493 = vunpack.c.l.bf16 %v397
        %v494 = vunpack.c.l.bf16 %v398
        %v495 = vunpack.c.l.bf16 %v399
        %v496 = vunpack.c.l.bf16 %v400
        %v497 = vunpack.c.h.bf16 %v395
        %v498 = vunpack.c.h.bf16 %v396
        %v499 = vunpack.c.h.bf16 %v397
        %v500 = vunpack.c.h.bf16 %v398
        %v501 = vunpack.c.h.bf16 %v399
        %v502 = vunpack.c.h.bf16 %v400
        %v503 = vunpack.c.l.bf16 %v401
        %v504 = vunpack.c.l.bf16 %v402
        %v505 = vunpack.c.l.bf16 %v403
        %v506 = vunpack.c.l.bf16 %v404
        %v507 = vunpack.c.l.bf16 %v405
        %v508 = vunpack.c.l.bf16 %v406
        %v509 = vunpack.c.h.bf16 %v401
        %v510 = vunpack.c.h.bf16 %v402
        %v511 = vunpack.c.h.bf16 %v403
        %v512 = vunpack.c.h.bf16 %v404
        %v513 = vunpack.c.h.bf16 %v405
        %v514 = vunpack.c.h.bf16 %v406
        %v515 = vunpack.c.l.bf16 %v407
        %v516 = vunpack.c.l.bf16 %v408
        %v517 = vunpack.c.l.bf16 %v409
        %v518 = vunpack.c.l.bf16 %v410
        %v519 = vunpack.c.l.bf16 %v411
        %v520 = vunpack.c.l.bf16 %v412
        %v521 = vunpack.c.h.bf16 %v407
        %v522 = vunpack.c.h.bf16 %v408
        %v523 = vunpack.c.h.bf16 %v409
        %v524 = vunpack.c.h.bf16 %v410
        %v525 = vunpack.c.h.bf16 %v411
        %v526 = vunpack.c.h.bf16 %v412
        %v527 = vunpack.c.l.bf16 %v413
        %v528 = vunpack.c.l.bf16 %v414
        %v529 = vunpack.c.l.bf16 %v415
        %v530 = vunpack.c.l.bf16 %v416
        %v531 = vunpack.c.l.bf16 %v417
        %v532 = vunpack.c.l.bf16 %v418
        %v533 = vunpack.c.h.bf16 %v413
        %v534 = vunpack.c.h.bf16 %v414
        %v535 = vunpack.c.h.bf16 %v415
        %v536 = vunpack.c.h.bf16 %v416
        %v537 = vunpack.c.h.bf16 %v417
        %v538 = vunpack.c.h.bf16 %v418
        %v539 = vunpack.c.l.bf16 %v419
        %v540 = vunpack.c.l.bf16 %v420
        %v541 = vunpack.c.l.bf16 %v421
        %v542 = vunpack.c.l.bf16 %v422
        %v543 = vunpack.c.l.bf16 %v423
        %v544 = vunpack.c.l.bf16 %v424
        %v545 = vunpack.c.h.bf16 %v419
        %v546 = vunpack.c.h.bf16 %v420
        %v547 = vunpack.c.h.bf16 %v421
        %v548 = vunpack.c.h.bf16 %v422
        %v549 = vunpack.c.h.bf16 %v423
        %v550 = vunpack.c.h.bf16 %v424
        %v551 = vunpack.c.l.bf16 %v425
        %v552 = vunpack.c.l.bf16 %v426
        %v553 = vunpack.c.l.bf16 %v427
        %v554 = vunpack.c.l.bf16 %v428
        %v555 = vunpack.c.l.bf16 %v429
        %v556 = vunpack.c.l.bf16 %v430
        %v557 = vunpack.c.h.bf16 %v425
        %v558 = vunpack.c.h.bf16 %v426
        %v559 = vunpack.c.h.bf16 %v427
        %v560 = vunpack.c.h.bf16 %v428
        %v561 = vunpack.c.h.bf16 %v429
        %v562 = vunpack.c.h.bf16 %v430
        %v563 = vunpack.c.l.bf16 %v431
        %v564 = vunpack.c.l.bf16 %v432
        %v565 = vunpack.c.l.bf16 %v433
        %v566 = vunpack.c.l.bf16 %v434
        %v567 = vunpack.c.l.bf16 %v435
        %v568 = vunpack.c.l.bf16 %v436
        %v569 = vunpack.c.h.bf16 %v431
        %v570 = vunpack.c.h.bf16 %v432
        %v571 = vunpack.c.h.bf16 %v433
        %v572 = vunpack.c.h.bf16 %v434
        %v573 = vunpack.c.h.bf16 %v435
        %v574 = vunpack.c.h.bf16 %v436
        %v575 = vunpack.c.l.bf16 %v437
        %v576 = vunpack.c.l.bf16 %v438
        %v577 = vunpack.c.l.bf16 %v439
        %v578 = vunpack.c.l.bf16 %v440
        %v579 = vunpack.c.l.bf16 %v441
        %v580 = vunpack.c.l.bf16 %v442
        %v581 = vunpack.c.h.bf16 %v437
        %v582 = vunpack.c.h.bf16 %v438
        %v583 = vunpack.c.h.bf16 %v439
        %v584 = vunpack.c.h.bf16 %v440
        %v585 = vunpack.c.h.bf16 %v441
        %v586 = vunpack.c.h.bf16 %v442
        %v587 = vunpack.c.l.bf16 %v443
        %v588 = vunpack.c.l.bf16 %v444
        %v589 = vunpack.c.l.bf16 %v445
        %v590 = vunpack.c.l.bf16 %v446
        %v591 = vunpack.c.l.bf16 %v447
        %v592 = vunpack.c.l.bf16 %v448
        %v593 = vunpack.c.h.bf16 %v443
        %v594 = vunpack.c.h.bf16 %v444
        %v595 = vunpack.c.h.bf16 %v445
        %v596 = vunpack.c.h.bf16 %v446
        %v597 = vunpack.c.h.bf16 %v447
        %v598 = vunpack.c.h.bf16 %v448
        %v599 = vunpack.c.l.bf16 %v449
        %v600 = vunpack.c.l.bf16 %v450
        %v601 = vunpack.c.l.bf16 %v451
        %v602 = vunpack.c.l.bf16 %v452
        %v603 = vunpack.c.l.bf16 %v453
        %v604 = vunpack.c.l.bf16 %v454
        %v605 = vunpack.c.h.bf16 %v449
        %v606 = vunpack.c.h.bf16 %v450
        %v607 = vunpack.c.h.bf16 %v451
        %v608 = vunpack.c.h.bf16 %v452
        %v609 = vunpack.c.h.bf16 %v453
        %v610 = vunpack.c.h.bf16 %v454
        %v611 = vunpack.c.l.bf16 %v455
        %v612 = vunpack.c.l.bf16 %v456
        %v613 = vunpack.c.l.bf16 %v457
        %v614 = vunpack.c.l.bf16 %v458
        %v615 = vunpack.c.l.bf16 %v459
        %v616 = vunpack.c.l.bf16 %v460
        %v617 = vunpack.c.h.bf16 %v455
        %v618 = vunpack.c.h.bf16 %v456
        %v619 = vunpack.c.h.bf16 %v457
        %v620 = vunpack.c.h.bf16 %v458
        %v621 = vunpack.c.h.bf16 %v459
        %v622 = vunpack.c.h.bf16 %v460
        %v623 = vunpack.c.l.bf16 %v461
        %v624 = vunpack.c.l.bf16 %v462
        %v625 = vunpack.c.l.bf16 %v463
        %v626 = vunpack.c.l.bf16 %v464
        %v627 = vunpack.c.l.bf16 %v465
        %v628 = vunpack.c.l.bf16 %v466
        %v629 = vunpack.c.h.bf16 %v461
        %v630 = vunpack.c.h.bf16 %v462
        %v631 = vunpack.c.h.bf16 %v463
        %v632 = vunpack.c.h.bf16 %v464
        %v633 = vunpack.c.h.bf16 %v465
        %v634 = vunpack.c.h.bf16 %v466
        %v635 = vunpack.c.l.bf16 %v467
        %v636 = vunpack.c.l.bf16 %v468
        %v637 = vunpack.c.l.bf16 %v469
        %v638 = vunpack.c.l.bf16 %v470
        %v639 = vunpack.c.l.bf16 %v471
        %v640 = vunpack.c.l.bf16 %v472
        %v641 = vunpack.c.h.bf16 %v467
        %v642 = vunpack.c.h.bf16 %v468
        %v643 = vunpack.c.h.bf16 %v469
        %v644 = vunpack.c.h.bf16 %v470
        %v645 = vunpack.c.h.bf16 %v471
        %v646 = vunpack.c.h.bf16 %v472
        %v647 = vunpack.c.l.bf16 %v473
        %v648 = vunpack.c.l.bf16 %v474
        %v649 = vunpack.c.l.bf16 %v475
        %v650 = vunpack.c.l.bf16 %v476
        %v651 = vunpack.c.l.bf16 %v477
        %v652 = vunpack.c.l.bf16 %v478
        %v653 = vunpack.c.h.bf16 %v473
        %v654 = vunpack.c.h.bf16 %v474
        %v655 = vunpack.c.h.bf16 %v475
        %v656 = vunpack.c.h.bf16 %v476
        %v657 = vunpack.c.h.bf16 %v477
        %v658 = vunpack.c.h.bf16 %v478
        %v659 = vunpack.c.l.bf16 %v479
        %v660 = vunpack.c.l.bf16 %v480
        %v661 = vunpack.c.l.bf16 %v481
        %v662 = vunpack.c.l.bf16 %v482
        %v663 = vunpack.c.l.bf16 %v483
        %v664 = vunpack.c.l.bf16 %v484
        %v665 = vunpack.c.h.bf16 %v479
        %v666 = vunpack.c.h.bf16 %v480
        %v667 = vunpack.c.h.bf16 %v481
        %v668 = vunpack.c.h.bf16 %v482
        %v669 = vunpack.c.h.bf16 %v483
        %v670 = vunpack.c.h.bf16 %v484
        %v671 = vunpack.c.l.bf16 %v485
        %v672 = vunpack.c.l.bf16 %v486
        %v673 = vunpack.c.l.bf16 %v487
        %v674 = vunpack.c.l.bf16 %v488
        %v675 = vunpack.c.l.bf16 %v489
        %v676 = vunpack.c.l.bf16 %v490
        %v677 = vunpack.c.h.bf16 %v485
        %v678 = vunpack.c.h.bf16 %v486
        %v679 = vunpack.c.h.bf16 %v487
        %v680 = vunpack.c.h.bf16 %v488
        %v681 = vunpack.c.h.bf16 %v489
        %v682 = vunpack.c.h.bf16 %v490
        %v683 = vsub.f32 %v203, %v491
        %v684 = vsub.f32 %v204, %v492
        %v685 = vsub.f32 %v205, %v493
        %v686 = vsub.f32 %v206, %v494
        %v687 = vsub.f32 %v207, %v495
        %v688 = vsub.f32 %v208, %v496
        %v689 = vsub.f32 %v209, %v497
        %v690 = vsub.f32 %v210, %v498
        %v691 = vsub.f32 %v211, %v499
        %v692 = vsub.f32 %v212, %v500
        %v693 = vsub.f32 %v213, %v501
        %v694 = vsub.f32 %v214, %v502
        %v695 = vsub.f32 %v215, %v503
        %v696 = vsub.f32 %v216, %v504
        %v697 = vsub.f32 %v217, %v505
        %v698 = vsub.f32 %v218, %v506
        %v699 = vsub.f32 %v219, %v507
        %v700 = vsub.f32 %v220, %v508
        %v701 = vsub.f32 %v221, %v509
        %v702 = vsub.f32 %v222, %v510
        %v703 = vsub.f32 %v223, %v511
        %v704 = vsub.f32 %v224, %v512
        %v705 = vsub.f32 %v225, %v513
        %v706 = vsub.f32 %v226, %v514
        %v707 = vsub.f32 %v227, %v515
        %v708 = vsub.f32 %v228, %v516
        %v709 = vsub.f32 %v229, %v517
        %v710 = vsub.f32 %v230, %v518
        %v711 = vsub.f32 %v231, %v519
        %v712 = vsub.f32 %v232, %v520
        %v713 = vsub.f32 %v233, %v521
        %v714 = vsub.f32 %v234, %v522
        %v715 = vsub.f32 %v235, %v523
        %v716 = vsub.f32 %v236, %v524
        %v717 = vsub.f32 %v237, %v525
        %v718 = vsub.f32 %v238, %v526
        %v719 = vsub.f32 %v239, %v527
        %v720 = vsub.f32 %v240, %v528
        %v721 = vsub.f32 %v241, %v529
        %v722 = vsub.f32 %v242, %v530
        %v723 = vsub.f32 %v243, %v531
        %v724 = vsub.f32 %v244, %v532
        %v725 = vsub.f32 %v245, %v533
        %v726 = vsub.f32 %v246, %v534
        %v727 = vsub.f32 %v247, %v535
        %v728 = vsub.f32 %v248, %v536
        %v729 = vsub.f32 %v249, %v537
        %v730 = vsub.f32 %v250, %v538
        %v731 = vsub.f32 %v251, %v539
        %v732 = vsub.f32 %v252, %v540
        %v733 = vsub.f32 %v253, %v541
        %v734 = vsub.f32 %v254, %v542
        %v735 = vsub.f32 %v255, %v543
        %v736 = vsub.f32 %v256, %v544
        %v737 = vsub.f32 %v257, %v545
        %v738 = vsub.f32 %v258, %v546
        %v739 = vsub.f32 %v259, %v547
        %v740 = vsub.f32 %v260, %v548
        %v741 = vsub.f32 %v261, %v549
        %v742 = vsub.f32 %v262, %v550
        %v743 = vsub.f32 %v263, %v551
        %v744 = vsub.f32 %v264, %v552
        %v745 = vsub.f32 %v265, %v553
        %v746 = vsub.f32 %v266, %v554
        %v747 = vsub.f32 %v267, %v555
        %v748 = vsub.f32 %v268, %v556
        %v749 = vsub.f32 %v269, %v557
        %v750 = vsub.f32 %v270, %v558
        %v751 = vsub.f32 %v271, %v559
        %v752 = vsub.f32 %v272, %v560
        %v753 = vsub.f32 %v273, %v561
        %v754 = vsub.f32 %v274, %v562
        %v755 = vsub.f32 %v275, %v563
        %v756 = vsub.f32 %v276, %v564
        %v757 = vsub.f32 %v277, %v565
        %v758 = vsub.f32 %v278, %v566
        %v759 = vsub.f32 %v279, %v567
        %v760 = vsub.f32 %v280, %v568
        %v761 = vsub.f32 %v281, %v569
        %v762 = vsub.f32 %v282, %v570
        %v763 = vsub.f32 %v283, %v571
        %v764 = vsub.f32 %v284, %v572
        %v765 = vsub.f32 %v285, %v573
        %v766 = vsub.f32 %v286, %v574
        %v767 = vsub.f32 %v287, %v575
        %v768 = vsub.f32 %v288, %v576
        %v769 = vsub.f32 %v289, %v577
        %v770 = vsub.f32 %v290, %v578
        %v771 = vsub.f32 %v291, %v579
        %v772 = vsub.f32 %v292, %v580
        %v773 = vsub.f32 %v293, %v581
        %v774 = vsub.f32 %v294, %v582
        %v775 = vsub.f32 %v295, %v583
        %v776 = vsub.f32 %v296, %v584
        %v777 = vsub.f32 %v297, %v585
        %v778 = vsub.f32 %v298, %v586
        %v779 = vsub.f32 %v299, %v587
        %v780 = vsub.f32 %v300, %v588
        %v781 = vsub.f32 %v301, %v589
        %v782 = vsub.f32 %v302, %v590
        %v783 = vsub.f32 %v303, %v591
        %v784 = vsub.f32 %v304, %v592
        %v785 = vsub.f32 %v305, %v593
        %v786 = vsub.f32 %v306, %v594
        %v787 = vsub.f32 %v307, %v595
        %v788 = vsub.f32 %v308, %v596
        %v789 = vsub.f32 %v309, %v597
        %v790 = vsub.f32 %v310, %v598
        %v791 = vsub.f32 %v311, %v599
        %v792 = vsub.f32 %v312, %v600
        %v793 = vsub.f32 %v313, %v601
        %v794 = vsub.f32 %v314, %v602
        %v795 = vsub.f32 %v315, %v603
        %v796 = vsub.f32 %v316, %v604
        %v797 = vsub.f32 %v317, %v605
        %v798 = vsub.f32 %v318, %v606
        %v799 = vsub.f32 %v319, %v607
        %v800 = vsub.f32 %v320, %v608
        %v801 = vsub.f32 %v321, %v609
        %v802 = vsub.f32 %v322, %v610
        %v803 = vsub.f32 %v323, %v611
        %v804 = vsub.f32 %v324, %v612
        %v805 = vsub.f32 %v325, %v613
        %v806 = vsub.f32 %v326, %v614
        %v807 = vsub.f32 %v327, %v615
        %v808 = vsub.f32 %v328, %v616
        %v809 = vsub.f32 %v329, %v617
        %v810 = vsub.f32 %v330, %v618
        %v811 = vsub.f32 %v331, %v619
        %v812 = vsub.f32 %v332, %v620
        %v813 = vsub.f32 %v333, %v621
        %v814 = vsub.f32 %v334, %v622
        %v815 = vsub.f32 %v335, %v623
        %v816 = vsub.f32 %v336, %v624
        %v817 = vsub.f32 %v337, %v625
        %v818 = vsub.f32 %v338, %v626
        %v819 = vsub.f32 %v339, %v627
        %v820 = vsub.f32 %v340, %v628
        %v821 = vsub.f32 %v341, %v629
        %v822 = vsub.f32 %v342, %v630
        %v823 = vsub.f32 %v343, %v631
        %v824 = vsub.f32 %v344, %v632
        %v825 = vsub.f32 %v345, %v633
        %v826 = vsub.f32 %v346, %v634
        %v827 = vsub.f32 %v347, %v635
        %v828 = vsub.f32 %v348, %v636
        %v829 = vsub.f32 %v349, %v637
        %v830 = vsub.f32 %v350, %v638
        %v831 = vsub.f32 %v351, %v639
        %v832 = vsub.f32 %v352, %v640
        %v833 = vsub.f32 %v353, %v641
        %v834 = vsub.f32 %v354, %v642
        %v835 = vsub.f32 %v355, %v643
        %v836 = vsub.f32 %v356, %v644
        %v837 = vsub.f32 %v357, %v645
        %v838 = vsub.f32 %v358, %v646
        %v839 = vsub.f32 %v359, %v647
        %v840 = vsub.f32 %v360, %v648
        %v841 = vsub.f32 %v361, %v649
        %v842 = vsub.f32 %v362, %v650
        %v843 = vsub.f32 %v363, %v651
        %v844 = vsub.f32 %v364, %v652
        %v845 = vsub.f32 %v365, %v653
        %v846 = vsub.f32 %v366, %v654
        %v847 = vsub.f32 %v367, %v655
        %v848 = vsub.f32 %v368, %v656
        %v849 = vsub.f32 %v369, %v657
        %v850 = vsub.f32 %v370, %v658
        %v851 = vsub.f32 %v371, %v659
        %v852 = vsub.f32 %v372, %v660
        %v853 = vsub.f32 %v373, %v661
        %v854 = vsub.f32 %v374, %v662
        %v855 = vsub.f32 %v375, %v663
        %v856 = vsub.f32 %v376, %v664
        %v857 = vsub.f32 %v377, %v665
        %v858 = vsub.f32 %v378, %v666
        %v859 = vsub.f32 %v379, %v667
        %v860 = vsub.f32 %v380, %v668
        %v861 = vsub.f32 %v381, %v669
        %v862 = vsub.f32 %v382, %v670
        %v863 = vsub.f32 %v383, %v671
        %v864 = vsub.f32 %v384, %v672
        %v865 = vsub.f32 %v385, %v673
        %v866 = vsub.f32 %v386, %v674
        %v867 = vsub.f32 %v387, %v675
        %v868 = vsub.f32 %v388, %v676
        %v869 = vsub.f32 %v389, %v677
        %v870 = vsub.f32 %v390, %v678
        %v871 = vsub.f32 %v391, %v679
        %v872 = vsub.f32 %v392, %v680
        %v873 = vsub.f32 %v393, %v681
        %v874 = vsub.f32 %v394, %v682
        %v875 = vpack.c.bf16 %v689, %v683
        %v876 = vpack.c.bf16 %v690, %v684
        %v877 = vpack.c.bf16 %v691, %v685
        %v878 = vpack.c.bf16 %v692, %v686
        %v879 = vpack.c.bf16 %v693, %v687
        %v880 = vpack.c.bf16 %v694, %v688
        %v881 = vpack.c.bf16 %v701, %v695
        %v882 = vpack.c.bf16 %v702, %v696
        %v883 = vpack.c.bf16 %v703, %v697
        %v884 = vpack.c.bf16 %v704, %v698
        %v885 = vpack.c.bf16 %v705, %v699
        %v886 = vpack.c.bf16 %v706, %v700
        %v887 = vpack.c.bf16 %v713, %v707
        %v888 = vpack.c.bf16 %v714, %v708
        %v889 = vpack.c.bf16 %v715, %v709
        %v890 = vpack.c.bf16 %v716, %v710
        %v891 = vpack.c.bf16 %v717, %v711
        %v892 = vpack.c.bf16 %v718, %v712
        %v893 = vpack.c.bf16 %v725, %v719
        %v894 = vpack.c.bf16 %v726, %v720
        %v895 = vpack.c.bf16 %v727, %v721
        %v896 = vpack.c.bf16 %v728, %v722
        %v897 = vpack.c.bf16 %v729, %v723
        %v898 = vpack.c.bf16 %v730, %v724
        %v899 = vpack.c.bf16 %v737, %v731
        %v900 = vpack.c.bf16 %v738, %v732
        %v901 = vpack.c.bf16 %v739, %v733
        %v902 = vpack.c.bf16 %v740, %v734
        %v903 = vpack.c.bf16 %v741, %v735
        %v904 = vpack.c.bf16 %v742, %v736
        %v905 = vpack.c.bf16 %v749, %v743
        %v906 = vpack.c.bf16 %v750, %v744
        %v907 = vpack.c.bf16 %v751, %v745
        %v908 = vpack.c.bf16 %v752, %v746
        %v909 = vpack.c.bf16 %v753, %v747
        %v910 = vpack.c.bf16 %v754, %v748
        %v911 = vpack.c.bf16 %v761, %v755
        %v912 = vpack.c.bf16 %v762, %v756
        %v913 = vpack.c.bf16 %v763, %v757
        %v914 = vpack.c.bf16 %v764, %v758
        %v915 = vpack.c.bf16 %v765, %v759
        %v916 = vpack.c.bf16 %v766, %v760
        %v917 = vpack.c.bf16 %v773, %v767
        %v918 = vpack.c.bf16 %v774, %v768
        %v919 = vpack.c.bf16 %v775, %v769
        %v920 = vpack.c.bf16 %v776, %v770
        %v921 = vpack.c.bf16 %v777, %v771
        %v922 = vpack.c.bf16 %v778, %v772
        %v923 = vpack.c.bf16 %v785, %v779
        %v924 = vpack.c.bf16 %v786, %v780
        %v925 = vpack.c.bf16 %v787, %v781
        %v926 = vpack.c.bf16 %v788, %v782
        %v927 = vpack.c.bf16 %v789, %v783
        %v928 = vpack.c.bf16 %v790, %v784
        %v929 = vpack.c.bf16 %v797, %v791
        %v930 = vpack.c.bf16 %v798, %v792
        %v931 = vpack.c.bf16 %v799, %v793
        %v932 = vpack.c.bf16 %v800, %v794
        %v933 = vpack.c.bf16 %v801, %v795
        %v934 = vpack.c.bf16 %v802, %v796
        %v935 = vpack.c.bf16 %v809, %v803
        %v936 = vpack.c.bf16 %v810, %v804
        %v937 = vpack.c.bf16 %v811, %v805
        %v938 = vpack.c.bf16 %v812, %v806
        %v939 = vpack.c.bf16 %v813, %v807
        %v940 = vpack.c.bf16 %v814, %v808
        %v941 = vpack.c.bf16 %v821, %v815
        %v942 = vpack.c.bf16 %v822, %v816
        %v943 = vpack.c.bf16 %v823, %v817
        %v944 = vpack.c.bf16 %v824, %v818
        %v945 = vpack.c.bf16 %v825, %v819
        %v946 = vpack.c.bf16 %v826, %v820
        %v947 = vpack.c.bf16 %v833, %v827
        %v948 = vpack.c.bf16 %v834, %v828
        %v949 = vpack.c.bf16 %v835, %v829
        %v950 = vpack.c.bf16 %v836, %v830
        %v951 = vpack.c.bf16 %v837, %v831
        %v952 = vpack.c.bf16 %v838, %v832
        %v953 = vpack.c.bf16 %v845, %v839
        %v954 = vpack.c.bf16 %v846, %v840
        %v955 = vpack.c.bf16 %v847, %v841
        %v956 = vpack.c.bf16 %v848, %v842
        %v957 = vpack.c.bf16 %v849, %v843
        %v958 = vpack.c.bf16 %v850, %v844
        %v959 = vpack.c.bf16 %v857, %v851
        %v960 = vpack.c.bf16 %v858, %v852
        %v961 = vpack.c.bf16 %v859, %v853
        %v962 = vpack.c.bf16 %v860, %v854
        %v963 = vpack.c.bf16 %v861, %v855
        %v964 = vpack.c.bf16 %v862, %v856
        %v965 = vpack.c.bf16 %v869, %v863
        %v966 = vpack.c.bf16 %v870, %v864
        %v967 = vpack.c.bf16 %v871, %v865
        %v968 = vpack.c.bf16 %v872, %v866
        %v969 = vpack.c.bf16 %v873, %v867
        %v970 = vpack.c.bf16 %v874, %v868
        %v971 = vld [vmem:[%s1] sm:$0xf]
        %v972 = vld [vmem:[%s1 + $0x4] sm:$0xf]
        %v973 = vld [vmem:[%s1 + $0x8] sm:$0xf]
        %v974 = vld [vmem:[%s1 + $0xc] sm:$0xf]
        %v975 = vld [vmem:[%s1 + $0x10] sm:$0xf]
        %v976 = vld [vmem:[%s1 + $0x14] sm:$0xf]
        %v977 = vld [vmem:[%s1 + $0x18] sm:$0xf]
        %v978 = vld [vmem:[%s1 + $0x1c] sm:$0xf]
        %v979 = vld [vmem:[%s1 + $0x20] sm:$0xf]
        %v980 = vld [vmem:[%s1 + $0x24] sm:$0xf]
        %v981 = vld [vmem:[%s1 + $0x28] sm:$0xf]
        %v982 = vld [vmem:[%s1 + $0x2c] sm:$0xf]
        %v983 = vld [vmem:[%s1 + $0x30] sm:$0xf]
        %v984 = vld [vmem:[%s1 + $0x34] sm:$0xf]
        %v985 = vld [vmem:[%s1 + $0x38] sm:$0xf]
        %v986 = vld [vmem:[%s1 + $0x3c] sm:$0xf]
        %v987 = vld [vmem:[%s1 + $0x40] sm:$0xf]
        %v988 = vld [vmem:[%s1 + $0x44] sm:$0xf]
        %v989 = vld [vmem:[%s1 + $0x48] sm:$0xf]
        %v990 = vld [vmem:[%s1 + $0x4c] sm:$0xf]
        %v991 = vld [vmem:[%s1 + $0x50] sm:$0xf]
        %v992 = vld [vmem:[%s1 + $0x54] sm:$0xf]
        %v993 = vld [vmem:[%s1 + $0x58] sm:$0xf]
        %v994 = vld [vmem:[%s1 + $0x5c] sm:$0xf]
        %v995 = vld [vmem:[%s1 + $0x60] sm:$0xf]
        %v996 = vld [vmem:[%s1 + $0x64] sm:$0xf]
        %v997 = vld [vmem:[%s1 + $0x68] sm:$0xf]
        %v998 = vld [vmem:[%s1 + $0x6c] sm:$0xf]
        %v999 = vld [vmem:[%s1 + $0x70] sm:$0xf]
        %v1000 = vld [vmem:[%s1 + $0x74] sm:$0xf]
        %v1001 = vld [vmem:[%s1 + $0x78] sm:$0xf]
        %v1002 = vld [vmem:[%s1 + $0x7c] sm:$0xf]
        %v1003 = vld [vmem:[%s1 + $0x80] sm:$0xf]
        %v1004 = vld [vmem:[%s1 + $0x84] sm:$0xf]
        %v1005 = vld [vmem:[%s1 + $0x88] sm:$0xf]
        %v1006 = vld [vmem:[%s1 + $0x8c] sm:$0xf]
        %v1007 = vld [vmem:[%s1 + $0x90] sm:$0xf]
        %v1008 = vld [vmem:[%s1 + $0x94] sm:$0xf]
        %v1009 = vld [vmem:[%s1 + $0x98] sm:$0xf]
        %v1010 = vld [vmem:[%s1 + $0x9c] sm:$0xf]
        %v1011 = vld [vmem:[%s1 + $0xa0] sm:$0xf]
        %v1012 = vld [vmem:[%s1 + $0xa4] sm:$0xf]
        %v1013 = vld [vmem:[%s1 + $0xa8] sm:$0xf]
        %v1014 = vld [vmem:[%s1 + $0xac] sm:$0xf]
        %v1015 = vld [vmem:[%s1 + $0xb0] sm:$0xf]
        %v1016 = vld [vmem:[%s1 + $0xb4] sm:$0xf]
        %v1017 = vld [vmem:[%s1 + $0xb8] sm:$0xf]
        %v1018 = vld [vmem:[%s1 + $0xbc] sm:$0xf]
        %v1019 = vld [vmem:[%s1 + $0xc0] sm:$0xf]
        %v1020 = vld [vmem:[%s1 + $0xc4] sm:$0xf]
        %v1021 = vld [vmem:[%s1 + $0xc8] sm:$0xf]
        %v1022 = vld [vmem:[%s1 + $0xcc] sm:$0xf]
        %v1023 = vld [vmem:[%s1 + $0xd0] sm:$0xf]
        %v1024 = vld [vmem:[%s1 + $0xd4] sm:$0xf]
        %v1025 = vld [vmem:[%s1 + $0xd8] sm:$0xf]
        %v1026 = vld [vmem:[%s1 + $0xdc] sm:$0xf]
        %v1027 = vld [vmem:[%s1 + $0xe0] sm:$0xf]
        %v1028 = vld [vmem:[%s1 + $0xe4] sm:$0xf]
        %v1029 = vld [vmem:[%s1 + $0xe8] sm:$0xf]
        %v1030 = vld [vmem:[%s1 + $0xec] sm:$0xf]
        %v1031 = vld [vmem:[%s1 + $0xf0] sm:$0xf]
        %v1032 = vld [vmem:[%s1 + $0xf4] sm:$0xf]
        %v1033 = vld [vmem:[%s1 + $0xf8] sm:$0xf]
        %v1034 = vld [vmem:[%s1 + $0xfc] sm:$0xf]
        %v1035 = vld [vmem:[%s1 + $0x100] sm:$0xf]
        %v1036 = vld [vmem:[%s1 + $0x104] sm:$0xf]
        %v1037 = vld [vmem:[%s1 + $0x108] sm:$0xf]
        %v1038 = vld [vmem:[%s1 + $0x10c] sm:$0xf]
        %v1039 = vld [vmem:[%s1 + $0x110] sm:$0xf]
        %v1040 = vld [vmem:[%s1 + $0x114] sm:$0xf]
        %v1041 = vld [vmem:[%s1 + $0x118] sm:$0xf]
        %v1042 = vld [vmem:[%s1 + $0x11c] sm:$0xf]
        %v1043 = vld [vmem:[%s1 + $0x120] sm:$0xf]
        %v1044 = vld [vmem:[%s1 + $0x124] sm:$0xf]
        %v1045 = vld [vmem:[%s1 + $0x128] sm:$0xf]
        %v1046 = vld [vmem:[%s1 + $0x12c] sm:$0xf]
        %v1047 = vld [vmem:[%s1 + $0x130] sm:$0xf]
        %v1048 = vld [vmem:[%s1 + $0x134] sm:$0xf]
        %v1049 = vld [vmem:[%s1 + $0x138] sm:$0xf]
        %v1050 = vld [vmem:[%s1 + $0x13c] sm:$0xf]
        %v1051 = vld [vmem:[%s1 + $0x140] sm:$0xf]
        %v1052 = vld [vmem:[%s1 + $0x144] sm:$0xf]
        %v1053 = vld [vmem:[%s1 + $0x148] sm:$0xf]
        %v1054 = vld [vmem:[%s1 + $0x14c] sm:$0xf]
        %v1055 = vld [vmem:[%s1 + $0x150] sm:$0xf]
        %v1056 = vld [vmem:[%s1 + $0x154] sm:$0xf]
        %v1057 = vld [vmem:[%s1 + $0x158] sm:$0xf]
        %v1058 = vld [vmem:[%s1 + $0x15c] sm:$0xf]
        %v1059 = vld [vmem:[%s1 + $0x160] sm:$0xf]
        %v1060 = vld [vmem:[%s1 + $0x164] sm:$0xf]
        %v1061 = vld [vmem:[%s1 + $0x168] sm:$0xf]
        %v1062 = vld [vmem:[%s1 + $0x16c] sm:$0xf]
        %v1063 = vld [vmem:[%s1 + $0x170] sm:$0xf]
        %v1064 = vld [vmem:[%s1 + $0x174] sm:$0xf]
        %v1065 = vld [vmem:[%s1 + $0x178] sm:$0xf]
        %v1066 = vld [vmem:[%s1 + $0x17c] sm:$0xf]
        %v1163 = vunpack.c.l.b16 %v971
        %v1164 = vunpack.c.l.b16 %v972
        %v1165 = vunpack.c.l.b16 %v973
        %v1166 = vunpack.c.l.b16 %v974
        %v1167 = vunpack.c.l.b16 %v975
        %v1168 = vunpack.c.l.b16 %v976
        %v1169 = vunpack.c.l.b16 %v977
        %v1170 = vunpack.c.l.b16 %v978
        %v1171 = vunpack.c.l.b16 %v979
        %v1172 = vunpack.c.l.b16 %v980
        %v1173 = vunpack.c.l.b16 %v981
        %v1174 = vunpack.c.l.b16 %v982
        %v1175 = vunpack.c.l.b16 %v983
        %v1176 = vunpack.c.l.b16 %v984
        %v1177 = vunpack.c.l.b16 %v985
        %v1178 = vunpack.c.l.b16 %v986
        %v1179 = vunpack.c.l.b16 %v987
        %v1180 = vunpack.c.l.b16 %v988
        %v1181 = vunpack.c.l.b16 %v989
        %v1182 = vunpack.c.l.b16 %v990
        %v1183 = vunpack.c.l.b16 %v991
        %v1184 = vunpack.c.l.b16 %v992
        %v1185 = vunpack.c.l.b16 %v993
        %v1186 = vunpack.c.l.b16 %v994
        %v1187 = vunpack.c.l.b16 %v995
        %v1188 = vunpack.c.l.b16 %v996
        %v1189 = vunpack.c.l.b16 %v997
        %v1190 = vunpack.c.l.b16 %v998
        %v1191 = vunpack.c.l.b16 %v999
        %v1192 = vunpack.c.l.b16 %v1000
        %v1193 = vunpack.c.l.b16 %v1001
        %v1194 = vunpack.c.l.b16 %v1002
        %v1195 = vunpack.c.l.b16 %v1003
        %v1196 = vunpack.c.l.b16 %v1004
        %v1197 = vunpack.c.l.b16 %v1005
        %v1198 = vunpack.c.l.b16 %v1006
        %v1199 = vunpack.c.l.b16 %v1007
        %v1200 = vunpack.c.l.b16 %v1008
        %v1201 = vunpack.c.l.b16 %v1009
        %v1202 = vunpack.c.l.b16 %v1010
        %v1203 = vunpack.c.l.b16 %v1011
        %v1204 = vunpack.c.l.b16 %v1012
        %v1205 = vunpack.c.l.b16 %v1013
        %v1206 = vunpack.c.l.b16 %v1014
        %v1207 = vunpack.c.l.b16 %v1015
        %v1208 = vunpack.c.l.b16 %v1016
        %v1209 = vunpack.c.l.b16 %v1017
        %v1210 = vunpack.c.l.b16 %v1018
        %v1211 = vunpack.c.l.b16 %v1019
        %v1212 = vunpack.c.l.b16 %v1020
        %v1213 = vunpack.c.l.b16 %v1021
        %v1214 = vunpack.c.l.b16 %v1022
        %v1215 = vunpack.c.l.b16 %v1023
        %v1216 = vunpack.c.l.b16 %v1024
        %v1217 = vunpack.c.l.b16 %v1025
        %v1218 = vunpack.c.l.b16 %v1026
        %v1219 = vunpack.c.l.b16 %v1027
        %v1220 = vunpack.c.l.b16 %v1028
        %v1221 = vunpack.c.l.b16 %v1029
        %v1222 = vunpack.c.l.b16 %v1030
        %v1223 = vunpack.c.l.b16 %v1031
        %v1224 = vunpack.c.l.b16 %v1032
        %v1225 = vunpack.c.l.b16 %v1033
        %v1226 = vunpack.c.l.b16 %v1034
        %v1227 = vunpack.c.l.b16 %v1035
        %v1228 = vunpack.c.l.b16 %v1036
        %v1229 = vunpack.c.l.b16 %v1037
        %v1230 = vunpack.c.l.b16 %v1038
        %v1231 = vunpack.c.l.b16 %v1039
        %v1232 = vunpack.c.l.b16 %v1040
        %v1233 = vunpack.c.l.b16 %v1041
        %v1234 = vunpack.c.l.b16 %v1042
        %v1235 = vunpack.c.l.b16 %v1043
        %v1236 = vunpack.c.l.b16 %v1044
        %v1237 = vunpack.c.l.b16 %v1045
        %v1238 = vunpack.c.l.b16 %v1046
        %v1239 = vunpack.c.l.b16 %v1047
        %v1240 = vunpack.c.l.b16 %v1048
        %v1241 = vunpack.c.l.b16 %v1049
        %v1242 = vunpack.c.l.b16 %v1050
        %v1243 = vunpack.c.l.b16 %v1051
        %v1244 = vunpack.c.l.b16 %v1052
        %v1245 = vunpack.c.l.b16 %v1053
        %v1246 = vunpack.c.l.b16 %v1054
        %v1247 = vunpack.c.l.b16 %v1055
        %v1248 = vunpack.c.l.b16 %v1056
        %v1249 = vunpack.c.l.b16 %v1057
        %v1250 = vunpack.c.l.b16 %v1058
        %v1251 = vunpack.c.l.b16 %v1059
        %v1252 = vunpack.c.l.b16 %v1060
        %v1253 = vunpack.c.l.b16 %v1061
        %v1254 = vunpack.c.l.b16 %v1062
        %v1255 = vunpack.c.l.b16 %v1063
        %v1256 = vunpack.c.l.b16 %v1064
        %v1257 = vunpack.c.l.b16 %v1065
        %v1258 = vunpack.c.l.b16 %v1066
        %v1259 = vpack.c.b16 %v1164, %v1163
        %v1260 = vpack.c.b16 %v1166, %v1165
        %v1261 = vpack.c.b16 %v1168, %v1167
        %v1262 = vpack.c.b16 %v1170, %v1169
        %v1263 = vpack.c.b16 %v1172, %v1171
        %v1264 = vpack.c.b16 %v1174, %v1173
        %v1265 = vpack.c.b16 %v1176, %v1175
        %v1266 = vpack.c.b16 %v1178, %v1177
        %v1267 = vpack.c.b16 %v1180, %v1179
        %v1268 = vpack.c.b16 %v1182, %v1181
        %v1269 = vpack.c.b16 %v1184, %v1183
        %v1270 = vpack.c.b16 %v1186, %v1185
        %v1271 = vpack.c.b16 %v1188, %v1187
        %v1272 = vpack.c.b16 %v1190, %v1189
        %v1273 = vpack.c.b16 %v1192, %v1191
        %v1274 = vpack.c.b16 %v1194, %v1193
        %v1275 = vpack.c.b16 %v1196, %v1195
        %v1276 = vpack.c.b16 %v1198, %v1197
        %v1277 = vpack.c.b16 %v1200, %v1199
        %v1278 = vpack.c.b16 %v1202, %v1201
        %v1279 = vpack.c.b16 %v1204, %v1203
        %v1280 = vpack.c.b16 %v1206, %v1205
        %v1281 = vpack.c.b16 %v1208, %v1207
        %v1282 = vpack.c.b16 %v1210, %v1209
        %v1283 = vpack.c.b16 %v1212, %v1211
        %v1284 = vpack.c.b16 %v1214, %v1213
        %v1285 = vpack.c.b16 %v1216, %v1215
        %v1286 = vpack.c.b16 %v1218, %v1217
        %v1287 = vpack.c.b16 %v1220, %v1219
        %v1288 = vpack.c.b16 %v1222, %v1221
        %v1289 = vpack.c.b16 %v1224, %v1223
        %v1290 = vpack.c.b16 %v1226, %v1225
        %v1291 = vpack.c.b16 %v1228, %v1227
        %v1292 = vpack.c.b16 %v1230, %v1229
        %v1293 = vpack.c.b16 %v1232, %v1231
        %v1294 = vpack.c.b16 %v1234, %v1233
        %v1295 = vpack.c.b16 %v1236, %v1235
        %v1296 = vpack.c.b16 %v1238, %v1237
        %v1297 = vpack.c.b16 %v1240, %v1239
        %v1298 = vpack.c.b16 %v1242, %v1241
        %v1299 = vpack.c.b16 %v1244, %v1243
        %v1300 = vpack.c.b16 %v1246, %v1245
        %v1301 = vpack.c.b16 %v1248, %v1247
        %v1302 = vpack.c.b16 %v1250, %v1249
        %v1303 = vpack.c.b16 %v1252, %v1251
        %v1304 = vpack.c.b16 %v1254, %v1253
        %v1305 = vpack.c.b16 %v1256, %v1255
        %v1306 = vpack.c.b16 %v1258, %v1257
        %1355 = vmatprep.subr.bf16.mxu0 0
        %1356 = vmatpush1.bf16.msra.mxu0 %v1266
        %1357 = vmatprep.subr.bf16.mxu0 0
        %1358 = vmatpush1.bf16.msra.mxu0 %v1265
        %1359 = vmatprep.subr.bf16.mxu0 0
        %1360 = vmatpush1.bf16.msra.mxu0 %v1264
        %1361 = vmatprep.subr.bf16.mxu0 0
        %1362 = vmatpush1.bf16.msra.mxu0 %v1263
        %1363 = vmatprep.subr.bf16.mxu0 0
        %1364 = vmatpush1.bf16.msra.mxu0 %v1262
        %1365 = vmatprep.subr.bf16.mxu0 0
        %1366 = vmatpush1.bf16.msra.mxu0 %v1261
        %1367 = vmatprep.subr.bf16.mxu0 0
        %1368 = vmatpush1.bf16.msra.mxu0 %v1260
        %1369 = vmatprep.subr.bf16.mxu0 0
        %1370 = vmatpush1.bf16.msra.mxu0 %v1259
        %1371 = vmatprep.subr.bf16.mxu0 0
        %1372 = vmatpush2.bf16.msra.mxu0 %v1274
        %1373 = vmatprep.subr.bf16.mxu0 0
        %1374 = vmatpush2.bf16.msra.mxu0 %v1273
        %1375 = vmatprep.subr.bf16.mxu0 0
        %1376 = vmatpush2.bf16.msra.mxu0 %v1272
        %1377 = vmatprep.subr.bf16.mxu0 0
        %1378 = vmatpush2.bf16.msra.mxu0 %v1271
        %1379 = vmatprep.subr.bf16.mxu0 0
        %1380 = vmatpush2.bf16.msra.mxu0 %v1270
        %1381 = vmatprep.subr.bf16.mxu0 0
        %1382 = vmatpush2.bf16.msra.mxu0 %v1269
        %1383 = vmatprep.subr.bf16.mxu0 0
        %1384 = vmatpush2.bf16.msra.mxu0 %v1268
        %1385 = vmatprep.subr.bf16.mxu0 0
        %1386 = vmatpush2.bf16.msra.mxu0 %v1267
        %1387 = vmatprep.mubr.bf16.mxu0 %v876
        %1388 = vmatmul.mubr.bf16.gmra.mxu0 %v875
        %v1389 = vpop.f32.mrf.mxu0
        %v1390 = vadd.f32 0.0, %v1389
        %v1391 = vpop.f32.mrf.mxu0
        %v1392 = vpop.f32.mrf.mxu0
        %v1393 = vadd.f32 0.0, %v1392
        %v1394 = vpop.f32.mrf.mxu0
        %1395 = vmatprep.mubr.bf16.mxu0 %v882
        %1396 = vmatmul.mubr.bf16.gmra.mxu0 %v881
        %v1397 = vpop.f32.mrf.mxu0
        %v1398 = vadd.f32 0.0, %v1397
        %v1399 = vpop.f32.mrf.mxu0
        %v1400 = vpop.f32.mrf.mxu0
        %v1401 = vadd.f32 0.0, %v1400
        %v1402 = vpop.f32.mrf.mxu0
        %1403 = vmatprep.mubr.bf16.mxu0 %v888
        %1404 = vmatmul.mubr.bf16.gmra.mxu0 %v887
        %v1405 = vpop.f32.mrf.mxu0
        %v1406 = vadd.f32 0.0, %v1405
        %v1407 = vpop.f32.mrf.mxu0
        %v1408 = vpop.f32.mrf.mxu0
        %v1409 = vadd.f32 0.0, %v1408
        %v1410 = vpop.f32.mrf.mxu0
        %1411 = vmatprep.mubr.bf16.mxu0 %v894
        %1412 = vmatmul.mubr.bf16.gmra.mxu0 %v893
        %v1413 = vpop.f32.mrf.mxu0
        %v1414 = vadd.f32 0.0, %v1413
        %v1415 = vpop.f32.mrf.mxu0
        %v1416 = vpop.f32.mrf.mxu0
        %v1417 = vadd.f32 0.0, %v1416
        %v1418 = vpop.f32.mrf.mxu0
        %1419 = vmatprep.mubr.bf16.mxu0 %v900
        %1420 = vmatmul.mubr.bf16.gmra.mxu0 %v899
        %v1421 = vpop.f32.mrf.mxu0
        %v1422 = vadd.f32 0.0, %v1421
        %v1423 = vpop.f32.mrf.mxu0
        %v1424 = vpop.f32.mrf.mxu0
        %v1425 = vadd.f32 0.0, %v1424
        %v1426 = vpop.f32.mrf.mxu0
        %1427 = vmatprep.mubr.bf16.mxu0 %v906
        %1428 = vmatmul.mubr.bf16.gmra.mxu0 %v905
        %v1429 = vpop.f32.mrf.mxu0
        %v1430 = vadd.f32 0.0, %v1429
        %v1431 = vpop.f32.mrf.mxu0
        %v1432 = vpop.f32.mrf.mxu0
        %v1433 = vadd.f32 0.0, %v1432
        %v1434 = vpop.f32.mrf.mxu0
        %1435 = vmatprep.mubr.bf16.mxu0 %v912
        %1436 = vmatmul.mubr.bf16.gmra.mxu0 %v911
        %v1437 = vpop.f32.mrf.mxu0
        %v1438 = vadd.f32 0.0, %v1437
        %v1439 = vpop.f32.mrf.mxu0
        %v1440 = vpop.f32.mrf.mxu0
        %v1441 = vadd.f32 0.0, %v1440
        %v1442 = vpop.f32.mrf.mxu0
        %1443 = vmatprep.mubr.bf16.mxu0 %v918
        %1444 = vmatmul.mubr.bf16.gmra.mxu0 %v917
        %v1445 = vpop.f32.mrf.mxu0
        %v1446 = vadd.f32 0.0, %v1445
        %v1447 = vpop.f32.mrf.mxu0
        %v1448 = vpop.f32.mrf.mxu0
        %v1449 = vadd.f32 0.0, %v1448
        %v1450 = vpop.f32.mrf.mxu0
        %1451 = vmatprep.mubr.bf16.mxu0 %v924
        %1452 = vmatmul.mubr.bf16.gmra.mxu0 %v923
        %v1453 = vpop.f32.mrf.mxu0
        %v1454 = vadd.f32 0.0, %v1453
        %v1455 = vpop.f32.mrf.mxu0
        %v1456 = vpop.f32.mrf.mxu0
        %v1457 = vadd.f32 0.0, %v1456
        %v1458 = vpop.f32.mrf.mxu0
        %1459 = vmatprep.mubr.bf16.mxu0 %v930
        %1460 = vmatmul.mubr.bf16.gmra.mxu0 %v929
        %v1461 = vpop.f32.mrf.mxu0
        %v1462 = vadd.f32 0.0, %v1461
        %v1463 = vpop.f32.mrf.mxu0
        %v1464 = vpop.f32.mrf.mxu0
        %v1465 = vadd.f32 0.0, %v1464
        %v1466 = vpop.f32.mrf.mxu0
        %1467 = vmatprep.mubr.bf16.mxu0 %v936
        %1468 = vmatmul.mubr.bf16.gmra.mxu0 %v935
        %v1469 = vpop.f32.mrf.mxu0
        %v1470 = vadd.f32 0.0, %v1469
        %v1471 = vpop.f32.mrf.mxu0
        %v1472 = vpop.f32.mrf.mxu0
        %v1473 = vadd.f32 0.0, %v1472
        %v1474 = vpop.f32.mrf.mxu0
        %1475 = vmatprep.mubr.bf16.mxu0 %v942
        %1476 = vmatmul.mubr.bf16.gmra.mxu0 %v941
        %v1477 = vpop.f32.mrf.mxu0
        %v1478 = vadd.f32 0.0, %v1477
        %v1479 = vpop.f32.mrf.mxu0
        %v1480 = vpop.f32.mrf.mxu0
        %v1481 = vadd.f32 0.0, %v1480
        %v1482 = vpop.f32.mrf.mxu0
        %1483 = vmatprep.mubr.bf16.mxu0 %v948
        %1484 = vmatmul.mubr.bf16.gmra.mxu0 %v947
        %v1485 = vpop.f32.mrf.mxu0
        %v1486 = vadd.f32 0.0, %v1485
        %v1487 = vpop.f32.mrf.mxu0
        %v1488 = vpop.f32.mrf.mxu0
        %v1489 = vadd.f32 0.0, %v1488
        %v1490 = vpop.f32.mrf.mxu0
        %1491 = vmatprep.mubr.bf16.mxu0 %v954
        %1492 = vmatmul.mubr.bf16.gmra.mxu0 %v953
        %v1493 = vpop.f32.mrf.mxu0
        %v1494 = vadd.f32 0.0, %v1493
        %v1495 = vpop.f32.mrf.mxu0
        %v1496 = vpop.f32.mrf.mxu0
        %v1497 = vadd.f32 0.0, %v1496
        %v1498 = vpop.f32.mrf.mxu0
        %1499 = vmatprep.mubr.bf16.mxu0 %v960
        %1500 = vmatmul.mubr.bf16.gmra.mxu0 %v959
        %v1501 = vpop.f32.mrf.mxu0
        %v1502 = vadd.f32 0.0, %v1501
        %v1503 = vpop.f32.mrf.mxu0
        %v1504 = vpop.f32.mrf.mxu0
        %v1505 = vadd.f32 0.0, %v1504
        %v1506 = vpop.f32.mrf.mxu0
        %1507 = vmatprep.mubr.bf16.mxu0 %v966
        %1508 = vmatmul.mubr.bf16.gmra.mxu0 %v965
        %v1509 = vpop.f32.mrf.mxu0
        %v1510 = vadd.f32 0.0, %v1509
        %v1511 = vpop.f32.mrf.mxu0
        %v1512 = vpop.f32.mrf.mxu0
        %v1513 = vadd.f32 0.0, %v1512
        %v1514 = vpop.f32.mrf.mxu0
        %1515 = vdwg.mxu0
        %1516 = vmatprep.subr.bf16.mxu0 0
        %1517 = vmatpush1.bf16.msra.mxu0 %v1282
        %1518 = vmatprep.subr.bf16.mxu0 0
        %1519 = vmatpush1.bf16.msra.mxu0 %v1281
        %1520 = vmatprep.subr.bf16.mxu0 0
        %1521 = vmatpush1.bf16.msra.mxu0 %v1280
        %1522 = vmatprep.subr.bf16.mxu0 0
        %1523 = vmatpush1.bf16.msra.mxu0 %v1279
        %1524 = vmatprep.subr.bf16.mxu0 0
        %1525 = vmatpush1.bf16.msra.mxu0 %v1278
        %1526 = vmatprep.subr.bf16.mxu0 0
        %1527 = vmatpush1.bf16.msra.mxu0 %v1277
        %1528 = vmatprep.subr.bf16.mxu0 0
        %1529 = vmatpush1.bf16.msra.mxu0 %v1276
        %1530 = vmatprep.subr.bf16.mxu0 0
        %1531 = vmatpush1.bf16.msra.mxu0 %v1275
        %1532 = vmatprep.subr.bf16.mxu0 0
        %1533 = vmatpush2.bf16.msra.mxu0 %v1290
        %1534 = vmatprep.subr.bf16.mxu0 0
        %1535 = vmatpush2.bf16.msra.mxu0 %v1289
        %1536 = vmatprep.subr.bf16.mxu0 0
        %1537 = vmatpush2.bf16.msra.mxu0 %v1288
        %1538 = vmatprep.subr.bf16.mxu0 0
        %1539 = vmatpush2.bf16.msra.mxu0 %v1287
        %1540 = vmatprep.subr.bf16.mxu0 0
        %1541 = vmatpush2.bf16.msra.mxu0 %v1286
        %1542 = vmatprep.subr.bf16.mxu0 0
        %1543 = vmatpush2.bf16.msra.mxu0 %v1285
        %1544 = vmatprep.subr.bf16.mxu0 0
        %1545 = vmatpush2.bf16.msra.mxu0 %v1284
        %1546 = vmatprep.subr.bf16.mxu0 0
        %1547 = vmatpush2.bf16.msra.mxu0 %v1283
        %1548 = vmatprep.mubr.bf16.mxu0 %v878
        %1549 = vmatmul.mubr.bf16.gmra.mxu0 %v877
        %v1550 = vpop.f32.mrf.mxu0
        %v1551 = vadd.f32 %v1390, %v1550
        %v1552 = vpop.f32.mrf.mxu0
        %v1553 = vpop.f32.mrf.mxu0
        %v1554 = vadd.f32 %v1393, %v1553
        %v1555 = vpop.f32.mrf.mxu0
        %1556 = vmatprep.mubr.bf16.mxu0 %v884
        %1557 = vmatmul.mubr.bf16.gmra.mxu0 %v883
        %v1558 = vpop.f32.mrf.mxu0
        %v1559 = vadd.f32 %v1398, %v1558
        %v1560 = vpop.f32.mrf.mxu0
        %v1561 = vpop.f32.mrf.mxu0
        %v1562 = vadd.f32 %v1401, %v1561
        %v1563 = vpop.f32.mrf.mxu0
        %1564 = vmatprep.mubr.bf16.mxu0 %v890
        %1565 = vmatmul.mubr.bf16.gmra.mxu0 %v889
        %v1566 = vpop.f32.mrf.mxu0
        %v1567 = vadd.f32 %v1406, %v1566
        %v1568 = vpop.f32.mrf.mxu0
        %v1569 = vpop.f32.mrf.mxu0
        %v1570 = vadd.f32 %v1409, %v1569
        %v1571 = vpop.f32.mrf.mxu0
        %1572 = vmatprep.mubr.bf16.mxu0 %v896
        %1573 = vmatmul.mubr.bf16.gmra.mxu0 %v895
        %v1574 = vpop.f32.mrf.mxu0
        %v1575 = vadd.f32 %v1414, %v1574
        %v1576 = vpop.f32.mrf.mxu0
        %v1577 = vpop.f32.mrf.mxu0
        %v1578 = vadd.f32 %v1417, %v1577
        %v1579 = vpop.f32.mrf.mxu0
        %1580 = vmatprep.mubr.bf16.mxu0 %v902
        %1581 = vmatmul.mubr.bf16.gmra.mxu0 %v901
        %v1582 = vpop.f32.mrf.mxu0
        %v1583 = vadd.f32 %v1422, %v1582
        %v1584 = vpop.f32.mrf.mxu0
        %v1585 = vpop.f32.mrf.mxu0
        %v1586 = vadd.f32 %v1425, %v1585
        %v1587 = vpop.f32.mrf.mxu0
        %1588 = vmatprep.mubr.bf16.mxu0 %v908
        %1589 = vmatmul.mubr.bf16.gmra.mxu0 %v907
        %v1590 = vpop.f32.mrf.mxu0
        %v1591 = vadd.f32 %v1430, %v1590
        %v1592 = vpop.f32.mrf.mxu0
        %v1593 = vpop.f32.mrf.mxu0
        %v1594 = vadd.f32 %v1433, %v1593
        %v1595 = vpop.f32.mrf.mxu0
        %1596 = vmatprep.mubr.bf16.mxu0 %v914
        %1597 = vmatmul.mubr.bf16.gmra.mxu0 %v913
        %v1598 = vpop.f32.mrf.mxu0
        %v1599 = vadd.f32 %v1438, %v1598
        %v1600 = vpop.f32.mrf.mxu0
        %v1601 = vpop.f32.mrf.mxu0
        %v1602 = vadd.f32 %v1441, %v1601
        %v1603 = vpop.f32.mrf.mxu0
        %1604 = vmatprep.mubr.bf16.mxu0 %v920
        %1605 = vmatmul.mubr.bf16.gmra.mxu0 %v919
        %v1606 = vpop.f32.mrf.mxu0
        %v1607 = vadd.f32 %v1446, %v1606
        %v1608 = vpop.f32.mrf.mxu0
        %v1609 = vpop.f32.mrf.mxu0
        %v1610 = vadd.f32 %v1449, %v1609
        %v1611 = vpop.f32.mrf.mxu0
        %1612 = vmatprep.mubr.bf16.mxu0 %v926
        %1613 = vmatmul.mubr.bf16.gmra.mxu0 %v925
        %v1614 = vpop.f32.mrf.mxu0
        %v1615 = vadd.f32 %v1454, %v1614
        %v1616 = vpop.f32.mrf.mxu0
        %v1617 = vpop.f32.mrf.mxu0
        %v1618 = vadd.f32 %v1457, %v1617
        %v1619 = vpop.f32.mrf.mxu0
        %1620 = vmatprep.mubr.bf16.mxu0 %v932
        %1621 = vmatmul.mubr.bf16.gmra.mxu0 %v931
        %v1622 = vpop.f32.mrf.mxu0
        %v1623 = vadd.f32 %v1462, %v1622
        %v1624 = vpop.f32.mrf.mxu0
        %v1625 = vpop.f32.mrf.mxu0
        %v1626 = vadd.f32 %v1465, %v1625
        %v1627 = vpop.f32.mrf.mxu0
        %1628 = vmatprep.mubr.bf16.mxu0 %v938
        %1629 = vmatmul.mubr.bf16.gmra.mxu0 %v937
        %v1630 = vpop.f32.mrf.mxu0
        %v1631 = vadd.f32 %v1470, %v1630
        %v1632 = vpop.f32.mrf.mxu0
        %v1633 = vpop.f32.mrf.mxu0
        %v1634 = vadd.f32 %v1473, %v1633
        %v1635 = vpop.f32.mrf.mxu0
        %1636 = vmatprep.mubr.bf16.mxu0 %v944
        %1637 = vmatmul.mubr.bf16.gmra.mxu0 %v943
        %v1638 = vpop.f32.mrf.mxu0
        %v1639 = vadd.f32 %v1478, %v1638
        %v1640 = vpop.f32.mrf.mxu0
        %v1641 = vpop.f32.mrf.mxu0
        %v1642 = vadd.f32 %v1481, %v1641
        %v1643 = vpop.f32.mrf.mxu0
        %1644 = vmatprep.mubr.bf16.mxu0 %v950
        %1645 = vmatmul.mubr.bf16.gmra.mxu0 %v949
        %v1646 = vpop.f32.mrf.mxu0
        %v1647 = vadd.f32 %v1486, %v1646
        %v1648 = vpop.f32.mrf.mxu0
        %v1649 = vpop.f32.mrf.mxu0
        %v1650 = vadd.f32 %v1489, %v1649
        %v1651 = vpop.f32.mrf.mxu0
        %1652 = vmatprep.mubr.bf16.mxu0 %v956
        %1653 = vmatmul.mubr.bf16.gmra.mxu0 %v955
        %v1654 = vpop.f32.mrf.mxu0
        %v1655 = vadd.f32 %v1494, %v1654
        %v1656 = vpop.f32.mrf.mxu0
        %v1657 = vpop.f32.mrf.mxu0
        %v1658 = vadd.f32 %v1497, %v1657
        %v1659 = vpop.f32.mrf.mxu0
        %1660 = vmatprep.mubr.bf16.mxu0 %v962
        %1661 = vmatmul.mubr.bf16.gmra.mxu0 %v961
        %v1662 = vpop.f32.mrf.mxu0
        %v1663 = vadd.f32 %v1502, %v1662
        %v1664 = vpop.f32.mrf.mxu0
        %v1665 = vpop.f32.mrf.mxu0
        %v1666 = vadd.f32 %v1505, %v1665
        %v1667 = vpop.f32.mrf.mxu0
        %1668 = vmatprep.mubr.bf16.mxu0 %v968
        %1669 = vmatmul.mubr.bf16.gmra.mxu0 %v967
        %v1670 = vpop.f32.mrf.mxu0
        %v1671 = vadd.f32 %v1510, %v1670
        %v1672 = vpop.f32.mrf.mxu0
        %v1673 = vpop.f32.mrf.mxu0
        %v1674 = vadd.f32 %v1513, %v1673
        %v1675 = vpop.f32.mrf.mxu0
        %1676 = vdwg.mxu0
        %1677 = vmatprep.subr.bf16.mxu0 0
        %1678 = vmatpush1.bf16.msra.mxu0 %v1298
        %1679 = vmatprep.subr.bf16.mxu0 0
        %1680 = vmatpush1.bf16.msra.mxu0 %v1297
        %1681 = vmatprep.subr.bf16.mxu0 0
        %1682 = vmatpush1.bf16.msra.mxu0 %v1296
        %1683 = vmatprep.subr.bf16.mxu0 0
        %1684 = vmatpush1.bf16.msra.mxu0 %v1295
        %1685 = vmatprep.subr.bf16.mxu0 0
        %1686 = vmatpush1.bf16.msra.mxu0 %v1294
        %1687 = vmatprep.subr.bf16.mxu0 0
        %1688 = vmatpush1.bf16.msra.mxu0 %v1293
        %1689 = vmatprep.subr.bf16.mxu0 0
        %1690 = vmatpush1.bf16.msra.mxu0 %v1292
        %1691 = vmatprep.subr.bf16.mxu0 0
        %1692 = vmatpush1.bf16.msra.mxu0 %v1291
        %1693 = vmatprep.subr.bf16.mxu0 0
        %1694 = vmatpush2.bf16.msra.mxu0 %v1306
        %1695 = vmatprep.subr.bf16.mxu0 0
        %1696 = vmatpush2.bf16.msra.mxu0 %v1305
        %1697 = vmatprep.subr.bf16.mxu0 0
        %1698 = vmatpush2.bf16.msra.mxu0 %v1304
        %1699 = vmatprep.subr.bf16.mxu0 0
        %1700 = vmatpush2.bf16.msra.mxu0 %v1303
        %1701 = vmatprep.subr.bf16.mxu0 0
        %1702 = vmatpush2.bf16.msra.mxu0 %v1302
        %1703 = vmatprep.subr.bf16.mxu0 0
        %1704 = vmatpush2.bf16.msra.mxu0 %v1301
        %1705 = vmatprep.subr.bf16.mxu0 0
        %1706 = vmatpush2.bf16.msra.mxu0 %v1300
        %1707 = vmatprep.subr.bf16.mxu0 0
        %1708 = vmatpush2.bf16.msra.mxu0 %v1299
        %1709 = vmatprep.mubr.bf16.mxu0 %v880
        %1710 = vmatmul.mubr.bf16.gmra.mxu0 %v879
        %v1711 = vpop.f32.mrf.mxu0
        %v1712 = vadd.f32 %v1551, %v1711
        %v1713 = vpop.f32.mrf.mxu0
        %v1714 = vpop.f32.mrf.mxu0
        %v1715 = vadd.f32 %v1554, %v1714
        %v1716 = vpop.f32.mrf.mxu0
        %1717 = vmatprep.mubr.bf16.mxu0 %v886
        %1718 = vmatmul.mubr.bf16.gmra.mxu0 %v885
        %v1719 = vpop.f32.mrf.mxu0
        %v1720 = vadd.f32 %v1559, %v1719
        %v1721 = vpop.f32.mrf.mxu0
        %v1722 = vpop.f32.mrf.mxu0
        %v1723 = vadd.f32 %v1562, %v1722
        %v1724 = vpop.f32.mrf.mxu0
        %1725 = vmatprep.mubr.bf16.mxu0 %v892
        %1726 = vmatmul.mubr.bf16.gmra.mxu0 %v891
        %v1727 = vpop.f32.mrf.mxu0
        %v1728 = vadd.f32 %v1567, %v1727
        %v1729 = vpop.f32.mrf.mxu0
        %v1730 = vpop.f32.mrf.mxu0
        %v1731 = vadd.f32 %v1570, %v1730
        %v1732 = vpop.f32.mrf.mxu0
        %1733 = vmatprep.mubr.bf16.mxu0 %v898
        %1734 = vmatmul.mubr.bf16.gmra.mxu0 %v897
        %v1735 = vpop.f32.mrf.mxu0
        %v1736 = vadd.f32 %v1575, %v1735
        %v1737 = vpop.f32.mrf.mxu0
        %v1738 = vpop.f32.mrf.mxu0
        %v1739 = vadd.f32 %v1578, %v1738
        %v1740 = vpop.f32.mrf.mxu0
        %1741 = vmatprep.mubr.bf16.mxu0 %v904
        %1742 = vmatmul.mubr.bf16.gmra.mxu0 %v903
        %v1743 = vpop.f32.mrf.mxu0
        %v1744 = vadd.f32 %v1583, %v1743
        %v1745 = vpop.f32.mrf.mxu0
        %v1746 = vpop.f32.mrf.mxu0
        %v1747 = vadd.f32 %v1586, %v1746
        %v1748 = vpop.f32.mrf.mxu0
        %1749 = vmatprep.mubr.bf16.mxu0 %v910
        %1750 = vmatmul.mubr.bf16.gmra.mxu0 %v909
        %v1751 = vpop.f32.mrf.mxu0
        %v1752 = vadd.f32 %v1591, %v1751
        %v1753 = vpop.f32.mrf.mxu0
        %v1754 = vpop.f32.mrf.mxu0
        %v1755 = vadd.f32 %v1594, %v1754
        %v1756 = vpop.f32.mrf.mxu0
        %1757 = vmatprep.mubr.bf16.mxu0 %v916
        %1758 = vmatmul.mubr.bf16.gmra.mxu0 %v915
        %v1759 = vpop.f32.mrf.mxu0
        %v1760 = vadd.f32 %v1599, %v1759
        %v1761 = vpop.f32.mrf.mxu0
        %v1762 = vpop.f32.mrf.mxu0
        %v1763 = vadd.f32 %v1602, %v1762
        %v1764 = vpop.f32.mrf.mxu0
        %1765 = vmatprep.mubr.bf16.mxu0 %v922
        %1766 = vmatmul.mubr.bf16.gmra.mxu0 %v921
        %v1767 = vpop.f32.mrf.mxu0
        %v1768 = vadd.f32 %v1607, %v1767
        %v1769 = vpop.f32.mrf.mxu0
        %v1770 = vpop.f32.mrf.mxu0
        %v1771 = vadd.f32 %v1610, %v1770
        %v1772 = vpop.f32.mrf.mxu0
        %1773 = vmatprep.mubr.bf16.mxu0 %v928
        %1774 = vmatmul.mubr.bf16.gmra.mxu0 %v927
        %v1775 = vpop.f32.mrf.mxu0
        %v1776 = vadd.f32 %v1615, %v1775
        %v1777 = vpop.f32.mrf.mxu0
        %v1778 = vpop.f32.mrf.mxu0
        %v1779 = vadd.f32 %v1618, %v1778
        %v1780 = vpop.f32.mrf.mxu0
        %1781 = vmatprep.mubr.bf16.mxu0 %v934
        %1782 = vmatmul.mubr.bf16.gmra.mxu0 %v933
        %v1783 = vpop.f32.mrf.mxu0
        %v1784 = vadd.f32 %v1623, %v1783
        %v1785 = vpop.f32.mrf.mxu0
        %v1786 = vpop.f32.mrf.mxu0
        %v1787 = vadd.f32 %v1626, %v1786
        %v1788 = vpop.f32.mrf.mxu0
        %1789 = vmatprep.mubr.bf16.mxu0 %v940
        %1790 = vmatmul.mubr.bf16.gmra.mxu0 %v939
        %v1791 = vpop.f32.mrf.mxu0
        %v1792 = vadd.f32 %v1631, %v1791
        %v1793 = vpop.f32.mrf.mxu0
        %v1794 = vpop.f32.mrf.mxu0
        %v1795 = vadd.f32 %v1634, %v1794
        %v1796 = vpop.f32.mrf.mxu0
        %1797 = vmatprep.mubr.bf16.mxu0 %v946
        %1798 = vmatmul.mubr.bf16.gmra.mxu0 %v945
        %v1799 = vpop.f32.mrf.mxu0
        %v1800 = vadd.f32 %v1639, %v1799
        %v1801 = vpop.f32.mrf.mxu0
        %v1802 = vpop.f32.mrf.mxu0
        %v1803 = vadd.f32 %v1642, %v1802
        %v1804 = vpop.f32.mrf.mxu0
        %1805 = vmatprep.mubr.bf16.mxu0 %v952
        %1806 = vmatmul.mubr.bf16.gmra.mxu0 %v951
        %v1807 = vpop.f32.mrf.mxu0
        %v1808 = vadd.f32 %v1647, %v1807
        %v1809 = vpop.f32.mrf.mxu0
        %v1810 = vpop.f32.mrf.mxu0
        %v1811 = vadd.f32 %v1650, %v1810
        %v1812 = vpop.f32.mrf.mxu0
        %1813 = vmatprep.mubr.bf16.mxu0 %v958
        %1814 = vmatmul.mubr.bf16.gmra.mxu0 %v957
        %v1815 = vpop.f32.mrf.mxu0
        %v1816 = vadd.f32 %v1655, %v1815
        %v1817 = vpop.f32.mrf.mxu0
        %v1818 = vpop.f32.mrf.mxu0
        %v1819 = vadd.f32 %v1658, %v1818
        %v1820 = vpop.f32.mrf.mxu0
        %1821 = vmatprep.mubr.bf16.mxu0 %v964
        %1822 = vmatmul.mubr.bf16.gmra.mxu0 %v963
        %v1823 = vpop.f32.mrf.mxu0
        %v1824 = vadd.f32 %v1663, %v1823
        %v1825 = vpop.f32.mrf.mxu0
        %v1826 = vpop.f32.mrf.mxu0
        %v1827 = vadd.f32 %v1666, %v1826
        %v1828 = vpop.f32.mrf.mxu0
        %1829 = vmatprep.mubr.bf16.mxu0 %v970
        %1830 = vmatmul.mubr.bf16.gmra.mxu0 %v969
        %v1831 = vpop.f32.mrf.mxu0
        %v1832 = vadd.f32 %v1671, %v1831
        %v1833 = vpop.f32.mrf.mxu0
        %v1834 = vpop.f32.mrf.mxu0
        %v1835 = vadd.f32 %v1674, %v1834
        %v1836 = vpop.f32.mrf.mxu0
        %1837 = vdwg.mxu0
        %1838 = vmatprep.subr.bf16.mxu0 0
        %1839 = vmatpush1.bf16.msra.mxu0 %v1266
        %1840 = vmatprep.subr.bf16.mxu0 0
        %1841 = vmatpush1.bf16.msra.mxu0 %v1265
        %1842 = vmatprep.subr.bf16.mxu0 0
        %1843 = vmatpush1.bf16.msra.mxu0 %v1264
        %1844 = vmatprep.subr.bf16.mxu0 0
        %1845 = vmatpush1.bf16.msra.mxu0 %v1263
        %1846 = vmatprep.subr.bf16.mxu0 0
        %1847 = vmatpush1.bf16.msra.mxu0 %v1262
        %1848 = vmatprep.subr.bf16.mxu0 0
        %1849 = vmatpush1.bf16.msra.mxu0 %v1261
        %1850 = vmatprep.subr.bf16.mxu0 0
        %1851 = vmatpush1.bf16.msra.mxu0 %v1260
        %1852 = vmatprep.subr.bf16.mxu0 0
        %1853 = vmatpush1.bf16.msra.mxu0 %v1259
        %1854 = vmatprep.subr.bf16.mxu0 0
        %1855 = vmatpush2.bf16.msra.mxu0 %v1274
        %1856 = vmatprep.subr.bf16.mxu0 0
        %1857 = vmatpush2.bf16.msra.mxu0 %v1273
        %1858 = vmatprep.subr.bf16.mxu0 0
        %1859 = vmatpush2.bf16.msra.mxu0 %v1272
        %1860 = vmatprep.subr.bf16.mxu0 0
        %1861 = vmatpush2.bf16.msra.mxu0 %v1271
        %1862 = vmatprep.subr.bf16.mxu0 0
        %1863 = vmatpush2.bf16.msra.mxu0 %v1270
        %1864 = vmatprep.subr.bf16.mxu0 0
        %1865 = vmatpush2.bf16.msra.mxu0 %v1269
        %1866 = vmatprep.subr.bf16.mxu0 0
        %1867 = vmatpush2.bf16.msra.mxu0 %v1268
        %1868 = vmatprep.subr.bf16.mxu0 0
        %1869 = vmatpush2.bf16.msra.mxu0 %v1267
        %1870 = vmatprep.mubr.bf16.mxu0 %v396
        %1871 = vmatmul.mubr.bf16.gmra.mxu0 %v395
        %v1872 = vpop.f32.mrf.mxu0
        %v1873 = vadd.f32 %v1712, %v1872
        %v1874 = vpop.f32.mrf.mxu0
        %v1875 = vpop.f32.mrf.mxu0
        %v1876 = vadd.f32 %v1715, %v1875
        %v1877 = vpop.f32.mrf.mxu0
        %1878 = vmatprep.mubr.bf16.mxu0 %v402
        %1879 = vmatmul.mubr.bf16.gmra.mxu0 %v401
        %v1880 = vpop.f32.mrf.mxu0
        %v1881 = vadd.f32 %v1720, %v1880
        %v1882 = vpop.f32.mrf.mxu0
        %v1883 = vpop.f32.mrf.mxu0
        %v1884 = vadd.f32 %v1723, %v1883
        %v1885 = vpop.f32.mrf.mxu0
        %1886 = vmatprep.mubr.bf16.mxu0 %v408
        %1887 = vmatmul.mubr.bf16.gmra.mxu0 %v407
        %v1888 = vpop.f32.mrf.mxu0
        %v1889 = vadd.f32 %v1728, %v1888
        %v1890 = vpop.f32.mrf.mxu0
        %v1891 = vpop.f32.mrf.mxu0
        %v1892 = vadd.f32 %v1731, %v1891
        %v1893 = vpop.f32.mrf.mxu0
        %1894 = vmatprep.mubr.bf16.mxu0 %v414
        %1895 = vmatmul.mubr.bf16.gmra.mxu0 %v413
        %v1896 = vpop.f32.mrf.mxu0
        %v1897 = vadd.f32 %v1736, %v1896
        %v1898 = vpop.f32.mrf.mxu0
        %v1899 = vpop.f32.mrf.mxu0
        %v1900 = vadd.f32 %v1739, %v1899
        %v1901 = vpop.f32.mrf.mxu0
        %1902 = vmatprep.mubr.bf16.mxu0 %v420
        %1903 = vmatmul.mubr.bf16.gmra.mxu0 %v419
        %v1904 = vpop.f32.mrf.mxu0
        %v1905 = vadd.f32 %v1744, %v1904
        %v1906 = vpop.f32.mrf.mxu0
        %v1907 = vpop.f32.mrf.mxu0
        %v1908 = vadd.f32 %v1747, %v1907
        %v1909 = vpop.f32.mrf.mxu0
        %1910 = vmatprep.mubr.bf16.mxu0 %v426
        %1911 = vmatmul.mubr.bf16.gmra.mxu0 %v425
        %v1912 = vpop.f32.mrf.mxu0
        %v1913 = vadd.f32 %v1752, %v1912
        %v1914 = vpop.f32.mrf.mxu0
        %v1915 = vpop.f32.mrf.mxu0
        %v1916 = vadd.f32 %v1755, %v1915
        %v1917 = vpop.f32.mrf.mxu0
        %1918 = vmatprep.mubr.bf16.mxu0 %v432
        %1919 = vmatmul.mubr.bf16.gmra.mxu0 %v431
        %v1920 = vpop.f32.mrf.mxu0
        %v1921 = vadd.f32 %v1760, %v1920
        %v1922 = vpop.f32.mrf.mxu0
        %v1923 = vpop.f32.mrf.mxu0
        %v1924 = vadd.f32 %v1763, %v1923
        %v1925 = vpop.f32.mrf.mxu0
        %1926 = vmatprep.mubr.bf16.mxu0 %v438
        %1927 = vmatmul.mubr.bf16.gmra.mxu0 %v437
        %v1928 = vpop.f32.mrf.mxu0
        %v1929 = vadd.f32 %v1768, %v1928
        %v1930 = vpop.f32.mrf.mxu0
        %v1931 = vpop.f32.mrf.mxu0
        %v1932 = vadd.f32 %v1771, %v1931
        %v1933 = vpop.f32.mrf.mxu0
        %1934 = vmatprep.mubr.bf16.mxu0 %v444
        %1935 = vmatmul.mubr.bf16.gmra.mxu0 %v443
        %v1936 = vpop.f32.mrf.mxu0
        %v1937 = vadd.f32 %v1776, %v1936
        %v1938 = vpop.f32.mrf.mxu0
        %v1939 = vpop.f32.mrf.mxu0
        %v1940 = vadd.f32 %v1779, %v1939
        %v1941 = vpop.f32.mrf.mxu0
        %1942 = vmatprep.mubr.bf16.mxu0 %v450
        %1943 = vmatmul.mubr.bf16.gmra.mxu0 %v449
        %v1944 = vpop.f32.mrf.mxu0
        %v1945 = vadd.f32 %v1784, %v1944
        %v1946 = vpop.f32.mrf.mxu0
        %v1947 = vpop.f32.mrf.mxu0
        %v1948 = vadd.f32 %v1787, %v1947
        %v1949 = vpop.f32.mrf.mxu0
        %1950 = vmatprep.mubr.bf16.mxu0 %v456
        %1951 = vmatmul.mubr.bf16.gmra.mxu0 %v455
        %v1952 = vpop.f32.mrf.mxu0
        %v1953 = vadd.f32 %v1792, %v1952
        %v1954 = vpop.f32.mrf.mxu0
        %v1955 = vpop.f32.mrf.mxu0
        %v1956 = vadd.f32 %v1795, %v1955
        %v1957 = vpop.f32.mrf.mxu0
        %1958 = vmatprep.mubr.bf16.mxu0 %v462
        %1959 = vmatmul.mubr.bf16.gmra.mxu0 %v461
        %v1960 = vpop.f32.mrf.mxu0
        %v1961 = vadd.f32 %v1800, %v1960
        %v1962 = vpop.f32.mrf.mxu0
        %v1963 = vpop.f32.mrf.mxu0
        %v1964 = vadd.f32 %v1803, %v1963
        %v1965 = vpop.f32.mrf.mxu0
        %1966 = vmatprep.mubr.bf16.mxu0 %v468
        %1967 = vmatmul.mubr.bf16.gmra.mxu0 %v467
        %v1968 = vpop.f32.mrf.mxu0
        %v1969 = vadd.f32 %v1808, %v1968
        %v1970 = vpop.f32.mrf.mxu0
        %v1971 = vpop.f32.mrf.mxu0
        %v1972 = vadd.f32 %v1811, %v1971
        %v1973 = vpop.f32.mrf.mxu0
        %1974 = vmatprep.mubr.bf16.mxu0 %v474
        %1975 = vmatmul.mubr.bf16.gmra.mxu0 %v473
        %v1976 = vpop.f32.mrf.mxu0
        %v1977 = vadd.f32 %v1816, %v1976
        %v1978 = vpop.f32.mrf.mxu0
        %v1979 = vpop.f32.mrf.mxu0
        %v1980 = vadd.f32 %v1819, %v1979
        %v1981 = vpop.f32.mrf.mxu0
        %1982 = vmatprep.mubr.bf16.mxu0 %v480
        %1983 = vmatmul.mubr.bf16.gmra.mxu0 %v479
        %v1984 = vpop.f32.mrf.mxu0
        %v1985 = vadd.f32 %v1824, %v1984
        %v1986 = vpop.f32.mrf.mxu0
        %v1987 = vpop.f32.mrf.mxu0
        %v1988 = vadd.f32 %v1827, %v1987
        %v1989 = vpop.f32.mrf.mxu0
        %1990 = vmatprep.mubr.bf16.mxu0 %v486
        %1991 = vmatmul.mubr.bf16.gmra.mxu0 %v485
        %v1992 = vpop.f32.mrf.mxu0
        %v1993 = vadd.f32 %v1832, %v1992
        %v1994 = vpop.f32.mrf.mxu0
        %v1995 = vpop.f32.mrf.mxu0
        %v1996 = vadd.f32 %v1835, %v1995
        %v1997 = vpop.f32.mrf.mxu0
        %1998 = vdwg.mxu0
        %1999 = vmatprep.subr.bf16.mxu0 0
        %2000 = vmatpush1.bf16.msra.mxu0 %v1282
        %2001 = vmatprep.subr.bf16.mxu0 0
        %2002 = vmatpush1.bf16.msra.mxu0 %v1281
        %2003 = vmatprep.subr.bf16.mxu0 0
        %2004 = vmatpush1.bf16.msra.mxu0 %v1280
        %2005 = vmatprep.subr.bf16.mxu0 0
        %2006 = vmatpush1.bf16.msra.mxu0 %v1279
        %2007 = vmatprep.subr.bf16.mxu0 0
        %2008 = vmatpush1.bf16.msra.mxu0 %v1278
        %2009 = vmatprep.subr.bf16.mxu0 0
        %2010 = vmatpush1.bf16.msra.mxu0 %v1277
        %2011 = vmatprep.subr.bf16.mxu0 0
        %2012 = vmatpush1.bf16.msra.mxu0 %v1276
        %2013 = vmatprep.subr.bf16.mxu0 0
        %2014 = vmatpush1.bf16.msra.mxu0 %v1275
        %2015 = vmatprep.subr.bf16.mxu0 0
        %2016 = vmatpush2.bf16.msra.mxu0 %v1290
        %2017 = vmatprep.subr.bf16.mxu0 0
        %2018 = vmatpush2.bf16.msra.mxu0 %v1289
        %2019 = vmatprep.subr.bf16.mxu0 0
        %2020 = vmatpush2.bf16.msra.mxu0 %v1288
        %2021 = vmatprep.subr.bf16.mxu0 0
        %2022 = vmatpush2.bf16.msra.mxu0 %v1287
        %2023 = vmatprep.subr.bf16.mxu0 0
        %2024 = vmatpush2.bf16.msra.mxu0 %v1286
        %2025 = vmatprep.subr.bf16.mxu0 0
        %2026 = vmatpush2.bf16.msra.mxu0 %v1285
        %2027 = vmatprep.subr.bf16.mxu0 0
        %2028 = vmatpush2.bf16.msra.mxu0 %v1284
        %2029 = vmatprep.subr.bf16.mxu0 0
        %2030 = vmatpush2.bf16.msra.mxu0 %v1283
        %2031 = vmatprep.mubr.bf16.mxu0 %v398
        %2032 = vmatmul.mubr.bf16.gmra.mxu0 %v397
        %v2033 = vpop.f32.mrf.mxu0
        %v2034 = vadd.f32 %v1873, %v2033
        %v2035 = vpop.f32.mrf.mxu0
        %v2036 = vpop.f32.mrf.mxu0
        %v2037 = vadd.f32 %v1876, %v2036
        %v2038 = vpop.f32.mrf.mxu0
        %2039 = vmatprep.mubr.bf16.mxu0 %v404
        %2040 = vmatmul.mubr.bf16.gmra.mxu0 %v403
        %v2041 = vpop.f32.mrf.mxu0
        %v2042 = vadd.f32 %v1881, %v2041
        %v2043 = vpop.f32.mrf.mxu0
        %v2044 = vpop.f32.mrf.mxu0
        %v2045 = vadd.f32 %v1884, %v2044
        %v2046 = vpop.f32.mrf.mxu0
        %2047 = vmatprep.mubr.bf16.mxu0 %v410
        %2048 = vmatmul.mubr.bf16.gmra.mxu0 %v409
        %v2049 = vpop.f32.mrf.mxu0
        %v2050 = vadd.f32 %v1889, %v2049
        %v2051 = vpop.f32.mrf.mxu0
        %v2052 = vpop.f32.mrf.mxu0
        %v2053 = vadd.f32 %v1892, %v2052
        %v2054 = vpop.f32.mrf.mxu0
        %2055 = vmatprep.mubr.bf16.mxu0 %v416
        %2056 = vmatmul.mubr.bf16.gmra.mxu0 %v415
        %v2057 = vpop.f32.mrf.mxu0
        %v2058 = vadd.f32 %v1897, %v2057
        %v2059 = vpop.f32.mrf.mxu0
        %v2060 = vpop.f32.mrf.mxu0
        %v2061 = vadd.f32 %v1900, %v2060
        %v2062 = vpop.f32.mrf.mxu0
        %2063 = vmatprep.mubr.bf16.mxu0 %v422
        %2064 = vmatmul.mubr.bf16.gmra.mxu0 %v421
        %v2065 = vpop.f32.mrf.mxu0
        %v2066 = vadd.f32 %v1905, %v2065
        %v2067 = vpop.f32.mrf.mxu0
        %v2068 = vpop.f32.mrf.mxu0
        %v2069 = vadd.f32 %v1908, %v2068
        %v2070 = vpop.f32.mrf.mxu0
        %2071 = vmatprep.mubr.bf16.mxu0 %v428
        %2072 = vmatmul.mubr.bf16.gmra.mxu0 %v427
        %v2073 = vpop.f32.mrf.mxu0
        %v2074 = vadd.f32 %v1913, %v2073
        %v2075 = vpop.f32.mrf.mxu0
        %v2076 = vpop.f32.mrf.mxu0
        %v2077 = vadd.f32 %v1916, %v2076
        %v2078 = vpop.f32.mrf.mxu0
        %2079 = vmatprep.mubr.bf16.mxu0 %v434
        %2080 = vmatmul.mubr.bf16.gmra.mxu0 %v433
        %v2081 = vpop.f32.mrf.mxu0
        %v2082 = vadd.f32 %v1921, %v2081
        %v2083 = vpop.f32.mrf.mxu0
        %v2084 = vpop.f32.mrf.mxu0
        %v2085 = vadd.f32 %v1924, %v2084
        %v2086 = vpop.f32.mrf.mxu0
        %2087 = vmatprep.mubr.bf16.mxu0 %v440
        %2088 = vmatmul.mubr.bf16.gmra.mxu0 %v439
        %v2089 = vpop.f32.mrf.mxu0
        %v2090 = vadd.f32 %v1929, %v2089
        %v2091 = vpop.f32.mrf.mxu0
        %v2092 = vpop.f32.mrf.mxu0
        %v2093 = vadd.f32 %v1932, %v2092
        %v2094 = vpop.f32.mrf.mxu0
        %2095 = vmatprep.mubr.bf16.mxu0 %v446
        %2096 = vmatmul.mubr.bf16.gmra.mxu0 %v445
        %v2097 = vpop.f32.mrf.mxu0
        %v2098 = vadd.f32 %v1937, %v2097
        %v2099 = vpop.f32.mrf.mxu0
        %v2100 = vpop.f32.mrf.mxu0
        %v2101 = vadd.f32 %v1940, %v2100
        %v2102 = vpop.f32.mrf.mxu0
        %2103 = vmatprep.mubr.bf16.mxu0 %v452
        %2104 = vmatmul.mubr.bf16.gmra.mxu0 %v451
        %v2105 = vpop.f32.mrf.mxu0
        %v2106 = vadd.f32 %v1945, %v2105
        %v2107 = vpop.f32.mrf.mxu0
        %v2108 = vpop.f32.mrf.mxu0
        %v2109 = vadd.f32 %v1948, %v2108
        %v2110 = vpop.f32.mrf.mxu0
        %2111 = vmatprep.mubr.bf16.mxu0 %v458
        %2112 = vmatmul.mubr.bf16.gmra.mxu0 %v457
        %v2113 = vpop.f32.mrf.mxu0
        %v2114 = vadd.f32 %v1953, %v2113
        %v2115 = vpop.f32.mrf.mxu0
        %v2116 = vpop.f32.mrf.mxu0
        %v2117 = vadd.f32 %v1956, %v2116
        %v2118 = vpop.f32.mrf.mxu0
        %2119 = vmatprep.mubr.bf16.mxu0 %v464
        %2120 = vmatmul.mubr.bf16.gmra.mxu0 %v463
        %v2121 = vpop.f32.mrf.mxu0
        %v2122 = vadd.f32 %v1961, %v2121
        %v2123 = vpop.f32.mrf.mxu0
        %v2124 = vpop.f32.mrf.mxu0
        %v2125 = vadd.f32 %v1964, %v2124
        %v2126 = vpop.f32.mrf.mxu0
        %2127 = vmatprep.mubr.bf16.mxu0 %v470
        %2128 = vmatmul.mubr.bf16.gmra.mxu0 %v469
        %v2129 = vpop.f32.mrf.mxu0
        %v2130 = vadd.f32 %v1969, %v2129
        %v2131 = vpop.f32.mrf.mxu0
        %v2132 = vpop.f32.mrf.mxu0
        %v2133 = vadd.f32 %v1972, %v2132
        %v2134 = vpop.f32.mrf.mxu0
        %2135 = vmatprep.mubr.bf16.mxu0 %v476
        %2136 = vmatmul.mubr.bf16.gmra.mxu0 %v475
        %v2137 = vpop.f32.mrf.mxu0
        %v2138 = vadd.f32 %v1977, %v2137
        %v2139 = vpop.f32.mrf.mxu0
        %v2140 = vpop.f32.mrf.mxu0
        %v2141 = vadd.f32 %v1980, %v2140
        %v2142 = vpop.f32.mrf.mxu0
        %2143 = vmatprep.mubr.bf16.mxu0 %v482
        %2144 = vmatmul.mubr.bf16.gmra.mxu0 %v481
        %v2145 = vpop.f32.mrf.mxu0
        %v2146 = vadd.f32 %v1985, %v2145
        %v2147 = vpop.f32.mrf.mxu0
        %v2148 = vpop.f32.mrf.mxu0
        %v2149 = vadd.f32 %v1988, %v2148
        %v2150 = vpop.f32.mrf.mxu0
        %2151 = vmatprep.mubr.bf16.mxu0 %v488
        %2152 = vmatmul.mubr.bf16.gmra.mxu0 %v487
        %v2153 = vpop.f32.mrf.mxu0
        %v2154 = vadd.f32 %v1993, %v2153
        %v2155 = vpop.f32.mrf.mxu0
        %v2156 = vpop.f32.mrf.mxu0
        %v2157 = vadd.f32 %v1996, %v2156
        %v2158 = vpop.f32.mrf.mxu0
        %2159 = vdwg.mxu0
        %2160 = vmatprep.subr.bf16.mxu0 0
        %2161 = vmatpush1.bf16.msra.mxu0 %v1298
        %2162 = vmatprep.subr.bf16.mxu0 0
        %2163 = vmatpush1.bf16.msra.mxu0 %v1297
        %2164 = vmatprep.subr.bf16.mxu0 0
        %2165 = vmatpush1.bf16.msra.mxu0 %v1296
        %2166 = vmatprep.subr.bf16.mxu0 0
        %2167 = vmatpush1.bf16.msra.mxu0 %v1295
        %2168 = vmatprep.subr.bf16.mxu0 0
        %2169 = vmatpush1.bf16.msra.mxu0 %v1294
        %2170 = vmatprep.subr.bf16.mxu0 0
        %2171 = vmatpush1.bf16.msra.mxu0 %v1293
        %2172 = vmatprep.subr.bf16.mxu0 0
        %2173 = vmatpush1.bf16.msra.mxu0 %v1292
        %2174 = vmatprep.subr.bf16.mxu0 0
        %2175 = vmatpush1.bf16.msra.mxu0 %v1291
        %2176 = vmatprep.subr.bf16.mxu0 0
        %2177 = vmatpush2.bf16.msra.mxu0 %v1306
        %2178 = vmatprep.subr.bf16.mxu0 0
        %2179 = vmatpush2.bf16.msra.mxu0 %v1305
        %2180 = vmatprep.subr.bf16.mxu0 0
        %2181 = vmatpush2.bf16.msra.mxu0 %v1304
        %2182 = vmatprep.subr.bf16.mxu0 0
        %2183 = vmatpush2.bf16.msra.mxu0 %v1303
        %2184 = vmatprep.subr.bf16.mxu0 0
        %2185 = vmatpush2.bf16.msra.mxu0 %v1302
        %2186 = vmatprep.subr.bf16.mxu0 0
        %2187 = vmatpush2.bf16.msra.mxu0 %v1301
        %2188 = vmatprep.subr.bf16.mxu0 0
        %2189 = vmatpush2.bf16.msra.mxu0 %v1300
        %2190 = vmatprep.subr.bf16.mxu0 0
        %2191 = vmatpush2.bf16.msra.mxu0 %v1299
        %2192 = vmatprep.mubr.bf16.mxu0 %v400
        %2193 = vmatmul.mubr.bf16.gmra.mxu0 %v399
        %v2194 = vpop.f32.mrf.mxu0
        %v2195 = vadd.f32 %v2034, %v2194
        %v2196 = vpop.f32.mrf.mxu0
        %v2197 = vpop.f32.mrf.mxu0
        %v2198 = vadd.f32 %v2037, %v2197
        %v2199 = vpop.f32.mrf.mxu0
        %2200 = vmatprep.mubr.bf16.mxu0 %v406
        %2201 = vmatmul.mubr.bf16.gmra.mxu0 %v405
        %v2202 = vpop.f32.mrf.mxu0
        %v2203 = vadd.f32 %v2042, %v2202
        %v2204 = vpop.f32.mrf.mxu0
        %v2205 = vpop.f32.mrf.mxu0
        %v2206 = vadd.f32 %v2045, %v2205
        %v2207 = vpop.f32.mrf.mxu0
        %2208 = vmatprep.mubr.bf16.mxu0 %v412
        %2209 = vmatmul.mubr.bf16.gmra.mxu0 %v411
        %v2210 = vpop.f32.mrf.mxu0
        %v2211 = vadd.f32 %v2050, %v2210
        %v2212 = vpop.f32.mrf.mxu0
        %v2213 = vpop.f32.mrf.mxu0
        %v2214 = vadd.f32 %v2053, %v2213
        %v2215 = vpop.f32.mrf.mxu0
        %2216 = vmatprep.mubr.bf16.mxu0 %v418
        %2217 = vmatmul.mubr.bf16.gmra.mxu0 %v417
        %v2218 = vpop.f32.mrf.mxu0
        %v2219 = vadd.f32 %v2058, %v2218
        %v2220 = vpop.f32.mrf.mxu0
        %v2221 = vpop.f32.mrf.mxu0
        %v2222 = vadd.f32 %v2061, %v2221
        %v2223 = vpop.f32.mrf.mxu0
        %2224 = vmatprep.mubr.bf16.mxu0 %v424
        %2225 = vmatmul.mubr.bf16.gmra.mxu0 %v423
        %v2226 = vpop.f32.mrf.mxu0
        %v2227 = vadd.f32 %v2066, %v2226
        %v2228 = vpop.f32.mrf.mxu0
        %v2229 = vpop.f32.mrf.mxu0
        %v2230 = vadd.f32 %v2069, %v2229
        %v2231 = vpop.f32.mrf.mxu0
        %2232 = vmatprep.mubr.bf16.mxu0 %v430
        %2233 = vmatmul.mubr.bf16.gmra.mxu0 %v429
        %v2234 = vpop.f32.mrf.mxu0
        %v2235 = vadd.f32 %v2074, %v2234
        %v2236 = vpop.f32.mrf.mxu0
        %v2237 = vpop.f32.mrf.mxu0
        %v2238 = vadd.f32 %v2077, %v2237
        %v2239 = vpop.f32.mrf.mxu0
        %2240 = vmatprep.mubr.bf16.mxu0 %v436
        %2241 = vmatmul.mubr.bf16.gmra.mxu0 %v435
        %v2242 = vpop.f32.mrf.mxu0
        %v2243 = vadd.f32 %v2082, %v2242
        %v2244 = vpop.f32.mrf.mxu0
        %v2245 = vpop.f32.mrf.mxu0
        %v2246 = vadd.f32 %v2085, %v2245
        %v2247 = vpop.f32.mrf.mxu0
        %2248 = vmatprep.mubr.bf16.mxu0 %v442
        %2249 = vmatmul.mubr.bf16.gmra.mxu0 %v441
        %v2250 = vpop.f32.mrf.mxu0
        %v2251 = vadd.f32 %v2090, %v2250
        %v2252 = vpop.f32.mrf.mxu0
        %v2253 = vpop.f32.mrf.mxu0
        %v2254 = vadd.f32 %v2093, %v2253
        %v2255 = vpop.f32.mrf.mxu0
        %2256 = vmatprep.mubr.bf16.mxu0 %v448
        %2257 = vmatmul.mubr.bf16.gmra.mxu0 %v447
        %v2258 = vpop.f32.mrf.mxu0
        %v2259 = vadd.f32 %v2098, %v2258
        %v2260 = vpop.f32.mrf.mxu0
        %v2261 = vpop.f32.mrf.mxu0
        %v2262 = vadd.f32 %v2101, %v2261
        %v2263 = vpop.f32.mrf.mxu0
        %2264 = vmatprep.mubr.bf16.mxu0 %v454
        %2265 = vmatmul.mubr.bf16.gmra.mxu0 %v453
        %v2266 = vpop.f32.mrf.mxu0
        %v2267 = vadd.f32 %v2106, %v2266
        %v2268 = vpop.f32.mrf.mxu0
        %v2269 = vpop.f32.mrf.mxu0
        %v2270 = vadd.f32 %v2109, %v2269
        %v2271 = vpop.f32.mrf.mxu0
        %2272 = vmatprep.mubr.bf16.mxu0 %v460
        %2273 = vmatmul.mubr.bf16.gmra.mxu0 %v459
        %v2274 = vpop.f32.mrf.mxu0
        %v2275 = vadd.f32 %v2114, %v2274
        %v2276 = vpop.f32.mrf.mxu0
        %v2277 = vpop.f32.mrf.mxu0
        %v2278 = vadd.f32 %v2117, %v2277
        %v2279 = vpop.f32.mrf.mxu0
        %2280 = vmatprep.mubr.bf16.mxu0 %v466
        %2281 = vmatmul.mubr.bf16.gmra.mxu0 %v465
        %v2282 = vpop.f32.mrf.mxu0
        %v2283 = vadd.f32 %v2122, %v2282
        %v2284 = vpop.f32.mrf.mxu0
        %v2285 = vpop.f32.mrf.mxu0
        %v2286 = vadd.f32 %v2125, %v2285
        %v2287 = vpop.f32.mrf.mxu0
        %2288 = vmatprep.mubr.bf16.mxu0 %v472
        %2289 = vmatmul.mubr.bf16.gmra.mxu0 %v471
        %v2290 = vpop.f32.mrf.mxu0
        %v2291 = vadd.f32 %v2130, %v2290
        %v2292 = vpop.f32.mrf.mxu0
        %v2293 = vpop.f32.mrf.mxu0
        %v2294 = vadd.f32 %v2133, %v2293
        %v2295 = vpop.f32.mrf.mxu0
        %2296 = vmatprep.mubr.bf16.mxu0 %v478
        %2297 = vmatmul.mubr.bf16.gmra.mxu0 %v477
        %v2298 = vpop.f32.mrf.mxu0
        %v2299 = vadd.f32 %v2138, %v2298
        %v2300 = vpop.f32.mrf.mxu0
        %v2301 = vpop.f32.mrf.mxu0
        %v2302 = vadd.f32 %v2141, %v2301
        %v2303 = vpop.f32.mrf.mxu0
        %2304 = vmatprep.mubr.bf16.mxu0 %v484
        %2305 = vmatmul.mubr.bf16.gmra.mxu0 %v483
        %v2306 = vpop.f32.mrf.mxu0
        %v2307 = vadd.f32 %v2146, %v2306
        %v2308 = vpop.f32.mrf.mxu0
        %v2309 = vpop.f32.mrf.mxu0
        %v2310 = vadd.f32 %v2149, %v2309
        %v2311 = vpop.f32.mrf.mxu0
        %2312 = vmatprep.mubr.bf16.mxu0 %v490
        %2313 = vmatmul.mubr.bf16.gmra.mxu0 %v489
        %v2314 = vpop.f32.mrf.mxu0
        %v2315 = vadd.f32 %v2154, %v2314
        %v2316 = vpop.f32.mrf.mxu0
        %v2317 = vpop.f32.mrf.mxu0
        %v2318 = vadd.f32 %v2157, %v2317
        %v2319 = vpop.f32.mrf.mxu0
        %2320 = vdwg.mxu0
        %v2321 = vld [vmem:[%s2] sm:$0xf]
        %v2322 = vld [vmem:[%s2 + $0x4] sm:$0xf]
        %v2323 = vld [vmem:[%s2 + $0x8] sm:$0xf]
        %v2324 = vld [vmem:[%s2 + $0xc] sm:$0xf]
        %v2325 = vld [vmem:[%s2 + $0x10] sm:$0xf]
        %v2326 = vld [vmem:[%s2 + $0x14] sm:$0xf]
        %v2327 = vld [vmem:[%s2 + $0x18] sm:$0xf]
        %v2328 = vld [vmem:[%s2 + $0x1c] sm:$0xf]
        %v2329 = vld [vmem:[%s2 + $0x20] sm:$0xf]
        %v2330 = vld [vmem:[%s2 + $0x24] sm:$0xf]
        %v2331 = vld [vmem:[%s2 + $0x28] sm:$0xf]
        %v2332 = vld [vmem:[%s2 + $0x2c] sm:$0xf]
        %v2333 = vld [vmem:[%s2 + $0x30] sm:$0xf]
        %v2334 = vld [vmem:[%s2 + $0x34] sm:$0xf]
        %v2335 = vld [vmem:[%s2 + $0x38] sm:$0xf]
        %v2336 = vld [vmem:[%s2 + $0x3c] sm:$0xf]
        %v2337 = vld [vmem:[%s2 + $0x40] sm:$0xf]
        %v2338 = vld [vmem:[%s2 + $0x44] sm:$0xf]
        %v2339 = vld [vmem:[%s2 + $0x48] sm:$0xf]
        %v2340 = vld [vmem:[%s2 + $0x4c] sm:$0xf]
        %v2341 = vld [vmem:[%s2 + $0x50] sm:$0xf]
        %v2342 = vld [vmem:[%s2 + $0x54] sm:$0xf]
        %v2343 = vld [vmem:[%s2 + $0x58] sm:$0xf]
        %v2344 = vld [vmem:[%s2 + $0x5c] sm:$0xf]
        %v2345 = vld [vmem:[%s2 + $0x60] sm:$0xf]
        %v2346 = vld [vmem:[%s2 + $0x64] sm:$0xf]
        %v2347 = vld [vmem:[%s2 + $0x68] sm:$0xf]
        %v2348 = vld [vmem:[%s2 + $0x6c] sm:$0xf]
        %v2349 = vld [vmem:[%s2 + $0x70] sm:$0xf]
        %v2350 = vld [vmem:[%s2 + $0x74] sm:$0xf]
        %v2351 = vld [vmem:[%s2 + $0x78] sm:$0xf]
        %v2352 = vld [vmem:[%s2 + $0x7c] sm:$0xf]
        %v2353 = vld [vmem:[%s2 + $0x80] sm:$0xf]
        %v2354 = vld [vmem:[%s2 + $0x84] sm:$0xf]
        %v2355 = vld [vmem:[%s2 + $0x88] sm:$0xf]
        %v2356 = vld [vmem:[%s2 + $0x8c] sm:$0xf]
        %v2357 = vld [vmem:[%s2 + $0x90] sm:$0xf]
        %v2358 = vld [vmem:[%s2 + $0x94] sm:$0xf]
        %v2359 = vld [vmem:[%s2 + $0x98] sm:$0xf]
        %v2360 = vld [vmem:[%s2 + $0x9c] sm:$0xf]
        %v2361 = vld [vmem:[%s2 + $0xa0] sm:$0xf]
        %v2362 = vld [vmem:[%s2 + $0xa4] sm:$0xf]
        %v2363 = vld [vmem:[%s2 + $0xa8] sm:$0xf]
        %v2364 = vld [vmem:[%s2 + $0xac] sm:$0xf]
        %v2365 = vld [vmem:[%s2 + $0xb0] sm:$0xf]
        %v2366 = vld [vmem:[%s2 + $0xb4] sm:$0xf]
        %v2367 = vld [vmem:[%s2 + $0xb8] sm:$0xf]
        %v2368 = vld [vmem:[%s2 + $0xbc] sm:$0xf]
        %v2369 = vld [vmem:[%s2 + $0xc0] sm:$0xf]
        %v2370 = vld [vmem:[%s2 + $0xc4] sm:$0xf]
        %v2371 = vld [vmem:[%s2 + $0xc8] sm:$0xf]
        %v2372 = vld [vmem:[%s2 + $0xcc] sm:$0xf]
        %v2373 = vld [vmem:[%s2 + $0xd0] sm:$0xf]
        %v2374 = vld [vmem:[%s2 + $0xd4] sm:$0xf]
        %v2375 = vld [vmem:[%s2 + $0xd8] sm:$0xf]
        %v2376 = vld [vmem:[%s2 + $0xdc] sm:$0xf]
        %v2377 = vld [vmem:[%s2 + $0xe0] sm:$0xf]
        %v2378 = vld [vmem:[%s2 + $0xe4] sm:$0xf]
        %v2379 = vld [vmem:[%s2 + $0xe8] sm:$0xf]
        %v2380 = vld [vmem:[%s2 + $0xec] sm:$0xf]
        %v2381 = vld [vmem:[%s2 + $0xf0] sm:$0xf]
        %v2382 = vld [vmem:[%s2 + $0xf4] sm:$0xf]
        %v2383 = vld [vmem:[%s2 + $0xf8] sm:$0xf]
        %v2384 = vld [vmem:[%s2 + $0xfc] sm:$0xf]
        %v2385 = vld [vmem:[%s2 + $0x100] sm:$0xf]
        %v2386 = vld [vmem:[%s2 + $0x104] sm:$0xf]
        %v2387 = vld [vmem:[%s2 + $0x108] sm:$0xf]
        %v2388 = vld [vmem:[%s2 + $0x10c] sm:$0xf]
        %v2389 = vld [vmem:[%s2 + $0x110] sm:$0xf]
        %v2390 = vld [vmem:[%s2 + $0x114] sm:$0xf]
        %v2391 = vld [vmem:[%s2 + $0x118] sm:$0xf]
        %v2392 = vld [vmem:[%s2 + $0x11c] sm:$0xf]
        %v2393 = vld [vmem:[%s2 + $0x120] sm:$0xf]
        %v2394 = vld [vmem:[%s2 + $0x124] sm:$0xf]
        %v2395 = vld [vmem:[%s2 + $0x128] sm:$0xf]
        %v2396 = vld [vmem:[%s2 + $0x12c] sm:$0xf]
        %v2397 = vld [vmem:[%s2 + $0x130] sm:$0xf]
        %v2398 = vld [vmem:[%s2 + $0x134] sm:$0xf]
        %v2399 = vld [vmem:[%s2 + $0x138] sm:$0xf]
        %v2400 = vld [vmem:[%s2 + $0x13c] sm:$0xf]
        %v2401 = vld [vmem:[%s2 + $0x140] sm:$0xf]
        %v2402 = vld [vmem:[%s2 + $0x144] sm:$0xf]
        %v2403 = vld [vmem:[%s2 + $0x148] sm:$0xf]
        %v2404 = vld [vmem:[%s2 + $0x14c] sm:$0xf]
        %v2405 = vld [vmem:[%s2 + $0x150] sm:$0xf]
        %v2406 = vld [vmem:[%s2 + $0x154] sm:$0xf]
        %v2407 = vld [vmem:[%s2 + $0x158] sm:$0xf]
        %v2408 = vld [vmem:[%s2 + $0x15c] sm:$0xf]
        %v2409 = vld [vmem:[%s2 + $0x160] sm:$0xf]
        %v2410 = vld [vmem:[%s2 + $0x164] sm:$0xf]
        %v2411 = vld [vmem:[%s2 + $0x168] sm:$0xf]
        %v2412 = vld [vmem:[%s2 + $0x16c] sm:$0xf]
        %v2413 = vld [vmem:[%s2 + $0x170] sm:$0xf]
        %v2414 = vld [vmem:[%s2 + $0x174] sm:$0xf]
        %v2415 = vld [vmem:[%s2 + $0x178] sm:$0xf]
        %v2416 = vld [vmem:[%s2 + $0x17c] sm:$0xf]
        %v2513 = vunpack.c.l.b16 %v2321
        %v2514 = vunpack.c.l.b16 %v2322
        %v2515 = vunpack.c.l.b16 %v2323
        %v2516 = vunpack.c.l.b16 %v2324
        %v2517 = vunpack.c.l.b16 %v2325
        %v2518 = vunpack.c.l.b16 %v2326
        %v2519 = vunpack.c.l.b16 %v2327
        %v2520 = vunpack.c.l.b16 %v2328
        %v2521 = vunpack.c.l.b16 %v2329
        %v2522 = vunpack.c.l.b16 %v2330
        %v2523 = vunpack.c.l.b16 %v2331
        %v2524 = vunpack.c.l.b16 %v2332
        %v2525 = vunpack.c.l.b16 %v2333
        %v2526 = vunpack.c.l.b16 %v2334
        %v2527 = vunpack.c.l.b16 %v2335
        %v2528 = vunpack.c.l.b16 %v2336
        %v2529 = vunpack.c.l.b16 %v2337
        %v2530 = vunpack.c.l.b16 %v2338
        %v2531 = vunpack.c.l.b16 %v2339
        %v2532 = vunpack.c.l.b16 %v2340
        %v2533 = vunpack.c.l.b16 %v2341
        %v2534 = vunpack.c.l.b16 %v2342
        %v2535 = vunpack.c.l.b16 %v2343
        %v2536 = vunpack.c.l.b16 %v2344
        %v2537 = vunpack.c.l.b16 %v2345
        %v2538 = vunpack.c.l.b16 %v2346
        %v2539 = vunpack.c.l.b16 %v2347
        %v2540 = vunpack.c.l.b16 %v2348
        %v2541 = vunpack.c.l.b16 %v2349
        %v2542 = vunpack.c.l.b16 %v2350
        %v2543 = vunpack.c.l.b16 %v2351
        %v2544 = vunpack.c.l.b16 %v2352
        %v2545 = vunpack.c.l.b16 %v2353
        %v2546 = vunpack.c.l.b16 %v2354
        %v2547 = vunpack.c.l.b16 %v2355
        %v2548 = vunpack.c.l.b16 %v2356
        %v2549 = vunpack.c.l.b16 %v2357
        %v2550 = vunpack.c.l.b16 %v2358
        %v2551 = vunpack.c.l.b16 %v2359
        %v2552 = vunpack.c.l.b16 %v2360
        %v2553 = vunpack.c.l.b16 %v2361
        %v2554 = vunpack.c.l.b16 %v2362
        %v2555 = vunpack.c.l.b16 %v2363
        %v2556 = vunpack.c.l.b16 %v2364
        %v2557 = vunpack.c.l.b16 %v2365
        %v2558 = vunpack.c.l.b16 %v2366
        %v2559 = vunpack.c.l.b16 %v2367
        %v2560 = vunpack.c.l.b16 %v2368
        %v2561 = vunpack.c.l.b16 %v2369
        %v2562 = vunpack.c.l.b16 %v2370
        %v2563 = vunpack.c.l.b16 %v2371
        %v2564 = vunpack.c.l.b16 %v2372
        %v2565 = vunpack.c.l.b16 %v2373
        %v2566 = vunpack.c.l.b16 %v2374
        %v2567 = vunpack.c.l.b16 %v2375
        %v2568 = vunpack.c.l.b16 %v2376
        %v2569 = vunpack.c.l.b16 %v2377
        %v2570 = vunpack.c.l.b16 %v2378
        %v2571 = vunpack.c.l.b16 %v2379
        %v2572 = vunpack.c.l.b16 %v2380
        %v2573 = vunpack.c.l.b16 %v2381
        %v2574 = vunpack.c.l.b16 %v2382
        %v2575 = vunpack.c.l.b16 %v2383
        %v2576 = vunpack.c.l.b16 %v2384
        %v2577 = vunpack.c.l.b16 %v2385
        %v2578 = vunpack.c.l.b16 %v2386
        %v2579 = vunpack.c.l.b16 %v2387
        %v2580 = vunpack.c.l.b16 %v2388
        %v2581 = vunpack.c.l.b16 %v2389
        %v2582 = vunpack.c.l.b16 %v2390
        %v2583 = vunpack.c.l.b16 %v2391
        %v2584 = vunpack.c.l.b16 %v2392
        %v2585 = vunpack.c.l.b16 %v2393
        %v2586 = vunpack.c.l.b16 %v2394
        %v2587 = vunpack.c.l.b16 %v2395
        %v2588 = vunpack.c.l.b16 %v2396
        %v2589 = vunpack.c.l.b16 %v2397
        %v2590 = vunpack.c.l.b16 %v2398
        %v2591 = vunpack.c.l.b16 %v2399
        %v2592 = vunpack.c.l.b16 %v2400
        %v2593 = vunpack.c.l.b16 %v2401
        %v2594 = vunpack.c.l.b16 %v2402
        %v2595 = vunpack.c.l.b16 %v2403
        %v2596 = vunpack.c.l.b16 %v2404
        %v2597 = vunpack.c.l.b16 %v2405
        %v2598 = vunpack.c.l.b16 %v2406
        %v2599 = vunpack.c.l.b16 %v2407
        %v2600 = vunpack.c.l.b16 %v2408
        %v2601 = vunpack.c.l.b16 %v2409
        %v2602 = vunpack.c.l.b16 %v2410
        %v2603 = vunpack.c.l.b16 %v2411
        %v2604 = vunpack.c.l.b16 %v2412
        %v2605 = vunpack.c.l.b16 %v2413
        %v2606 = vunpack.c.l.b16 %v2414
        %v2607 = vunpack.c.l.b16 %v2415
        %v2608 = vunpack.c.l.b16 %v2416
        %v2609 = vpack.c.b16 %v2514, %v2513
        %v2610 = vpack.c.b16 %v2516, %v2515
        %v2611 = vpack.c.b16 %v2518, %v2517
        %v2612 = vpack.c.b16 %v2520, %v2519
        %v2613 = vpack.c.b16 %v2522, %v2521
        %v2614 = vpack.c.b16 %v2524, %v2523
        %v2615 = vpack.c.b16 %v2526, %v2525
        %v2616 = vpack.c.b16 %v2528, %v2527
        %v2617 = vpack.c.b16 %v2530, %v2529
        %v2618 = vpack.c.b16 %v2532, %v2531
        %v2619 = vpack.c.b16 %v2534, %v2533
        %v2620 = vpack.c.b16 %v2536, %v2535
        %v2621 = vpack.c.b16 %v2538, %v2537
        %v2622 = vpack.c.b16 %v2540, %v2539
        %v2623 = vpack.c.b16 %v2542, %v2541
        %v2624 = vpack.c.b16 %v2544, %v2543
        %v2625 = vpack.c.b16 %v2546, %v2545
        %v2626 = vpack.c.b16 %v2548, %v2547
        %v2627 = vpack.c.b16 %v2550, %v2549
        %v2628 = vpack.c.b16 %v2552, %v2551
        %v2629 = vpack.c.b16 %v2554, %v2553
        %v2630 = vpack.c.b16 %v2556, %v2555
        %v2631 = vpack.c.b16 %v2558, %v2557
        %v2632 = vpack.c.b16 %v2560, %v2559
        %v2633 = vpack.c.b16 %v2562, %v2561
        %v2634 = vpack.c.b16 %v2564, %v2563
        %v2635 = vpack.c.b16 %v2566, %v2565
        %v2636 = vpack.c.b16 %v2568, %v2567
        %v2637 = vpack.c.b16 %v2570, %v2569
        %v2638 = vpack.c.b16 %v2572, %v2571
        %v2639 = vpack.c.b16 %v2574, %v2573
        %v2640 = vpack.c.b16 %v2576, %v2575
        %v2641 = vpack.c.b16 %v2578, %v2577
        %v2642 = vpack.c.b16 %v2580, %v2579
        %v2643 = vpack.c.b16 %v2582, %v2581
        %v2644 = vpack.c.b16 %v2584, %v2583
        %v2645 = vpack.c.b16 %v2586, %v2585
        %v2646 = vpack.c.b16 %v2588, %v2587
        %v2647 = vpack.c.b16 %v2590, %v2589
        %v2648 = vpack.c.b16 %v2592, %v2591
        %v2649 = vpack.c.b16 %v2594, %v2593
        %v2650 = vpack.c.b16 %v2596, %v2595
        %v2651 = vpack.c.b16 %v2598, %v2597
        %v2652 = vpack.c.b16 %v2600, %v2599
        %v2653 = vpack.c.b16 %v2602, %v2601
        %v2654 = vpack.c.b16 %v2604, %v2603
        %v2655 = vpack.c.b16 %v2606, %v2605
        %v2656 = vpack.c.b16 %v2608, %v2607
        %2705 = vmatprep.subr.bf16.mxu0 0
        %2706 = vmatpush1.bf16.msra.mxu0 %v2616
        %2707 = vmatprep.subr.bf16.mxu0 0
        %2708 = vmatpush1.bf16.msra.mxu0 %v2615
        %2709 = vmatprep.subr.bf16.mxu0 0
        %2710 = vmatpush1.bf16.msra.mxu0 %v2614
        %2711 = vmatprep.subr.bf16.mxu0 0
        %2712 = vmatpush1.bf16.msra.mxu0 %v2613
        %2713 = vmatprep.subr.bf16.mxu0 0
        %2714 = vmatpush1.bf16.msra.mxu0 %v2612
        %2715 = vmatprep.subr.bf16.mxu0 0
        %2716 = vmatpush1.bf16.msra.mxu0 %v2611
        %2717 = vmatprep.subr.bf16.mxu0 0
        %2718 = vmatpush1.bf16.msra.mxu0 %v2610
        %2719 = vmatprep.subr.bf16.mxu0 0
        %2720 = vmatpush1.bf16.msra.mxu0 %v2609
        %2721 = vmatprep.subr.bf16.mxu0 0
        %2722 = vmatpush2.bf16.msra.mxu0 %v2624
        %2723 = vmatprep.subr.bf16.mxu0 0
        %2724 = vmatpush2.bf16.msra.mxu0 %v2623
        %2725 = vmatprep.subr.bf16.mxu0 0
        %2726 = vmatpush2.bf16.msra.mxu0 %v2622
        %2727 = vmatprep.subr.bf16.mxu0 0
        %2728 = vmatpush2.bf16.msra.mxu0 %v2621
        %2729 = vmatprep.subr.bf16.mxu0 0
        %2730 = vmatpush2.bf16.msra.mxu0 %v2620
        %2731 = vmatprep.subr.bf16.mxu0 0
        %2732 = vmatpush2.bf16.msra.mxu0 %v2619
        %2733 = vmatprep.subr.bf16.mxu0 0
        %2734 = vmatpush2.bf16.msra.mxu0 %v2618
        %2735 = vmatprep.subr.bf16.mxu0 0
        %2736 = vmatpush2.bf16.msra.mxu0 %v2617
        %2737 = vmatprep.mubr.bf16.mxu0 %v396
        %2738 = vmatmul.mubr.bf16.gmra.mxu0 %v395
        %v2739 = vpop.f32.mrf.mxu0
        %v2740 = vadd.f32 0.0, %v2739
        %v2741 = vpop.f32.mrf.mxu0
        %v2742 = vpop.f32.mrf.mxu0
        %v2743 = vadd.f32 0.0, %v2742
        %v2744 = vpop.f32.mrf.mxu0
        %2745 = vmatprep.mubr.bf16.mxu0 %v402
        %2746 = vmatmul.mubr.bf16.gmra.mxu0 %v401
        %v2747 = vpop.f32.mrf.mxu0
        %v2748 = vadd.f32 0.0, %v2747
        %v2749 = vpop.f32.mrf.mxu0
        %v2750 = vpop.f32.mrf.mxu0
        %v2751 = vadd.f32 0.0, %v2750
        %v2752 = vpop.f32.mrf.mxu0
        %2753 = vmatprep.mubr.bf16.mxu0 %v408
        %2754 = vmatmul.mubr.bf16.gmra.mxu0 %v407
        %v2755 = vpop.f32.mrf.mxu0
        %v2756 = vadd.f32 0.0, %v2755
        %v2757 = vpop.f32.mrf.mxu0
        %v2758 = vpop.f32.mrf.mxu0
        %v2759 = vadd.f32 0.0, %v2758
        %v2760 = vpop.f32.mrf.mxu0
        %2761 = vmatprep.mubr.bf16.mxu0 %v414
        %2762 = vmatmul.mubr.bf16.gmra.mxu0 %v413
        %v2763 = vpop.f32.mrf.mxu0
        %v2764 = vadd.f32 0.0, %v2763
        %v2765 = vpop.f32.mrf.mxu0
        %v2766 = vpop.f32.mrf.mxu0
        %v2767 = vadd.f32 0.0, %v2766
        %v2768 = vpop.f32.mrf.mxu0
        %2769 = vmatprep.mubr.bf16.mxu0 %v420
        %2770 = vmatmul.mubr.bf16.gmra.mxu0 %v419
        %v2771 = vpop.f32.mrf.mxu0
        %v2772 = vadd.f32 0.0, %v2771
        %v2773 = vpop.f32.mrf.mxu0
        %v2774 = vpop.f32.mrf.mxu0
        %v2775 = vadd.f32 0.0, %v2774
        %v2776 = vpop.f32.mrf.mxu0
        %2777 = vmatprep.mubr.bf16.mxu0 %v426
        %2778 = vmatmul.mubr.bf16.gmra.mxu0 %v425
        %v2779 = vpop.f32.mrf.mxu0
        %v2780 = vadd.f32 0.0, %v2779
        %v2781 = vpop.f32.mrf.mxu0
        %v2782 = vpop.f32.mrf.mxu0
        %v2783 = vadd.f32 0.0, %v2782
        %v2784 = vpop.f32.mrf.mxu0
        %2785 = vmatprep.mubr.bf16.mxu0 %v432
        %2786 = vmatmul.mubr.bf16.gmra.mxu0 %v431
        %v2787 = vpop.f32.mrf.mxu0
        %v2788 = vadd.f32 0.0, %v2787
        %v2789 = vpop.f32.mrf.mxu0
        %v2790 = vpop.f32.mrf.mxu0
        %v2791 = vadd.f32 0.0, %v2790
        %v2792 = vpop.f32.mrf.mxu0
        %2793 = vmatprep.mubr.bf16.mxu0 %v438
        %2794 = vmatmul.mubr.bf16.gmra.mxu0 %v437
        %v2795 = vpop.f32.mrf.mxu0
        %v2796 = vadd.f32 0.0, %v2795
        %v2797 = vpop.f32.mrf.mxu0
        %v2798 = vpop.f32.mrf.mxu0
        %v2799 = vadd.f32 0.0, %v2798
        %v2800 = vpop.f32.mrf.mxu0
        %2801 = vmatprep.mubr.bf16.mxu0 %v444
        %2802 = vmatmul.mubr.bf16.gmra.mxu0 %v443
        %v2803 = vpop.f32.mrf.mxu0
        %v2804 = vadd.f32 0.0, %v2803
        %v2805 = vpop.f32.mrf.mxu0
        %v2806 = vpop.f32.mrf.mxu0
        %v2807 = vadd.f32 0.0, %v2806
        %v2808 = vpop.f32.mrf.mxu0
        %2809 = vmatprep.mubr.bf16.mxu0 %v450
        %2810 = vmatmul.mubr.bf16.gmra.mxu0 %v449
        %v2811 = vpop.f32.mrf.mxu0
        %v2812 = vadd.f32 0.0, %v2811
        %v2813 = vpop.f32.mrf.mxu0
        %v2814 = vpop.f32.mrf.mxu0
        %v2815 = vadd.f32 0.0, %v2814
        %v2816 = vpop.f32.mrf.mxu0
        %2817 = vmatprep.mubr.bf16.mxu0 %v456
        %2818 = vmatmul.mubr.bf16.gmra.mxu0 %v455
        %v2819 = vpop.f32.mrf.mxu0
        %v2820 = vadd.f32 0.0, %v2819
        %v2821 = vpop.f32.mrf.mxu0
        %v2822 = vpop.f32.mrf.mxu0
        %v2823 = vadd.f32 0.0, %v2822
        %v2824 = vpop.f32.mrf.mxu0
        %2825 = vmatprep.mubr.bf16.mxu0 %v462
        %2826 = vmatmul.mubr.bf16.gmra.mxu0 %v461
        %v2827 = vpop.f32.mrf.mxu0
        %v2828 = vadd.f32 0.0, %v2827
        %v2829 = vpop.f32.mrf.mxu0
        %v2830 = vpop.f32.mrf.mxu0
        %v2831 = vadd.f32 0.0, %v2830
        %v2832 = vpop.f32.mrf.mxu0
        %2833 = vmatprep.mubr.bf16.mxu0 %v468
        %2834 = vmatmul.mubr.bf16.gmra.mxu0 %v467
        %v2835 = vpop.f32.mrf.mxu0
        %v2836 = vadd.f32 0.0, %v2835
        %v2837 = vpop.f32.mrf.mxu0
        %v2838 = vpop.f32.mrf.mxu0
        %v2839 = vadd.f32 0.0, %v2838
        %v2840 = vpop.f32.mrf.mxu0
        %2841 = vmatprep.mubr.bf16.mxu0 %v474
        %2842 = vmatmul.mubr.bf16.gmra.mxu0 %v473
        %v2843 = vpop.f32.mrf.mxu0
        %v2844 = vadd.f32 0.0, %v2843
        %v2845 = vpop.f32.mrf.mxu0
        %v2846 = vpop.f32.mrf.mxu0
        %v2847 = vadd.f32 0.0, %v2846
        %v2848 = vpop.f32.mrf.mxu0
        %2849 = vmatprep.mubr.bf16.mxu0 %v480
        %2850 = vmatmul.mubr.bf16.gmra.mxu0 %v479
        %v2851 = vpop.f32.mrf.mxu0
        %v2852 = vadd.f32 0.0, %v2851
        %v2853 = vpop.f32.mrf.mxu0
        %v2854 = vpop.f32.mrf.mxu0
        %v2855 = vadd.f32 0.0, %v2854
        %v2856 = vpop.f32.mrf.mxu0
        %2857 = vmatprep.mubr.bf16.mxu0 %v486
        %2858 = vmatmul.mubr.bf16.gmra.mxu0 %v485
        %v2859 = vpop.f32.mrf.mxu0
        %v2860 = vadd.f32 0.0, %v2859
        %v2861 = vpop.f32.mrf.mxu0
        %v2862 = vpop.f32.mrf.mxu0
        %v2863 = vadd.f32 0.0, %v2862
        %v2864 = vpop.f32.mrf.mxu0
        %2865 = vdwg.mxu0
        %2866 = vmatprep.subr.bf16.mxu0 0
        %2867 = vmatpush1.bf16.msra.mxu0 %v2632
        %2868 = vmatprep.subr.bf16.mxu0 0
        %2869 = vmatpush1.bf16.msra.mxu0 %v2631
        %2870 = vmatprep.subr.bf16.mxu0 0
        %2871 = vmatpush1.bf16.msra.mxu0 %v2630
        %2872 = vmatprep.subr.bf16.mxu0 0
        %2873 = vmatpush1.bf16.msra.mxu0 %v2629
        %2874 = vmatprep.subr.bf16.mxu0 0
        %2875 = vmatpush1.bf16.msra.mxu0 %v2628
        %2876 = vmatprep.subr.bf16.mxu0 0
        %2877 = vmatpush1.bf16.msra.mxu0 %v2627
        %2878 = vmatprep.subr.bf16.mxu0 0
        %2879 = vmatpush1.bf16.msra.mxu0 %v2626
        %2880 = vmatprep.subr.bf16.mxu0 0
        %2881 = vmatpush1.bf16.msra.mxu0 %v2625
        %2882 = vmatprep.subr.bf16.mxu0 0
        %2883 = vmatpush2.bf16.msra.mxu0 %v2640
        %2884 = vmatprep.subr.bf16.mxu0 0
        %2885 = vmatpush2.bf16.msra.mxu0 %v2639
        %2886 = vmatprep.subr.bf16.mxu0 0
        %2887 = vmatpush2.bf16.msra.mxu0 %v2638
        %2888 = vmatprep.subr.bf16.mxu0 0
        %2889 = vmatpush2.bf16.msra.mxu0 %v2637
        %2890 = vmatprep.subr.bf16.mxu0 0
        %2891 = vmatpush2.bf16.msra.mxu0 %v2636
        %2892 = vmatprep.subr.bf16.mxu0 0
        %2893 = vmatpush2.bf16.msra.mxu0 %v2635
        %2894 = vmatprep.subr.bf16.mxu0 0
        %2895 = vmatpush2.bf16.msra.mxu0 %v2634
        %2896 = vmatprep.subr.bf16.mxu0 0
        %2897 = vmatpush2.bf16.msra.mxu0 %v2633
        %2898 = vmatprep.mubr.bf16.mxu0 %v398
        %2899 = vmatmul.mubr.bf16.gmra.mxu0 %v397
        %v2900 = vpop.f32.mrf.mxu0
        %v2901 = vadd.f32 %v2740, %v2900
        %v2902 = vpop.f32.mrf.mxu0
        %v2903 = vpop.f32.mrf.mxu0
        %v2904 = vadd.f32 %v2743, %v2903
        %v2905 = vpop.f32.mrf.mxu0
        %2906 = vmatprep.mubr.bf16.mxu0 %v404
        %2907 = vmatmul.mubr.bf16.gmra.mxu0 %v403
        %v2908 = vpop.f32.mrf.mxu0
        %v2909 = vadd.f32 %v2748, %v2908
        %v2910 = vpop.f32.mrf.mxu0
        %v2911 = vpop.f32.mrf.mxu0
        %v2912 = vadd.f32 %v2751, %v2911
        %v2913 = vpop.f32.mrf.mxu0
        %2914 = vmatprep.mubr.bf16.mxu0 %v410
        %2915 = vmatmul.mubr.bf16.gmra.mxu0 %v409
        %v2916 = vpop.f32.mrf.mxu0
        %v2917 = vadd.f32 %v2756, %v2916
        %v2918 = vpop.f32.mrf.mxu0
        %v2919 = vpop.f32.mrf.mxu0
        %v2920 = vadd.f32 %v2759, %v2919
        %v2921 = vpop.f32.mrf.mxu0
        %2922 = vmatprep.mubr.bf16.mxu0 %v416
        %2923 = vmatmul.mubr.bf16.gmra.mxu0 %v415
        %v2924 = vpop.f32.mrf.mxu0
        %v2925 = vadd.f32 %v2764, %v2924
        %v2926 = vpop.f32.mrf.mxu0
        %v2927 = vpop.f32.mrf.mxu0
        %v2928 = vadd.f32 %v2767, %v2927
        %v2929 = vpop.f32.mrf.mxu0
        %2930 = vmatprep.mubr.bf16.mxu0 %v422
        %2931 = vmatmul.mubr.bf16.gmra.mxu0 %v421
        %v2932 = vpop.f32.mrf.mxu0
        %v2933 = vadd.f32 %v2772, %v2932
        %v2934 = vpop.f32.mrf.mxu0
        %v2935 = vpop.f32.mrf.mxu0
        %v2936 = vadd.f32 %v2775, %v2935
        %v2937 = vpop.f32.mrf.mxu0
        %2938 = vmatprep.mubr.bf16.mxu0 %v428
        %2939 = vmatmul.mubr.bf16.gmra.mxu0 %v427
        %v2940 = vpop.f32.mrf.mxu0
        %v2941 = vadd.f32 %v2780, %v2940
        %v2942 = vpop.f32.mrf.mxu0
        %v2943 = vpop.f32.mrf.mxu0
        %v2944 = vadd.f32 %v2783, %v2943
        %v2945 = vpop.f32.mrf.mxu0
        %2946 = vmatprep.mubr.bf16.mxu0 %v434
        %2947 = vmatmul.mubr.bf16.gmra.mxu0 %v433
        %v2948 = vpop.f32.mrf.mxu0
        %v2949 = vadd.f32 %v2788, %v2948
        %v2950 = vpop.f32.mrf.mxu0
        %v2951 = vpop.f32.mrf.mxu0
        %v2952 = vadd.f32 %v2791, %v2951
        %v2953 = vpop.f32.mrf.mxu0
        %2954 = vmatprep.mubr.bf16.mxu0 %v440
        %2955 = vmatmul.mubr.bf16.gmra.mxu0 %v439
        %v2956 = vpop.f32.mrf.mxu0
        %v2957 = vadd.f32 %v2796, %v2956
        %v2958 = vpop.f32.mrf.mxu0
        %v2959 = vpop.f32.mrf.mxu0
        %v2960 = vadd.f32 %v2799, %v2959
        %v2961 = vpop.f32.mrf.mxu0
        %2962 = vmatprep.mubr.bf16.mxu0 %v446
        %2963 = vmatmul.mubr.bf16.gmra.mxu0 %v445
        %v2964 = vpop.f32.mrf.mxu0
        %v2965 = vadd.f32 %v2804, %v2964
        %v2966 = vpop.f32.mrf.mxu0
        %v2967 = vpop.f32.mrf.mxu0
        %v2968 = vadd.f32 %v2807, %v2967
        %v2969 = vpop.f32.mrf.mxu0
        %2970 = vmatprep.mubr.bf16.mxu0 %v452
        %2971 = vmatmul.mubr.bf16.gmra.mxu0 %v451
        %v2972 = vpop.f32.mrf.mxu0
        %v2973 = vadd.f32 %v2812, %v2972
        %v2974 = vpop.f32.mrf.mxu0
        %v2975 = vpop.f32.mrf.mxu0
        %v2976 = vadd.f32 %v2815, %v2975
        %v2977 = vpop.f32.mrf.mxu0
        %2978 = vmatprep.mubr.bf16.mxu0 %v458
        %2979 = vmatmul.mubr.bf16.gmra.mxu0 %v457
        %v2980 = vpop.f32.mrf.mxu0
        %v2981 = vadd.f32 %v2820, %v2980
        %v2982 = vpop.f32.mrf.mxu0
        %v2983 = vpop.f32.mrf.mxu0
        %v2984 = vadd.f32 %v2823, %v2983
        %v2985 = vpop.f32.mrf.mxu0
        %2986 = vmatprep.mubr.bf16.mxu0 %v464
        %2987 = vmatmul.mubr.bf16.gmra.mxu0 %v463
        %v2988 = vpop.f32.mrf.mxu0
        %v2989 = vadd.f32 %v2828, %v2988
        %v2990 = vpop.f32.mrf.mxu0
        %v2991 = vpop.f32.mrf.mxu0
        %v2992 = vadd.f32 %v2831, %v2991
        %v2993 = vpop.f32.mrf.mxu0
        %2994 = vmatprep.mubr.bf16.mxu0 %v470
        %2995 = vmatmul.mubr.bf16.gmra.mxu0 %v469
        %v2996 = vpop.f32.mrf.mxu0
        %v2997 = vadd.f32 %v2836, %v2996
        %v2998 = vpop.f32.mrf.mxu0
        %v2999 = vpop.f32.mrf.mxu0
        %v3000 = vadd.f32 %v2839, %v2999
        %v3001 = vpop.f32.mrf.mxu0
        %3002 = vmatprep.mubr.bf16.mxu0 %v476
        %3003 = vmatmul.mubr.bf16.gmra.mxu0 %v475
        %v3004 = vpop.f32.mrf.mxu0
        %v3005 = vadd.f32 %v2844, %v3004
        %v3006 = vpop.f32.mrf.mxu0
        %v3007 = vpop.f32.mrf.mxu0
        %v3008 = vadd.f32 %v2847, %v3007
        %v3009 = vpop.f32.mrf.mxu0
        %3010 = vmatprep.mubr.bf16.mxu0 %v482
        %3011 = vmatmul.mubr.bf16.gmra.mxu0 %v481
        %v3012 = vpop.f32.mrf.mxu0
        %v3013 = vadd.f32 %v2852, %v3012
        %v3014 = vpop.f32.mrf.mxu0
        %v3015 = vpop.f32.mrf.mxu0
        %v3016 = vadd.f32 %v2855, %v3015
        %v3017 = vpop.f32.mrf.mxu0
        %3018 = vmatprep.mubr.bf16.mxu0 %v488
        %3019 = vmatmul.mubr.bf16.gmra.mxu0 %v487
        %v3020 = vpop.f32.mrf.mxu0
        %v3021 = vadd.f32 %v2860, %v3020
        %v3022 = vpop.f32.mrf.mxu0
        %v3023 = vpop.f32.mrf.mxu0
        %v3024 = vadd.f32 %v2863, %v3023
        %v3025 = vpop.f32.mrf.mxu0
        %3026 = vdwg.mxu0
        %3027 = vmatprep.subr.bf16.mxu0 0
        %3028 = vmatpush1.bf16.msra.mxu0 %v2648
        %3029 = vmatprep.subr.bf16.mxu0 0
        %3030 = vmatpush1.bf16.msra.mxu0 %v2647
        %3031 = vmatprep.subr.bf16.mxu0 0
        %3032 = vmatpush1.bf16.msra.mxu0 %v2646
        %3033 = vmatprep.subr.bf16.mxu0 0
        %3034 = vmatpush1.bf16.msra.mxu0 %v2645
        %3035 = vmatprep.subr.bf16.mxu0 0
        %3036 = vmatpush1.bf16.msra.mxu0 %v2644
        %3037 = vmatprep.subr.bf16.mxu0 0
        %3038 = vmatpush1.bf16.msra.mxu0 %v2643
        %3039 = vmatprep.subr.bf16.mxu0 0
        %3040 = vmatpush1.bf16.msra.mxu0 %v2642
        %3041 = vmatprep.subr.bf16.mxu0 0
        %3042 = vmatpush1.bf16.msra.mxu0 %v2641
        %3043 = vmatprep.subr.bf16.mxu0 0
        %3044 = vmatpush2.bf16.msra.mxu0 %v2656
        %3045 = vmatprep.subr.bf16.mxu0 0
        %3046 = vmatpush2.bf16.msra.mxu0 %v2655
        %3047 = vmatprep.subr.bf16.mxu0 0
        %3048 = vmatpush2.bf16.msra.mxu0 %v2654
        %3049 = vmatprep.subr.bf16.mxu0 0
        %3050 = vmatpush2.bf16.msra.mxu0 %v2653
        %3051 = vmatprep.subr.bf16.mxu0 0
        %3052 = vmatpush2.bf16.msra.mxu0 %v2652
        %3053 = vmatprep.subr.bf16.mxu0 0
        %3054 = vmatpush2.bf16.msra.mxu0 %v2651
        %3055 = vmatprep.subr.bf16.mxu0 0
        %3056 = vmatpush2.bf16.msra.mxu0 %v2650
        %3057 = vmatprep.subr.bf16.mxu0 0
        %3058 = vmatpush2.bf16.msra.mxu0 %v2649
        %3059 = vmatprep.mubr.bf16.mxu0 %v400
        %3060 = vmatmul.mubr.bf16.gmra.mxu0 %v399
        %v3061 = vpop.f32.mrf.mxu0
        %v3062 = vadd.f32 %v2901, %v3061
        %v3063 = vpop.f32.mrf.mxu0
        %v3064 = vpop.f32.mrf.mxu0
        %v3065 = vadd.f32 %v2904, %v3064
        %v3066 = vpop.f32.mrf.mxu0
        %3067 = vmatprep.mubr.bf16.mxu0 %v406
        %3068 = vmatmul.mubr.bf16.gmra.mxu0 %v405
        %v3069 = vpop.f32.mrf.mxu0
        %v3070 = vadd.f32 %v2909, %v3069
        %v3071 = vpop.f32.mrf.mxu0
        %v3072 = vpop.f32.mrf.mxu0
        %v3073 = vadd.f32 %v2912, %v3072
        %v3074 = vpop.f32.mrf.mxu0
        %3075 = vmatprep.mubr.bf16.mxu0 %v412
        %3076 = vmatmul.mubr.bf16.gmra.mxu0 %v411
        %v3077 = vpop.f32.mrf.mxu0
        %v3078 = vadd.f32 %v2917, %v3077
        %v3079 = vpop.f32.mrf.mxu0
        %v3080 = vpop.f32.mrf.mxu0
        %v3081 = vadd.f32 %v2920, %v3080
        %v3082 = vpop.f32.mrf.mxu0
        %3083 = vmatprep.mubr.bf16.mxu0 %v418
        %3084 = vmatmul.mubr.bf16.gmra.mxu0 %v417
        %v3085 = vpop.f32.mrf.mxu0
        %v3086 = vadd.f32 %v2925, %v3085
        %v3087 = vpop.f32.mrf.mxu0
        %v3088 = vpop.f32.mrf.mxu0
        %v3089 = vadd.f32 %v2928, %v3088
        %v3090 = vpop.f32.mrf.mxu0
        %3091 = vmatprep.mubr.bf16.mxu0 %v424
        %3092 = vmatmul.mubr.bf16.gmra.mxu0 %v423
        %v3093 = vpop.f32.mrf.mxu0
        %v3094 = vadd.f32 %v2933, %v3093
        %v3095 = vpop.f32.mrf.mxu0
        %v3096 = vpop.f32.mrf.mxu0
        %v3097 = vadd.f32 %v2936, %v3096
        %v3098 = vpop.f32.mrf.mxu0
        %3099 = vmatprep.mubr.bf16.mxu0 %v430
        %3100 = vmatmul.mubr.bf16.gmra.mxu0 %v429
        %v3101 = vpop.f32.mrf.mxu0
        %v3102 = vadd.f32 %v2941, %v3101
        %v3103 = vpop.f32.mrf.mxu0
        %v3104 = vpop.f32.mrf.mxu0
        %v3105 = vadd.f32 %v2944, %v3104
        %v3106 = vpop.f32.mrf.mxu0
        %3107 = vmatprep.mubr.bf16.mxu0 %v436
        %3108 = vmatmul.mubr.bf16.gmra.mxu0 %v435
        %v3109 = vpop.f32.mrf.mxu0
        %v3110 = vadd.f32 %v2949, %v3109
        %v3111 = vpop.f32.mrf.mxu0
        %v3112 = vpop.f32.mrf.mxu0
        %v3113 = vadd.f32 %v2952, %v3112
        %v3114 = vpop.f32.mrf.mxu0
        %3115 = vmatprep.mubr.bf16.mxu0 %v442
        %3116 = vmatmul.mubr.bf16.gmra.mxu0 %v441
        %v3117 = vpop.f32.mrf.mxu0
        %v3118 = vadd.f32 %v2957, %v3117
        %v3119 = vpop.f32.mrf.mxu0
        %v3120 = vpop.f32.mrf.mxu0
        %v3121 = vadd.f32 %v2960, %v3120
        %v3122 = vpop.f32.mrf.mxu0
        %3123 = vmatprep.mubr.bf16.mxu0 %v448
        %3124 = vmatmul.mubr.bf16.gmra.mxu0 %v447
        %v3125 = vpop.f32.mrf.mxu0
        %v3126 = vadd.f32 %v2965, %v3125
        %v3127 = vpop.f32.mrf.mxu0
        %v3128 = vpop.f32.mrf.mxu0
        %v3129 = vadd.f32 %v2968, %v3128
        %v3130 = vpop.f32.mrf.mxu0
        %3131 = vmatprep.mubr.bf16.mxu0 %v454
        %3132 = vmatmul.mubr.bf16.gmra.mxu0 %v453
        %v3133 = vpop.f32.mrf.mxu0
        %v3134 = vadd.f32 %v2973, %v3133
        %v3135 = vpop.f32.mrf.mxu0
        %v3136 = vpop.f32.mrf.mxu0
        %v3137 = vadd.f32 %v2976, %v3136
        %v3138 = vpop.f32.mrf.mxu0
        %3139 = vmatprep.mubr.bf16.mxu0 %v460
        %3140 = vmatmul.mubr.bf16.gmra.mxu0 %v459
        %v3141 = vpop.f32.mrf.mxu0
        %v3142 = vadd.f32 %v2981, %v3141
        %v3143 = vpop.f32.mrf.mxu0
        %v3144 = vpop.f32.mrf.mxu0
        %v3145 = vadd.f32 %v2984, %v3144
        %v3146 = vpop.f32.mrf.mxu0
        %3147 = vmatprep.mubr.bf16.mxu0 %v466
        %3148 = vmatmul.mubr.bf16.gmra.mxu0 %v465
        %v3149 = vpop.f32.mrf.mxu0
        %v3150 = vadd.f32 %v2989, %v3149
        %v3151 = vpop.f32.mrf.mxu0
        %v3152 = vpop.f32.mrf.mxu0
        %v3153 = vadd.f32 %v2992, %v3152
        %v3154 = vpop.f32.mrf.mxu0
        %3155 = vmatprep.mubr.bf16.mxu0 %v472
        %3156 = vmatmul.mubr.bf16.gmra.mxu0 %v471
        %v3157 = vpop.f32.mrf.mxu0
        %v3158 = vadd.f32 %v2997, %v3157
        %v3159 = vpop.f32.mrf.mxu0
        %v3160 = vpop.f32.mrf.mxu0
        %v3161 = vadd.f32 %v3000, %v3160
        %v3162 = vpop.f32.mrf.mxu0
        %3163 = vmatprep.mubr.bf16.mxu0 %v478
        %3164 = vmatmul.mubr.bf16.gmra.mxu0 %v477
        %v3165 = vpop.f32.mrf.mxu0
        %v3166 = vadd.f32 %v3005, %v3165
        %v3167 = vpop.f32.mrf.mxu0
        %v3168 = vpop.f32.mrf.mxu0
        %v3169 = vadd.f32 %v3008, %v3168
        %v3170 = vpop.f32.mrf.mxu0
        %3171 = vmatprep.mubr.bf16.mxu0 %v484
        %3172 = vmatmul.mubr.bf16.gmra.mxu0 %v483
        %v3173 = vpop.f32.mrf.mxu0
        %v3174 = vadd.f32 %v3013, %v3173
        %v3175 = vpop.f32.mrf.mxu0
        %v3176 = vpop.f32.mrf.mxu0
        %v3177 = vadd.f32 %v3016, %v3176
        %v3178 = vpop.f32.mrf.mxu0
        %3179 = vmatprep.mubr.bf16.mxu0 %v490
        %3180 = vmatmul.mubr.bf16.gmra.mxu0 %v489
        %v3181 = vpop.f32.mrf.mxu0
        %v3182 = vadd.f32 %v3021, %v3181
        %v3183 = vpop.f32.mrf.mxu0
        %v3184 = vpop.f32.mrf.mxu0
        %v3185 = vadd.f32 %v3024, %v3184
        %v3186 = vpop.f32.mrf.mxu0
        %3187 = vdwg.mxu0
        %v3188 = vadd.f32 %v2195, %v3062
        %v3189 = vadd.f32 %v2198, %v3065
        %v3190 = vadd.f32 %v2203, %v3070
        %v3191 = vadd.f32 %v2206, %v3073
        %v3192 = vadd.f32 %v2211, %v3078
        %v3193 = vadd.f32 %v2214, %v3081
        %v3194 = vadd.f32 %v2219, %v3086
        %v3195 = vadd.f32 %v2222, %v3089
        %v3196 = vadd.f32 %v2227, %v3094
        %v3197 = vadd.f32 %v2230, %v3097
        %v3198 = vadd.f32 %v2235, %v3102
        %v3199 = vadd.f32 %v2238, %v3105
        %v3200 = vadd.f32 %v2243, %v3110
        %v3201 = vadd.f32 %v2246, %v3113
        %v3202 = vadd.f32 %v2251, %v3118
        %v3203 = vadd.f32 %v2254, %v3121
        %v3204 = vadd.f32 %v2259, %v3126
        %v3205 = vadd.f32 %v2262, %v3129
        %v3206 = vadd.f32 %v2267, %v3134
        %v3207 = vadd.f32 %v2270, %v3137
        %v3208 = vadd.f32 %v2275, %v3142
        %v3209 = vadd.f32 %v2278, %v3145
        %v3210 = vadd.f32 %v2283, %v3150
        %v3211 = vadd.f32 %v2286, %v3153
        %v3212 = vadd.f32 %v2291, %v3158
        %v3213 = vadd.f32 %v2294, %v3161
        %v3214 = vadd.f32 %v2299, %v3166
        %v3215 = vadd.f32 %v2302, %v3169
        %v3216 = vadd.f32 %v2307, %v3174
        %v3217 = vadd.f32 %v2310, %v3177
        %v3218 = vadd.f32 %v2315, %v3182
        %v3219 = vadd.f32 %v2318, %v3185
        %v3220 = vld [vmem:[%s3] sm:$0x1]
        %v3222 = vlaneseq
        %v3223 = vshrl.u32 %v3222, 7
        %v3224 = vsub.s32 0, %v3223
        %v3225 = vrot.slane %v3220, %v3224
        %v3227 = vadd.f32 %v3188, %v3225
        %v3228 = vadd.f32 %v3189, %v3225
        %v3229 = vadd.f32 %v3190, %v3225
        %v3230 = vadd.f32 %v3191, %v3225
        %v3231 = vadd.f32 %v3192, %v3225
        %v3232 = vadd.f32 %v3193, %v3225
        %v3233 = vadd.f32 %v3194, %v3225
        %v3234 = vadd.f32 %v3195, %v3225
        %v3235 = vadd.f32 %v3196, %v3225
        %v3236 = vadd.f32 %v3197, %v3225
        %v3237 = vadd.f32 %v3198, %v3225
        %v3238 = vadd.f32 %v3199, %v3225
        %v3239 = vadd.f32 %v3200, %v3225
        %v3240 = vadd.f32 %v3201, %v3225
        %v3241 = vadd.f32 %v3202, %v3225
        %v3242 = vadd.f32 %v3203, %v3225
        %v3243 = vadd.f32 %v3204, %v3225
        %v3244 = vadd.f32 %v3205, %v3225
        %v3245 = vadd.f32 %v3206, %v3225
        %v3246 = vadd.f32 %v3207, %v3225
        %v3247 = vadd.f32 %v3208, %v3225
        %v3248 = vadd.f32 %v3209, %v3225
        %v3249 = vadd.f32 %v3210, %v3225
        %v3250 = vadd.f32 %v3211, %v3225
        %v3251 = vadd.f32 %v3212, %v3225
        %v3252 = vadd.f32 %v3213, %v3225
        %v3253 = vadd.f32 %v3214, %v3225
        %v3254 = vadd.f32 %v3215, %v3225
        %v3255 = vadd.f32 %v3216, %v3225
        %v3256 = vadd.f32 %v3217, %v3225
        %v3257 = vadd.f32 %v3218, %v3225
        %v3258 = vadd.f32 %v3219, %v3225
        %3259 = vst [vmem:[%s193] sm:$0xff] %v3227
        %3260 = vst [vmem:[%s193 + $0x8] sm:$0xff] %v3228
        %3261 = vst [vmem:[%s193 + $0x10] sm:$0xff] %v3229
        %3262 = vst [vmem:[%s193 + $0x18] sm:$0xff] %v3230
        %3263 = vst [vmem:[%s193 + $0x20] sm:$0xff] %v3231
        %3264 = vst [vmem:[%s193 + $0x28] sm:$0xff] %v3232
        %3265 = vst [vmem:[%s193 + $0x30] sm:$0xff] %v3233
        %3266 = vst [vmem:[%s193 + $0x38] sm:$0xff] %v3234
        %3267 = vst [vmem:[%s193 + $0x40] sm:$0xff] %v3235
        %3268 = vst [vmem:[%s193 + $0x48] sm:$0xff] %v3236
        %3269 = vst [vmem:[%s193 + $0x50] sm:$0xff] %v3237
        %3270 = vst [vmem:[%s193 + $0x58] sm:$0xff] %v3238
        %3271 = vst [vmem:[%s193 + $0x60] sm:$0xff] %v3239
        %3272 = vst [vmem:[%s193 + $0x68] sm:$0xff] %v3240
        %3273 = vst [vmem:[%s193 + $0x70] sm:$0xff] %v3241
        %3274 = vst [vmem:[%s193 + $0x78] sm:$0xff] %v3242
        %3275 = vst [vmem:[%s193 + $0x80] sm:$0xff] %v3243
        %3276 = vst [vmem:[%s193 + $0x88] sm:$0xff] %v3244
        %3277 = vst [vmem:[%s193 + $0x90] sm:$0xff] %v3245
        %3278 = vst [vmem:[%s193 + $0x98] sm:$0xff] %v3246
        %3279 = vst [vmem:[%s193 + $0xa0] sm:$0xff] %v3247
        %3280 = vst [vmem:[%s193 + $0xa8] sm:$0xff] %v3248
        %3281 = vst [vmem:[%s193 + $0xb0] sm:$0xff] %v3249
        %3282 = vst [vmem:[%s193 + $0xb8] sm:$0xff] %v3250
        %3283 = vst [vmem:[%s193 + $0xc0] sm:$0xff] %v3251
        %3284 = vst [vmem:[%s193 + $0xc8] sm:$0xff] %v3252
        %3285 = vst [vmem:[%s193 + $0xd0] sm:$0xff] %v3253
        %3286 = vst [vmem:[%s193 + $0xd8] sm:$0xff] %v3254
        %3287 = vst [vmem:[%s193 + $0xe0] sm:$0xff] %v3255
        %3288 = vst [vmem:[%s193 + $0xe8] sm:$0xff] %v3256
        %3289 = vst [vmem:[%s193 + $0xf0] sm:$0xff] %v3257
        %3290 = vst [vmem:[%s193 + $0xf8] sm:$0xff] %v3258
        %s3291 = sand.u32 %s115, 1
        %s3292 = scalar_lea.sflag [#allocation3], %s3291
        %s3293 = sand.u32 %s115, 1
        %s3294 = smul.addr %s3293, 256
        %s3295 = scalar_lea.vmem [#allocation2], %s3294
        // Predicated region
        $region37: #{patch_embedding.1} parent=35 // pred_check
          %p3296 = pneg %p125
        $region38: #{patch_embedding.1} parent=35 // pred_check_branch
          %3298 = sbr.rel (%p3296) target = $region40
        $region39: #{patch_embedding.1} parent=35 // pred_region
          %s3299 = smul.u32 32, %s18
          %s3301 = ssub.s32 4096, 4096
          %3302 = vsyncadd %s3292, %s3301
          %s3303 = smul.addr %s3299, 128
          %s3304 = scalar_lea.hbm %s4, %s3303
          %s3305 = sshll.u32 %s3295, 4
          %s3306 = int_to_ptr.vmem [resolvable:$true] %s3305
          %3311 = dma.vmem_to_hbm [thread:$0]  %s3306, 4096, %s3304, %s3292, 128, 128, 8
        $region40: #{patch_embedding.1} parent=35 // pred_fallthru
          _
      $region36: #{patch_embedding.1} parent=5 // pred_fallthru
        _
      %p3312 = scmp.le.s32.totalorder 2, %s13
      // Predicated region
      $region41: #{patch_embedding.1} parent=5 // pred_check
        %p3313 = pneg %p3312
      $region42: #{patch_embedding.1} parent=5 // pred_check_branch
        %3315 = sbr.rel (%p3313) target = $region44
      $region43: #{patch_embedding.1} parent=5 // pred_region
        %s3316 = ssub.s32 %s13, 2
        // Predicated region
        $region45: #{patch_embedding.1} parent=43 // pred_check
          %p3317 = pneg %p131
        $region46: #{patch_embedding.1} parent=43 // pred_check_branch
          %3319 = sbr.rel (%p3317) target = $region48
        $region47: #{patch_embedding.1} parent=43 // pred_region
          %s3320 = sand.u32 %s116, 1
          %s3321 = scalar_lea.sflag [#allocation3], %s3320
          %s3322 = sand.u32 %s116, 1
          %s3323 = smul.addr %s3322, 256
          %s3324 = scalar_lea.vmem [#allocation2], %s3323
          %3325 = dma.done %s3321, 4096
        $region48: #{patch_embedding.1} parent=43 // pred_fallthru
          _
      $region44: #{patch_embedding.1} parent=5 // pred_fallthru
        _
    $region6: #{patch_embedding.1} parent=1 // loop_footer
      %s17 = sadd.s32 1, %s13
    $region7: #{patch_embedding.1} parent=1 // loop_footer_branch
      %12 = sbr.rel target = $region3
    $region8: #{patch_embedding.1} parent=1 // loop_exit
      _
    %3326 = vsyncpa [#allocation3], 1
    %s3327 = scalar_lea.sflag [#allocation3], 1
    %3328 = vsyncpa %s3327, 1

</llo_original>
